<compile_context>
chip_gen: v7x
topology: tpu7x:2x2x1
jax: 0.10.0
libtpu: 0.0.40
codegen_flags: <defaults>
</compile_context>

<pallas_src>
import jax
import jax.numpy as jnp
from jax import lax
from jax.experimental import pallas as pl
from jax.experimental.pallas import tpu as pltpu

C_IN, C_OUT, K = 3, 16, 3
H_IN = W_IN = 32
H_CONV = W_CONV = H_IN - K + 1        # 30 (VALID conv)
H_POOL = W_POOL = H_CONV // 2         # 15
N_WIN = H_POOL * W_POOL               # 225 pooled spatial positions
N_WIN_PAD = 256                       # lane-aligned pooled positions
PATCH = C_IN * K * K                  # 27
PATCH_PAD = 32                        # sublane-aligned contraction dim
N_OFF = 4                             # 2x2 pool offsets
HID = 128
N_CLS = 10
N_CLS_PAD = 128                       # lane-dense class dim (padded)
BB_MAX = 64                           # images per grid step (mult of 8)


# ---------------------------------------------------------------------------
# Fused kernel: conv+relu+pool -> fc1 -> fc2 -> softmax, BB images / grid step
# ---------------------------------------------------------------------------
def fused_forward_kernel(p_ref, wc_ref, bc_ref, w1_ref, b1_ref, w2_ref, b2_ref,
                         out_ref):
    # p_ref : [BB, 32, 1024]   bf16  im2col patches, col = offset_d*256 + s
    # wc_ref: [16, 32]         bf16  conv weight (patch dim zero-padded)
    # bc_ref: [16, 1]          f32   conv bias
    # w1_ref: [16, 256, 128]   bf16  fc1 weight as [c_out, s(padded), hidden]
    # b1_ref: [1, 128]         f32
    # w2_ref: [128, 128]       bf16  fc2 weight, classes zero-padded 10->128
    # b2_ref: [1, 128]         f32   fc2 bias, padded entries = -1e30
    # out_ref:[BB, 128]        f32   softmax probabilities (cols 10..127 == 0)
    bb = p_ref.shape[0]

    # --- conv: one batched MXU matmul per 2x2-pool offset, running max ------
    wc_b = jnp.broadcast_to(wc_ref[...], (bb, C_OUT, PATCH_PAD))     # bf16
    pooled = None
    for d in range(N_OFF):
        p_d = p_ref[:, :, d * N_WIN_PAD:(d + 1) * N_WIN_PAD]         # [BB,32,256]
        conv_d = lax.dot_general(
            wc_b, p_d,
            dimension_numbers=(((2,), (1,)), ((0,), (0,))),
            preferred_element_type=jnp.float32)                      # [BB,16,256]
        pooled = conv_d if d == 0 else jnp.maximum(pooled, conv_d)

    # bias is constant across the pool window -> add after max; then ReLU.
    pooled = jnp.maximum(pooled + bc_ref[...][None, :, :], 0.0)      # [BB,16,256]
    pooled_bf = pooled.astype(jnp.bfloat16)                          # hoisted cast

    # --- fc1: 16 accumulating matmuls, each M=BB, K=256, N=128 --------------
    # (padded s-rows of w1 are zero, so padded pooled lanes contribute 0)
    acc = jnp.zeros((bb, HID), jnp.float32)
    for c in range(C_OUT):
        acc = acc + jnp.dot(pooled_bf[:, c, :], w1_ref[c],
                            preferred_element_type=jnp.float32)
    h = acc + b1_ref[...]                                            # [BB,128]

    # --- fc2 (classes padded to 128 lanes) + softmax over 128 lanes ---------
    logits = jnp.dot(h.astype(jnp.bfloat16), w2_ref[...],
                     preferred_element_type=jnp.float32) + b2_ref[...]
    m = jnp.max(logits, axis=1, keepdims=True)
    e = jnp.exp(logits - m)                # padded lanes: exp(-1e30 - m) == 0
    denom = jnp.sum(e, axis=1, keepdims=True)
    out_ref[...] = e * pl.reciprocal(denom, approx=True)


# ---------------------------------------------------------------------------
# Glue: im2col grouped by pool offset, bf16-early, (8,128)-aligned padding
# ---------------------------------------------------------------------------
def build_patches(x):
    """x: [B,3,32,32] -> [B, 32, 4*256] bf16.

    Row r = c*9 + kh*3 + kw (zero-padded 27->32); column = d*256 + s with
    pool offset d = dh*2 + dw and pooled position s = ph*15 + pw (225->256
    zero-padded).  x is cast to bf16 FIRST so the im2col intermediates and
    the expanded patch array are half-width in HBM."""
    x = x.astype(jnp.bfloat16)
    B = x.shape[0]
    cols = [x[:, c, kh:kh + H_CONV, kw:kw + W_CONV]
            for c in range(C_IN) for kh in range(K) for kw in range(K)]
    p = jnp.stack(cols, axis=1)                            # [B, 27, 30, 30]
    p = p.reshape(B, PATCH, H_POOL, 2, W_POOL, 2)          # [B,27,ph,dh,pw,dw]
    p = p.transpose(0, 1, 3, 5, 2, 4)                      # [B,27,dh,dw,ph,pw]
    p = p.reshape(B, PATCH, N_OFF, N_WIN)
    p = jnp.pad(p, ((0, 0), (0, PATCH_PAD - PATCH), (0, 0),
                    (0, N_WIN_PAD - N_WIN)))
    return p.reshape(B, PATCH_PAD, N_OFF * N_WIN_PAD)


def prepare_params(conv_w, conv_b, fc1_w, fc1_b, fc2_w, fc2_b):
    """One-time weight re-layout / cast (outside jit)."""
    wc = conv_w.reshape(C_OUT, PATCH)                              # [16, 27]
    wc = jnp.pad(wc, ((0, 0), (0, PATCH_PAD - PATCH))).astype(jnp.bfloat16)
    bc = conv_b.reshape(C_OUT, 1).astype(jnp.float32)
    w1 = fc1_w.reshape(HID, C_OUT, N_WIN).transpose(1, 2, 0)       # [16,225,128]
    w1 = jnp.pad(w1, ((0, 0), (0, N_WIN_PAD - N_WIN), (0, 0)))
    w1 = w1.astype(jnp.bfloat16)                                   # [16,256,128]
    b1 = fc1_b.reshape(1, HID).astype(jnp.float32)
    w2 = jnp.pad(fc2_w.T.astype(jnp.float32),
                 ((0, 0), (0, N_CLS_PAD - N_CLS))).astype(jnp.bfloat16)  # [128,128]
    b2 = jnp.full((1, N_CLS_PAD), -1e30, jnp.float32)
    b2 = b2.at[0, :N_CLS].set(fc2_b.astype(jnp.float32))           # [1,128]
    return wc, bc, w1, b1, w2, b2


@jax.jit
def cifar_model15_forward(x, wc, bc, w1, b1, w2, b2):
    B = x.shape[0]
    bb = BB_MAX if B > BB_MAX else B          # BB_MAX is a multiple of 8;
    b_pad = ((B + bb - 1) // bb) * bb         # else bb == full (padded) batch
    patches = build_patches(x)
    if b_pad != B:
        patches = jnp.pad(patches, ((0, b_pad - B), (0, 0), (0, 0)))
    nb = b_pad // bb

    out = pl.pallas_call(
        fused_forward_kernel,
        out_shape=jax.ShapeDtypeStruct((b_pad, N_CLS_PAD), jnp.float32),
        grid_spec=pltpu.PrefetchScalarGridSpec(
            num_scalar_prefetch=0,
            grid=(nb,),
            in_specs=[
                pl.BlockSpec((bb, PATCH_PAD, N_OFF * N_WIN_PAD),
                             lambda i: (i, 0, 0)),
                # Resident weights (constant index_maps).
                pl.BlockSpec((C_OUT, PATCH_PAD), lambda i: (0, 0)),
                pl.BlockSpec((C_OUT, 1), lambda i: (0, 0)),
                pl.BlockSpec((C_OUT, N_WIN_PAD, HID), lambda i: (0, 0, 0)),
                pl.BlockSpec((1, HID), lambda i: (0, 0)),
                pl.BlockSpec((HID, N_CLS_PAD), lambda i: (0, 0)),
                pl.BlockSpec((1, N_CLS_PAD), lambda i: (0, 0)),
            ],
            out_specs=pl.BlockSpec((bb, N_CLS_PAD), lambda i: (i, 0)),
        ),
        compiler_params=pltpu.CompilerParams(
            dimension_semantics=("parallel",),
            vmem_limit_bytes=48 * 1024 * 1024),
    )(patches, wc, bc, w1, b1, w2, b2)
    return out[:B, :N_CLS]


# ---------------------------------------------------------------------------
# Pure-JAX f32 reference (mirrors the PyTorch module exactly)
# ---------------------------------------------------------------------------
def reference_forward(x, conv_w, conv_b, fc1_w, fc1_b, fc2_w, fc2_b):
    conv = lax.conv_general_dilated(
        x, conv_w, window_strides=(1, 1), padding="VALID",
        dimension_numbers=("NCHW", "OIHW", "NCHW"))
    conv = conv + conv_b[None, :, None, None]
    r = jnp.maximum(conv, 0.0)
    p = lax.reduce_window(r, -jnp.inf, lax.max,
                          (1, 1, 2, 2), (1, 1, 2, 2), "VALID")
    f = p.reshape(x.shape[0], -1)
    h = f @ fc1_w.T + fc1_b
    logits = h @ fc2_w.T + fc2_b
    return jax.nn.softmax(logits, axis=1)


def init_params(key):
    ks = jax.random.split(key, 6)
    conv_w = jax.random.normal(ks[0], (C_OUT, C_IN, K, K), jnp.float32) * 0.1
    conv_b = jax.random.normal(ks[1], (C_OUT,), jnp.float32) * 0.1
    fc1_w = jax.random.normal(ks[2], (HID, C_OUT * N_WIN), jnp.float32) * 0.02
    fc1_b = jax.random.normal(ks[3], (HID,), jnp.float32) * 0.02
    fc2_w = jax.random.normal(ks[4], (N_CLS, HID), jnp.float32) * 0.1
    fc2_b = jax.random.normal(ks[5], (N_CLS,), jnp.float32) * 0.1
    return conv_w, conv_b, fc1_w, fc1_b, fc2_w, fc2_b


if __name__ == "__main__":
    key = jax.random.PRNGKey(0)
    kx, kp = jax.random.split(key)
    # fc1 = Linear(16*15*15, 128) forces 32x32 spatial input; small batch.
    x = jax.random.normal(kx, (2, C_IN, H_IN, W_IN), jnp.float32)
    params = init_params(kp)

    prepped = prepare_params(*params)           # one-time weight re-layout
    out = jax.block_until_ready(cifar_model15_forward(x, *prepped))
    ref = reference_forward(x, *params)
    assert out.shape == (2, N_CLS)
    assert jnp.allclose(jnp.sum(out, axis=1), 1.0, atol=1e-2)
    # bf16 activations/weights (f32 accumulation) -> compare with a loose tol.
    assert jnp.allclose(out, ref, atol=2e-2, rtol=2e-2), \
        float(jnp.max(jnp.abs(out - ref)))

    # Also exercise the multi-grid-step / padded-batch path (BB=64, grid=2).
    xb = jax.random.normal(jax.random.PRNGKey(1), (80, C_IN, H_IN, W_IN),
                           jnp.float32)
    outb = jax.block_until_ready(cifar_model15_forward(xb, *prepped))
    refb = reference_forward(xb, *params)
    assert outb.shape == (80, N_CLS)
    assert jnp.allclose(outb, refb, atol=2e-2, rtol=2e-2), \
        float(jnp.max(jnp.abs(outb - refb)))

    print("KERNEL_OK")
</pallas_src>

<mosaic_0001>
module attributes {stable_mosaic.version = 11 : i64} {
  func.func @fused_forward_kernel(%arg0: i32, %arg1: memref<2x32x1024xbf16, #tpu.memory_space<vmem>>, %arg2: memref<16x32xbf16, #tpu.memory_space<vmem>>, %arg3: memref<16x1xf32, #tpu.memory_space<vmem>>, %arg4: memref<16x256x128xbf16, #tpu.memory_space<vmem>>, %arg5: memref<1x128xf32, #tpu.memory_space<vmem>>, %arg6: memref<128x128xbf16, #tpu.memory_space<vmem>>, %arg7: memref<1x128xf32, #tpu.memory_space<vmem>>, %arg8: memref<2x128xf32, #tpu.memory_space<vmem>>) attributes {dimension_semantics = [#tpu.dimension_semantics<parallel>], iteration_bounds = array<i64: 1>, scalar_prefetch = 0 : i64, scratch_operands = 0 : i64, tpu.core_type = #tpu.core_type<tc>, window_params = [{transform_indices = @transform_0, window_bounds = array<i64: 2, 32, 1024>}, {pipeline_mode = #tpu.pipeline_mode<synchronous>, transform_indices = @transform_1, window_bounds = array<i64: 16, 32>}, {pipeline_mode = #tpu.pipeline_mode<synchronous>, transform_indices = @transform_2, window_bounds = array<i64: 16, 1>}, {pipeline_mode = #tpu.pipeline_mode<synchronous>, transform_indices = @transform_3, window_bounds = array<i64: 16, 256, 128>}, {pipeline_mode = #tpu.pipeline_mode<synchronous>, transform_indices = @transform_4, window_bounds = array<i64: 1, 128>}, {pipeline_mode = #tpu.pipeline_mode<synchronous>, transform_indices = @transform_5, window_bounds = array<i64: 128, 128>}, {pipeline_mode = #tpu.pipeline_mode<synchronous>, transform_indices = @transform_6, window_bounds = array<i64: 1, 128>}, {transform_indices = @transform_7, window_bounds = array<i64: 2, 128>}]} {
    %c0 = arith.constant 0 : index
    %c0_0 = arith.constant 0 : index
    %0 = vector.load %arg2[%c0, %c0_0] : memref<16x32xbf16, #tpu.memory_space<vmem>>, vector<16x32xbf16>
    %1 = vector.shape_cast %0 : vector<16x32xbf16> to vector<1x16x32xbf16>
    %2 = vector.broadcast %1 : vector<1x16x32xbf16> to vector<2x16x32xbf16>
    %c0_1 = arith.constant 0 : index
    %c0_2 = arith.constant 0 : index
    %c0_3 = arith.constant 0 : index
    %3 = vector.load %arg1[%c0_1, %c0_2, %c0_3] : memref<2x32x1024xbf16, #tpu.memory_space<vmem>>, vector<2x32x256xbf16>
    %cst = arith.constant dense<0.000000e+00> : vector<2x16x256xf32>
    %4 = tpu.matmul %2, %3, %cst {dimension_numbers = #tpu.dot_dimension_numbers<[2], [1], [1], [2], [0, 0, 0, 1, 1, 2], [0], [0]>} : vector<2x16x32xbf16>, vector<2x32x256xbf16>, vector<2x16x256xf32> -> vector<2x16x256xf32>
    %c0_4 = arith.constant 0 : index
    %c0_5 = arith.constant 0 : index
    %c256 = arith.constant 256 : index
    %5 = vector.load %arg1[%c0_4, %c0_5, %c256] : memref<2x32x1024xbf16, #tpu.memory_space<vmem>>, vector<2x32x256xbf16>
    %cst_6 = arith.constant dense<0.000000e+00> : vector<2x16x256xf32>
    %6 = tpu.matmul %2, %5, %cst_6 {dimension_numbers = #tpu.dot_dimension_numbers<[2], [1], [1], [2], [0, 0, 0, 1, 1, 2], [0], [0]>} : vector<2x16x32xbf16>, vector<2x32x256xbf16>, vector<2x16x256xf32> -> vector<2x16x256xf32>
    %7 = arith.maximumf %4, %6 : vector<2x16x256xf32>
    %c0_7 = arith.constant 0 : index
    %c0_8 = arith.constant 0 : index
    %c512 = arith.constant 512 : index
    %8 = vector.load %arg1[%c0_7, %c0_8, %c512] : memref<2x32x1024xbf16, #tpu.memory_space<vmem>>, vector<2x32x256xbf16>
    %cst_9 = arith.constant dense<0.000000e+00> : vector<2x16x256xf32>
    %9 = tpu.matmul %2, %8, %cst_9 {dimension_numbers = #tpu.dot_dimension_numbers<[2], [1], [1], [2], [0, 0, 0, 1, 1, 2], [0], [0]>} : vector<2x16x32xbf16>, vector<2x32x256xbf16>, vector<2x16x256xf32> -> vector<2x16x256xf32>
    %10 = arith.maximumf %7, %9 : vector<2x16x256xf32>
    %c0_10 = arith.constant 0 : index
    %c0_11 = arith.constant 0 : index
    %c768 = arith.constant 768 : index
    %11 = vector.load %arg1[%c0_10, %c0_11, %c768] : memref<2x32x1024xbf16, #tpu.memory_space<vmem>>, vector<2x32x256xbf16>
    %cst_12 = arith.constant dense<0.000000e+00> : vector<2x16x256xf32>
    %12 = tpu.matmul %2, %11, %cst_12 {dimension_numbers = #tpu.dot_dimension_numbers<[2], [1], [1], [2], [0, 0, 0, 1, 1, 2], [0], [0]>} : vector<2x16x32xbf16>, vector<2x32x256xbf16>, vector<2x16x256xf32> -> vector<2x16x256xf32>
    %13 = arith.maximumf %10, %12 : vector<2x16x256xf32>
    %c0_13 = arith.constant 0 : index
    %c0_14 = arith.constant 0 : index
    %14 = vector.load %arg3[%c0_13, %c0_14] : memref<16x1xf32, #tpu.memory_space<vmem>>, vector<16x1xf32>
    %15 = vector.shape_cast %14 : vector<16x1xf32> to vector<1x16x1xf32>
    %16 = vector.broadcast %15 : vector<1x16x1xf32> to vector<2x16x256xf32>
    %17 = arith.addf %13, %16 : vector<2x16x256xf32>
    %cst_15 = arith.constant 0.000000e+00 : f32
    %18 = vector.broadcast %cst_15 : f32 to vector<2x16x256xf32>
    %19 = arith.maximumf %17, %18 : vector<2x16x256xf32>
    %20 = arith.truncf %19 : vector<2x16x256xf32> to vector<2x16x256xbf16>
    %cst_16 = arith.constant 0.000000e+00 : f32
    %21 = vector.broadcast %cst_16 : f32 to vector<2x128xf32>
    %22 = vector.extract_strided_slice %20 {offsets = [0, 0, 0], sizes = [2, 1, 256], strides = [1, 1, 1]} : vector<2x16x256xbf16> to vector<2x1x256xbf16>
    %23 = vector.shape_cast %22 : vector<2x1x256xbf16> to vector<2x256xbf16>
    %c0_17 = arith.constant 0 : index
    %c0_18 = arith.constant 0 : index
    %c0_19 = arith.constant 0 : index
    %24 = vector.load %arg4[%c0_17, %c0_18, %c0_19] : memref<16x256x128xbf16, #tpu.memory_space<vmem>>, vector<1x256x128xbf16>
    %25 = vector.shape_cast %24 : vector<1x256x128xbf16> to vector<256x128xbf16>
    %cst_20 = arith.constant dense<0.000000e+00> : vector<2x128xf32>
    %26 = tpu.matmul %23, %25, %cst_20 {dimension_numbers = #tpu.dot_dimension_numbers<[1], [0], [0], [1], [0, 0, 1, 1], [], []>} : vector<2x256xbf16>, vector<256x128xbf16>, vector<2x128xf32> -> vector<2x128xf32>
    %27 = arith.addf %21, %26 : vector<2x128xf32>
    %28 = vector.extract_strided_slice %20 {offsets = [0, 1, 0], sizes = [2, 1, 256], strides = [1, 1, 1]} : vector<2x16x256xbf16> to vector<2x1x256xbf16>
    %29 = vector.shape_cast %28 : vector<2x1x256xbf16> to vector<2x256xbf16>
    %c1 = arith.constant 1 : index
    %c0_21 = arith.constant 0 : index
    %c0_22 = arith.constant 0 : index
    %30 = vector.load %arg4[%c1, %c0_21, %c0_22] : memref<16x256x128xbf16, #tpu.memory_space<vmem>>, vector<1x256x128xbf16>
    %31 = vector.shape_cast %30 : vector<1x256x128xbf16> to vector<256x128xbf16>
    %cst_23 = arith.constant dense<0.000000e+00> : vector<2x128xf32>
    %32 = tpu.matmul %29, %31, %cst_23 {dimension_numbers = #tpu.dot_dimension_numbers<[1], [0], [0], [1], [0, 0, 1, 1], [], []>} : vector<2x256xbf16>, vector<256x128xbf16>, vector<2x128xf32> -> vector<2x128xf32>
    %33 = arith.addf %27, %32 : vector<2x128xf32>
    %34 = vector.extract_strided_slice %20 {offsets = [0, 2, 0], sizes = [2, 1, 256], strides = [1, 1, 1]} : vector<2x16x256xbf16> to vector<2x1x256xbf16>
    %35 = vector.shape_cast %34 : vector<2x1x256xbf16> to vector<2x256xbf16>
    %c2 = arith.constant 2 : index
    %c0_24 = arith.constant 0 : index
    %c0_25 = arith.constant 0 : index
    %36 = vector.load %arg4[%c2, %c0_24, %c0_25] : memref<16x256x128xbf16, #tpu.memory_space<vmem>>, vector<1x256x128xbf16>
    %37 = vector.shape_cast %36 : vector<1x256x128xbf16> to vector<256x128xbf16>
    %cst_26 = arith.constant dense<0.000000e+00> : vector<2x128xf32>
    %38 = tpu.matmul %35, %37, %cst_26 {dimension_numbers = #tpu.dot_dimension_numbers<[1], [0], [0], [1], [0, 0, 1, 1], [], []>} : vector<2x256xbf16>, vector<256x128xbf16>, vector<2x128xf32> -> vector<2x128xf32>
    %39 = arith.addf %33, %38 : vector<2x128xf32>
    %40 = vector.extract_strided_slice %20 {offsets = [0, 3, 0], sizes = [2, 1, 256], strides = [1, 1, 1]} : vector<2x16x256xbf16> to vector<2x1x256xbf16>
    %41 = vector.shape_cast %40 : vector<2x1x256xbf16> to vector<2x256xbf16>
    %c3 = arith.constant 3 : index
    %c0_27 = arith.constant 0 : index
    %c0_28 = arith.constant 0 : index
    %42 = vector.load %arg4[%c3, %c0_27, %c0_28] : memref<16x256x128xbf16, #tpu.memory_space<vmem>>, vector<1x256x128xbf16>
    %43 = vector.shape_cast %42 : vector<1x256x128xbf16> to vector<256x128xbf16>
    %cst_29 = arith.constant dense<0.000000e+00> : vector<2x128xf32>
    %44 = tpu.matmul %41, %43, %cst_29 {dimension_numbers = #tpu.dot_dimension_numbers<[1], [0], [0], [1], [0, 0, 1, 1], [], []>} : vector<2x256xbf16>, vector<256x128xbf16>, vector<2x128xf32> -> vector<2x128xf32>
    %45 = arith.addf %39, %44 : vector<2x128xf32>
    %46 = vector.extract_strided_slice %20 {offsets = [0, 4, 0], sizes = [2, 1, 256], strides = [1, 1, 1]} : vector<2x16x256xbf16> to vector<2x1x256xbf16>
    %47 = vector.shape_cast %46 : vector<2x1x256xbf16> to vector<2x256xbf16>
    %c4 = arith.constant 4 : index
    %c0_30 = arith.constant 0 : index
    %c0_31 = arith.constant 0 : index
    %48 = vector.load %arg4[%c4, %c0_30, %c0_31] : memref<16x256x128xbf16, #tpu.memory_space<vmem>>, vector<1x256x128xbf16>
    %49 = vector.shape_cast %48 : vector<1x256x128xbf16> to vector<256x128xbf16>
    %cst_32 = arith.constant dense<0.000000e+00> : vector<2x128xf32>
    %50 = tpu.matmul %47, %49, %cst_32 {dimension_numbers = #tpu.dot_dimension_numbers<[1], [0], [0], [1], [0, 0, 1, 1], [], []>} : vector<2x256xbf16>, vector<256x128xbf16>, vector<2x128xf32> -> vector<2x128xf32>
    %51 = arith.addf %45, %50 : vector<2x128xf32>
    %52 = vector.extract_strided_slice %20 {offsets = [0, 5, 0], sizes = [2, 1, 256], strides = [1, 1, 1]} : vector<2x16x256xbf16> to vector<2x1x256xbf16>
    %53 = vector.shape_cast %52 : vector<2x1x256xbf16> to vector<2x256xbf16>
    %c5 = arith.constant 5 : index
    %c0_33 = arith.constant 0 : index
    %c0_34 = arith.constant 0 : index
    %54 = vector.load %arg4[%c5, %c0_33, %c0_34] : memref<16x256x128xbf16, #tpu.memory_space<vmem>>, vector<1x256x128xbf16>
    %55 = vector.shape_cast %54 : vector<1x256x128xbf16> to vector<256x128xbf16>
    %cst_35 = arith.constant dense<0.000000e+00> : vector<2x128xf32>
    %56 = tpu.matmul %53, %55, %cst_35 {dimension_numbers = #tpu.dot_dimension_numbers<[1], [0], [0], [1], [0, 0, 1, 1], [], []>} : vector<2x256xbf16>, vector<256x128xbf16>, vector<2x128xf32> -> vector<2x128xf32>
    %57 = arith.addf %51, %56 : vector<2x128xf32>
    %58 = vector.extract_strided_slice %20 {offsets = [0, 6, 0], sizes = [2, 1, 256], strides = [1, 1, 1]} : vector<2x16x256xbf16> to vector<2x1x256xbf16>
    %59 = vector.shape_cast %58 : vector<2x1x256xbf16> to vector<2x256xbf16>
    %c6 = arith.constant 6 : index
    %c0_36 = arith.constant 0 : index
    %c0_37 = arith.constant 0 : index
    %60 = vector.load %arg4[%c6, %c0_36, %c0_37] : memref<16x256x128xbf16, #tpu.memory_space<vmem>>, vector<1x256x128xbf16>
    %61 = vector.shape_cast %60 : vector<1x256x128xbf16> to vector<256x128xbf16>
    %cst_38 = arith.constant dense<0.000000e+00> : vector<2x128xf32>
    %62 = tpu.matmul %59, %61, %cst_38 {dimension_numbers = #tpu.dot_dimension_numbers<[1], [0], [0], [1], [0, 0, 1, 1], [], []>} : vector<2x256xbf16>, vector<256x128xbf16>, vector<2x128xf32> -> vector<2x128xf32>
    %63 = arith.addf %57, %62 : vector<2x128xf32>
    %64 = vector.extract_strided_slice %20 {offsets = [0, 7, 0], sizes = [2, 1, 256], strides = [1, 1, 1]} : vector<2x16x256xbf16> to vector<2x1x256xbf16>
    %65 = vector.shape_cast %64 : vector<2x1x256xbf16> to vector<2x256xbf16>
    %c7 = arith.constant 7 : index
    %c0_39 = arith.constant 0 : index
    %c0_40 = arith.constant 0 : index
    %66 = vector.load %arg4[%c7, %c0_39, %c0_40] : memref<16x256x128xbf16, #tpu.memory_space<vmem>>, vector<1x256x128xbf16>
    %67 = vector.shape_cast %66 : vector<1x256x128xbf16> to vector<256x128xbf16>
    %cst_41 = arith.constant dense<0.000000e+00> : vector<2x128xf32>
    %68 = tpu.matmul %65, %67, %cst_41 {dimension_numbers = #tpu.dot_dimension_numbers<[1], [0], [0], [1], [0, 0, 1, 1], [], []>} : vector<2x256xbf16>, vector<256x128xbf16>, vector<2x128xf32> -> vector<2x128xf32>
    %69 = arith.addf %63, %68 : vector<2x128xf32>
    %70 = vector.extract_strided_slice %20 {offsets = [0, 8, 0], sizes = [2, 1, 256], strides = [1, 1, 1]} : vector<2x16x256xbf16> to vector<2x1x256xbf16>
    %71 = vector.shape_cast %70 : vector<2x1x256xbf16> to vector<2x256xbf16>
    %c8 = arith.constant 8 : index
    %c0_42 = arith.constant 0 : index
    %c0_43 = arith.constant 0 : index
    %72 = vector.load %arg4[%c8, %c0_42, %c0_43] : memref<16x256x128xbf16, #tpu.memory_space<vmem>>, vector<1x256x128xbf16>
    %73 = vector.shape_cast %72 : vector<1x256x128xbf16> to vector<256x128xbf16>
    %cst_44 = arith.constant dense<0.000000e+00> : vector<2x128xf32>
    %74 = tpu.matmul %71, %73, %cst_44 {dimension_numbers = #tpu.dot_dimension_numbers<[1], [0], [0], [1], [0, 0, 1, 1], [], []>} : vector<2x256xbf16>, vector<256x128xbf16>, vector<2x128xf32> -> vector<2x128xf32>
    %75 = arith.addf %69, %74 : vector<2x128xf32>
    %76 = vector.extract_strided_slice %20 {offsets = [0, 9, 0], sizes = [2, 1, 256], strides = [1, 1, 1]} : vector<2x16x256xbf16> to vector<2x1x256xbf16>
    %77 = vector.shape_cast %76 : vector<2x1x256xbf16> to vector<2x256xbf16>
    %c9 = arith.constant 9 : index
    %c0_45 = arith.constant 0 : index
    %c0_46 = arith.constant 0 : index
    %78 = vector.load %arg4[%c9, %c0_45, %c0_46] : memref<16x256x128xbf16, #tpu.memory_space<vmem>>, vector<1x256x128xbf16>
    %79 = vector.shape_cast %78 : vector<1x256x128xbf16> to vector<256x128xbf16>
    %cst_47 = arith.constant dense<0.000000e+00> : vector<2x128xf32>
    %80 = tpu.matmul %77, %79, %cst_47 {dimension_numbers = #tpu.dot_dimension_numbers<[1], [0], [0], [1], [0, 0, 1, 1], [], []>} : vector<2x256xbf16>, vector<256x128xbf16>, vector<2x128xf32> -> vector<2x128xf32>
    %81 = arith.addf %75, %80 : vector<2x128xf32>
    %82 = vector.extract_strided_slice %20 {offsets = [0, 10, 0], sizes = [2, 1, 256], strides = [1, 1, 1]} : vector<2x16x256xbf16> to vector<2x1x256xbf16>
    %83 = vector.shape_cast %82 : vector<2x1x256xbf16> to vector<2x256xbf16>
    %c10 = arith.constant 10 : index
    %c0_48 = arith.constant 0 : index
    %c0_49 = arith.constant 0 : index
    %84 = vector.load %arg4[%c10, %c0_48, %c0_49] : memref<16x256x128xbf16, #tpu.memory_space<vmem>>, vector<1x256x128xbf16>
    %85 = vector.shape_cast %84 : vector<1x256x128xbf16> to vector<256x128xbf16>
    %cst_50 = arith.constant dense<0.000000e+00> : vector<2x128xf32>
    %86 = tpu.matmul %83, %85, %cst_50 {dimension_numbers = #tpu.dot_dimension_numbers<[1], [0], [0], [1], [0, 0, 1, 1], [], []>} : vector<2x256xbf16>, vector<256x128xbf16>, vector<2x128xf32> -> vector<2x128xf32>
    %87 = arith.addf %81, %86 : vector<2x128xf32>
    %88 = vector.extract_strided_slice %20 {offsets = [0, 11, 0], sizes = [2, 1, 256], strides = [1, 1, 1]} : vector<2x16x256xbf16> to vector<2x1x256xbf16>
    %89 = vector.shape_cast %88 : vector<2x1x256xbf16> to vector<2x256xbf16>
    %c11 = arith.constant 11 : index
    %c0_51 = arith.constant 0 : index
    %c0_52 = arith.constant 0 : index
    %90 = vector.load %arg4[%c11, %c0_51, %c0_52] : memref<16x256x128xbf16, #tpu.memory_space<vmem>>, vector<1x256x128xbf16>
    %91 = vector.shape_cast %90 : vector<1x256x128xbf16> to vector<256x128xbf16>
    %cst_53 = arith.constant dense<0.000000e+00> : vector<2x128xf32>
    %92 = tpu.matmul %89, %91, %cst_53 {dimension_numbers = #tpu.dot_dimension_numbers<[1], [0], [0], [1], [0, 0, 1, 1], [], []>} : vector<2x256xbf16>, vector<256x128xbf16>, vector<2x128xf32> -> vector<2x128xf32>
    %93 = arith.addf %87, %92 : vector<2x128xf32>
    %94 = vector.extract_strided_slice %20 {offsets = [0, 12, 0], sizes = [2, 1, 256], strides = [1, 1, 1]} : vector<2x16x256xbf16> to vector<2x1x256xbf16>
    %95 = vector.shape_cast %94 : vector<2x1x256xbf16> to vector<2x256xbf16>
    %c12 = arith.constant 12 : index
    %c0_54 = arith.constant 0 : index
    %c0_55 = arith.constant 0 : index
    %96 = vector.load %arg4[%c12, %c0_54, %c0_55] : memref<16x256x128xbf16, #tpu.memory_space<vmem>>, vector<1x256x128xbf16>
    %97 = vector.shape_cast %96 : vector<1x256x128xbf16> to vector<256x128xbf16>
    %cst_56 = arith.constant dense<0.000000e+00> : vector<2x128xf32>
    %98 = tpu.matmul %95, %97, %cst_56 {dimension_numbers = #tpu.dot_dimension_numbers<[1], [0], [0], [1], [0, 0, 1, 1], [], []>} : vector<2x256xbf16>, vector<256x128xbf16>, vector<2x128xf32> -> vector<2x128xf32>
    %99 = arith.addf %93, %98 : vector<2x128xf32>
    %100 = vector.extract_strided_slice %20 {offsets = [0, 13, 0], sizes = [2, 1, 256], strides = [1, 1, 1]} : vector<2x16x256xbf16> to vector<2x1x256xbf16>
    %101 = vector.shape_cast %100 : vector<2x1x256xbf16> to vector<2x256xbf16>
    %c13 = arith.constant 13 : index
    %c0_57 = arith.constant 0 : index
    %c0_58 = arith.constant 0 : index
    %102 = vector.load %arg4[%c13, %c0_57, %c0_58] : memref<16x256x128xbf16, #tpu.memory_space<vmem>>, vector<1x256x128xbf16>
    %103 = vector.shape_cast %102 : vector<1x256x128xbf16> to vector<256x128xbf16>
    %cst_59 = arith.constant dense<0.000000e+00> : vector<2x128xf32>
    %104 = tpu.matmul %101, %103, %cst_59 {dimension_numbers = #tpu.dot_dimension_numbers<[1], [0], [0], [1], [0, 0, 1, 1], [], []>} : vector<2x256xbf16>, vector<256x128xbf16>, vector<2x128xf32> -> vector<2x128xf32>
    %105 = arith.addf %99, %104 : vector<2x128xf32>
    %106 = vector.extract_strided_slice %20 {offsets = [0, 14, 0], sizes = [2, 1, 256], strides = [1, 1, 1]} : vector<2x16x256xbf16> to vector<2x1x256xbf16>
    %107 = vector.shape_cast %106 : vector<2x1x256xbf16> to vector<2x256xbf16>
    %c14 = arith.constant 14 : index
    %c0_60 = arith.constant 0 : index
    %c0_61 = arith.constant 0 : index
    %108 = vector.load %arg4[%c14, %c0_60, %c0_61] : memref<16x256x128xbf16, #tpu.memory_space<vmem>>, vector<1x256x128xbf16>
    %109 = vector.shape_cast %108 : vector<1x256x128xbf16> to vector<256x128xbf16>
    %cst_62 = arith.constant dense<0.000000e+00> : vector<2x128xf32>
    %110 = tpu.matmul %107, %109, %cst_62 {dimension_numbers = #tpu.dot_dimension_numbers<[1], [0], [0], [1], [0, 0, 1, 1], [], []>} : vector<2x256xbf16>, vector<256x128xbf16>, vector<2x128xf32> -> vector<2x128xf32>
    %111 = arith.addf %105, %110 : vector<2x128xf32>
    %112 = vector.extract_strided_slice %20 {offsets = [0, 15, 0], sizes = [2, 1, 256], strides = [1, 1, 1]} : vector<2x16x256xbf16> to vector<2x1x256xbf16>
    %113 = vector.shape_cast %112 : vector<2x1x256xbf16> to vector<2x256xbf16>
    %c15 = arith.constant 15 : index
    %c0_63 = arith.constant 0 : index
    %c0_64 = arith.constant 0 : index
    %114 = vector.load %arg4[%c15, %c0_63, %c0_64] : memref<16x256x128xbf16, #tpu.memory_space<vmem>>, vector<1x256x128xbf16>
    %115 = vector.shape_cast %114 : vector<1x256x128xbf16> to vector<256x128xbf16>
    %cst_65 = arith.constant dense<0.000000e+00> : vector<2x128xf32>
    %116 = tpu.matmul %113, %115, %cst_65 {dimension_numbers = #tpu.dot_dimension_numbers<[1], [0], [0], [1], [0, 0, 1, 1], [], []>} : vector<2x256xbf16>, vector<256x128xbf16>, vector<2x128xf32> -> vector<2x128xf32>
    %117 = arith.addf %111, %116 : vector<2x128xf32>
    %c0_66 = arith.constant 0 : index
    %c0_67 = arith.constant 0 : index
    %118 = vector.load %arg5[%c0_66, %c0_67] : memref<1x128xf32, #tpu.memory_space<vmem>>, vector<1x128xf32>
    %119 = vector.broadcast %118 : vector<1x128xf32> to vector<2x128xf32>
    %120 = arith.addf %117, %119 : vector<2x128xf32>
    %121 = arith.truncf %120 : vector<2x128xf32> to vector<2x128xbf16>
    %c0_68 = arith.constant 0 : index
    %c0_69 = arith.constant 0 : index
    %122 = vector.load %arg6[%c0_68, %c0_69] : memref<128x128xbf16, #tpu.memory_space<vmem>>, vector<128x128xbf16>
    %cst_70 = arith.constant dense<0.000000e+00> : vector<2x128xf32>
    %123 = tpu.matmul %121, %122, %cst_70 {dimension_numbers = #tpu.dot_dimension_numbers<[1], [0], [0], [1], [0, 0, 1, 1], [], []>} : vector<2x128xbf16>, vector<128x128xbf16>, vector<2x128xf32> -> vector<2x128xf32>
    %c0_71 = arith.constant 0 : index
    %c0_72 = arith.constant 0 : index
    %124 = vector.load %arg7[%c0_71, %c0_72] : memref<1x128xf32, #tpu.memory_space<vmem>>, vector<1x128xf32>
    %125 = vector.broadcast %124 : vector<1x128xf32> to vector<2x128xf32>
    %126 = arith.addf %123, %125 : vector<2x128xf32>
    %cst_73 = arith.constant dense<0xFF800000> : vector<2xf32>
    %127 = vector.multi_reduction <maximumf>, %126, %cst_73 [1] : vector<2x128xf32> to vector<2xf32>
    %128 = vector.shape_cast %127 : vector<2xf32> to vector<2x1xf32>
    %129 = vector.broadcast %128 : vector<2x1xf32> to vector<2x128xf32>
    %130 = arith.subf %126, %129 : vector<2x128xf32>
    %131 = math.exp %130 : vector<2x128xf32>
    %cst_74 = arith.constant dense<0.000000e+00> : vector<2xf32>
    %132 = vector.multi_reduction <add>, %131, %cst_74 [1] : vector<2x128xf32> to vector<2xf32>
    %133 = vector.shape_cast %132 : vector<2xf32> to vector<2x1xf32>
    %134 = tpu.reciprocal %133 {approx = true} : vector<2x1xf32> -> vector<2x1xf32>
    %135 = vector.broadcast %134 : vector<2x1xf32> to vector<2x128xf32>
    %136 = arith.mulf %131, %135 : vector<2x128xf32>
    %c0_75 = arith.constant 0 : index
    %c0_76 = arith.constant 0 : index
    %137 = vector.load %arg8[%c0_75, %c0_76] : memref<2x128xf32, #tpu.memory_space<vmem>>, vector<2x128xf32>
    tpu.vector_store %arg8[%c0_75, %c0_76], %136 {strides = array<i32>} : memref<2x128xf32, #tpu.memory_space<vmem>>, vector<2x128xf32>,
    return
  }
  func.func @transform_0(%arg0: i32) -> (i32, i32, i32) {
    %c0_i32 = arith.constant 0 : i32
    %c0_i32_0 = arith.constant 0 : i32
    %c0_i32_1 = arith.constant 0 : i32
    return %arg0, %c0_i32, %c0_i32_0 : i32, i32, i32
  }
  func.func @transform_1(%arg0: i32) -> (i32, i32) {
    %c0_i32 = arith.constant 0 : i32
    %c0_i32_0 = arith.constant 0 : i32
    %c0_i32_1 = arith.constant 0 : i32
    return %c0_i32, %c0_i32_0 : i32, i32
  }
  func.func @transform_2(%arg0: i32) -> (i32, i32) {
    %c0_i32 = arith.constant 0 : i32
    %c0_i32_0 = arith.constant 0 : i32
    %c0_i32_1 = arith.constant 0 : i32
    return %c0_i32, %c0_i32_0 : i32, i32
  }
  func.func @transform_3(%arg0: i32) -> (i32, i32, i32) {
    %c0_i32 = arith.constant 0 : i32
    %c0_i32_0 = arith.constant 0 : i32
    %c0_i32_1 = arith.constant 0 : i32
    %c0_i32_2 = arith.constant 0 : i32
    return %c0_i32, %c0_i32_0, %c0_i32_1 : i32, i32, i32
  }
  func.func @transform_4(%arg0: i32) -> (i32, i32) {
    %c0_i32 = arith.constant 0 : i32
    %c0_i32_0 = arith.constant 0 : i32
    %c0_i32_1 = arith.constant 0 : i32
    return %c0_i32, %c0_i32_0 : i32, i32
  }
  func.func @transform_5(%arg0: i32) -> (i32, i32) {
    %c0_i32 = arith.constant 0 : i32
    %c0_i32_0 = arith.constant 0 : i32
    %c0_i32_1 = arith.constant 0 : i32
    return %c0_i32, %c0_i32_0 : i32, i32
  }
  func.func @transform_6(%arg0: i32) -> (i32, i32) {
    %c0_i32 = arith.constant 0 : i32
    %c0_i32_0 = arith.constant 0 : i32
    %c0_i32_1 = arith.constant 0 : i32
    return %c0_i32, %c0_i32_0 : i32, i32
  }
  func.func @transform_7(%arg0: i32) -> (i32, i32) {
    %c0_i32 = arith.constant 0 : i32
    %c0_i32_0 = arith.constant 0 : i32
    return %arg0, %c0_i32 : i32, i32
  }
}

</mosaic_0001>

<llo_original>
// kernel: cifar_model15_forward.1
$region0: #{cifar_model15_forward.1}
  #allocation0 [shape = 'u32[]', space=smem, size = 0x4, offset = 0x4, fixed_abs, tag = 'smem constant byte address 0x4 - core index']
  #allocation1 [shape = 'u32[144,128]{1,0:T(1,128)}', space=vmem, size = 0x12000, scoped, tag = 'internal scratch']
  %s0 = inlined_call_operand.vmem [shape: bf16[2,32,1024], index: 0, kind: input, shape index: {}]
  %s1 = inlined_call_operand.vmem [shape: bf16[16,32], index: 1, kind: input, shape index: {}]
  %s2 = inlined_call_operand.vmem [shape: f32[16,1], index: 2, kind: input, shape index: {}]
  %s3 = inlined_call_operand.vmem [shape: bf16[16,256,128], index: 3, kind: input, shape index: {}]
  %s4 = inlined_call_operand.vmem [shape: f32[1,128], index: 4, kind: input, shape index: {}]
  %s5 = inlined_call_operand.vmem [shape: bf16[128,128], index: 5, kind: input, shape index: {}]
  %s6 = inlined_call_operand.vmem [shape: f32[1,128], index: 6, kind: input, shape index: {}]
  %s7 = inlined_call_operand.hbm [shape: f32[2,128], index: 7, kind: output, shape index: {}]
  %s8 = sld [smem:[#allocation0]]
  $region38: #{cifar_model15_forward.1} parent=0
    _
  %s10 = ssub.s32 1, %s8
  %s11 = scalar_select 0, %s10, %s8
  $region1: #{cifar_model15_forward.1} parent=0
    #allocation2 [shape = 'u8[1024]{0}', space=vmem, size = 0x400, scoped, tag = 'output window, operand 0, single buffered']
    #allocation3 [shape = 's32[1]{0}', space=sflag, size = 0x4, scoped, tag = 'scoped memory for cifar_model15_forward.1']
    %12 = vsyncpa [#allocation3], 0
    // Predicated region
    $region2: #{cifar_model15_forward.1} parent=1 // pred_check
      _
    $region3: #{cifar_model15_forward.1} parent=1 // pred_check_branch
      %14 = sbr.rel (0) target = $region5
    $region4: #{cifar_model15_forward.1} parent=1 // pred_region
      _
    $region5: #{cifar_model15_forward.1} parent=1 // pred_fallthru
      _
    // Predicated region
    $region6: #{cifar_model15_forward.1} parent=1 // pred_check
      _
    $region7: #{cifar_model15_forward.1} parent=1 // pred_check_branch
      %16 = sbr.rel (0) target = $region9
    $region8: #{cifar_model15_forward.1} parent=1 // pred_region
      _
    $region9: #{cifar_model15_forward.1} parent=1 // pred_fallthru
      _
    // Predicated region
    $region10: #{cifar_model15_forward.1} parent=1 // pred_check
      _
    $region11: #{cifar_model15_forward.1} parent=1 // pred_check_branch
      %18 = sbr.rel (0) target = $region13
    $region12: #{cifar_model15_forward.1} parent=1 // pred_region
      _
    $region13: #{cifar_model15_forward.1} parent=1 // pred_fallthru
      _
    // Predicated region
    $region14: #{cifar_model15_forward.1} parent=1 // pred_check
      _
    $region15: #{cifar_model15_forward.1} parent=1 // pred_check_branch
      %20 = sbr.rel (0) target = $region17
    $region16: #{cifar_model15_forward.1} parent=1 // pred_region
      _
    $region17: #{cifar_model15_forward.1} parent=1 // pred_fallthru
      _
    // Predicated region
    $region18: #{cifar_model15_forward.1} parent=1 // pred_check
      _
    $region19: #{cifar_model15_forward.1} parent=1 // pred_check_branch
      %22 = sbr.rel (0) target = $region21
    $region20: #{cifar_model15_forward.1} parent=1 // pred_region
      _
    $region21: #{cifar_model15_forward.1} parent=1 // pred_fallthru
      _
    // Predicated region
    $region22: #{cifar_model15_forward.1} parent=1 // pred_check
      _
    $region23: #{cifar_model15_forward.1} parent=1 // pred_check_branch
      %24 = sbr.rel (0) target = $region25
    $region24: #{cifar_model15_forward.1} parent=1 // pred_region
      _
    $region25: #{cifar_model15_forward.1} parent=1 // pred_fallthru
      _
    // Predicated region
    $region26: #{cifar_model15_forward.1} parent=1 // pred_check
      _
    $region27: #{cifar_model15_forward.1} parent=1 // pred_check_branch
      %26 = sbr.rel (0) target = $region29
    $region28: #{cifar_model15_forward.1} parent=1 // pred_region
      _
    $region29: #{cifar_model15_forward.1} parent=1 // pred_fallthru
      _
    %v28 = vld [vmem:[%s1] sm:$0xf]
    %v29 = vld [vmem:[%s1 + $0x4] sm:$0xf]
    %v30 = vld [vmem:[%s0] sm:$0xff]
    %v31 = vld [vmem:[%s0 + $0x20] sm:$0xff]
    %v32 = vld [vmem:[%s0 + $0x40] sm:$0xff]
    %v33 = vld [vmem:[%s0 + $0x60] sm:$0xff]
    %v34 = vld [vmem:[%s0 + $0x80] sm:$0xff]
    %v35 = vld [vmem:[%s0 + $0xa0] sm:$0xff]
    %v36 = vld [vmem:[%s0 + $0xc0] sm:$0xff]
    %v37 = vld [vmem:[%s0 + $0xe0] sm:$0xff]
    %v40 = vunpack.c.l.b16 %v28
    %v41 = vunpack.c.l.b16 %v29
    %v42 = vpack.c.b16 %v41, %v40
    %v47 = vunpack.c.l.b16 %v30
    %v48 = vunpack.c.h.b16 %v30
    %v49 = vunpack.c.l.b16 %v31
    %v50 = vunpack.c.h.b16 %v31
    %v51 = vunpack.c.l.b16 %v32
    %v52 = vunpack.c.h.b16 %v32
    %v53 = vunpack.c.l.b16 %v33
    %v54 = vunpack.c.h.b16 %v33
    %v55 = vpack.c.b16 %v49, %v47
    %v56 = vpack.c.b16 %v50, %v48
    %v57 = vpack.c.b16 %v53, %v51
    %v58 = vpack.c.b16 %v54, %v52
    %vm63 = vcmask 261120
    %v65 = vsel %vm63, %v42, 0
    %67 = vmatprep.subr.bf16.mxu0 %v56
    %68 = vmatpush1.bf16.msra.mxu0 %v55
    %69 = vmatprep.subr.bf16.mxu0 %v58
    %70 = vmatpush1.bf16.msra.mxu0 %v57
    %71 = vmatprep.subr.bf16.mxu0 0
    %72 = vmatpush1.bf16.msra.mxu0 0
    %73 = vmatprep.subr.bf16.mxu0 0
    %74 = vmatpush1.bf16.msra.mxu0 0
    %75 = vmatprep.subr.bf16.mxu0 0
    %76 = vmatpush1.bf16.msra.mxu0 0
    %77 = vmatprep.subr.bf16.mxu0 0
    %78 = vmatpush1.bf16.msra.mxu0 0
    %79 = vmatprep.subr.bf16.mxu0 0
    %80 = vmatpush1.bf16.msra.mxu0 0
    %81 = vmatprep.subr.bf16.mxu0 0
    %82 = vmatpush1.bf16.msra.mxu0 0
    %83 = vmatprep.subr.bf16.mxu0 0
    %84 = vmatpush1.bf16.msra.mxu0 0
    %85 = vmatprep.subr.bf16.mxu0 0
    %86 = vmatpush1.bf16.msra.mxu0 0
    %87 = vmatprep.subr.bf16.mxu0 0
    %88 = vmatpush1.bf16.msra.mxu0 0
    %89 = vmatprep.subr.bf16.mxu0 0
    %90 = vmatpush1.bf16.msra.mxu0 0
    %91 = vmatprep.subr.bf16.mxu0 0
    %92 = vmatpush1.bf16.msra.mxu0 0
    %93 = vmatprep.subr.bf16.mxu0 0
    %94 = vmatpush1.bf16.msra.mxu0 0
    %95 = vmatprep.subr.bf16.mxu0 0
    %96 = vmatpush1.bf16.msra.mxu0 0
    %97 = vmatprep.subr.bf16.mxu0 0
    %98 = vmatpush1.bf16.msra.mxu0 0
    %99 = vmatprep.mubr.bf16.mxu0 0
    %100 = vmatmul.mubr.bf16.gmra.mrb[0].mxu0 %v65
    %v101 = vpop.f32.mrb[0].mxu0
    %v102 = vadd.f32 0.0, %v101
    %v103 = vpop.f32.mrb[0].mxu0
    %v104 = vadd.f32 0.0, %v103
    %v105 = vpop.f32.mrb[0].mxu0
    %v106 = vadd.f32 0.0, %v105
    %v107 = vpop.f32.mrb[0].mxu0
    %v108 = vadd.f32 0.0, %v107
    %109 = vdwg.mxu0
    %v114 = vunpack.c.l.b16 %v34
    %v115 = vunpack.c.h.b16 %v34
    %v116 = vunpack.c.l.b16 %v35
    %v117 = vunpack.c.h.b16 %v35
    %v118 = vunpack.c.l.b16 %v36
    %v119 = vunpack.c.h.b16 %v36
    %v120 = vunpack.c.l.b16 %v37
    %v121 = vunpack.c.h.b16 %v37
    %v122 = vpack.c.b16 %v116, %v114
    %v123 = vpack.c.b16 %v117, %v115
    %v124 = vpack.c.b16 %v120, %v118
    %v125 = vpack.c.b16 %v121, %v119
    %130 = vmatprep.subr.bf16.mxu0 %v123
    %131 = vmatpush1.bf16.msra.mxu0 %v122
    %132 = vmatprep.subr.bf16.mxu0 %v125
    %133 = vmatpush1.bf16.msra.mxu0 %v124
    %134 = vmatprep.subr.bf16.mxu0 0
    %135 = vmatpush1.bf16.msra.mxu0 0
    %136 = vmatprep.subr.bf16.mxu0 0
    %137 = vmatpush1.bf16.msra.mxu0 0
    %138 = vmatprep.subr.bf16.mxu0 0
    %139 = vmatpush1.bf16.msra.mxu0 0
    %140 = vmatprep.subr.bf16.mxu0 0
    %141 = vmatpush1.bf16.msra.mxu0 0
    %142 = vmatprep.subr.bf16.mxu0 0
    %143 = vmatpush1.bf16.msra.mxu0 0
    %144 = vmatprep.subr.bf16.mxu0 0
    %145 = vmatpush1.bf16.msra.mxu0 0
    %146 = vmatprep.subr.bf16.mxu0 0
    %147 = vmatpush1.bf16.msra.mxu0 0
    %148 = vmatprep.subr.bf16.mxu0 0
    %149 = vmatpush1.bf16.msra.mxu0 0
    %150 = vmatprep.subr.bf16.mxu0 0
    %151 = vmatpush1.bf16.msra.mxu0 0
    %152 = vmatprep.subr.bf16.mxu0 0
    %153 = vmatpush1.bf16.msra.mxu0 0
    %154 = vmatprep.subr.bf16.mxu0 0
    %155 = vmatpush1.bf16.msra.mxu0 0
    %156 = vmatprep.subr.bf16.mxu0 0
    %157 = vmatpush1.bf16.msra.mxu0 0
    %158 = vmatprep.subr.bf16.mxu0 0
    %159 = vmatpush1.bf16.msra.mxu0 0
    %160 = vmatprep.subr.bf16.mxu0 0
    %161 = vmatpush1.bf16.msra.mxu0 0
    %162 = vmatprep.mubr.bf16.mxu0 0
    %163 = vmatmul.mubr.bf16.gmra.mrb[0].mxu0 %v65
    %v164 = vpop.f32.mrb[0].mxu0
    %v165 = vadd.f32 0.0, %v164
    %v166 = vpop.f32.mrb[0].mxu0
    %v167 = vadd.f32 0.0, %v166
    %v168 = vpop.f32.mrb[0].mxu0
    %v169 = vadd.f32 0.0, %v168
    %v170 = vpop.f32.mrb[0].mxu0
    %v171 = vadd.f32 0.0, %v170
    %172 = vdwg.mxu0
    %v173 = vld [vmem:[%s0 + $0x8] sm:$0xff]
    %v174 = vld [vmem:[%s0 + $0x28] sm:$0xff]
    %v175 = vld [vmem:[%s0 + $0x48] sm:$0xff]
    %v176 = vld [vmem:[%s0 + $0x68] sm:$0xff]
    %v177 = vld [vmem:[%s0 + $0x88] sm:$0xff]
    %v178 = vld [vmem:[%s0 + $0xa8] sm:$0xff]
    %v179 = vld [vmem:[%s0 + $0xc8] sm:$0xff]
    %v180 = vld [vmem:[%s0 + $0xe8] sm:$0xff]
    %v185 = vunpack.c.l.b16 %v173
    %v186 = vunpack.c.h.b16 %v173
    %v187 = vunpack.c.l.b16 %v174
    %v188 = vunpack.c.h.b16 %v174
    %v189 = vunpack.c.l.b16 %v175
    %v190 = vunpack.c.h.b16 %v175
    %v191 = vunpack.c.l.b16 %v176
    %v192 = vunpack.c.h.b16 %v176
    %v193 = vpack.c.b16 %v187, %v185
    %v194 = vpack.c.b16 %v188, %v186
    %v195 = vpack.c.b16 %v191, %v189
    %v196 = vpack.c.b16 %v192, %v190
    %201 = vmatprep.subr.bf16.mxu0 %v194
    %202 = vmatpush1.bf16.msra.mxu0 %v193
    %203 = vmatprep.subr.bf16.mxu0 %v196
    %204 = vmatpush1.bf16.msra.mxu0 %v195
    %205 = vmatprep.subr.bf16.mxu0 0
    %206 = vmatpush1.bf16.msra.mxu0 0
    %207 = vmatprep.subr.bf16.mxu0 0
    %208 = vmatpush1.bf16.msra.mxu0 0
    %209 = vmatprep.subr.bf16.mxu0 0
    %210 = vmatpush1.bf16.msra.mxu0 0
    %211 = vmatprep.subr.bf16.mxu0 0
    %212 = vmatpush1.bf16.msra.mxu0 0
    %213 = vmatprep.subr.bf16.mxu0 0
    %214 = vmatpush1.bf16.msra.mxu0 0
    %215 = vmatprep.subr.bf16.mxu0 0
    %216 = vmatpush1.bf16.msra.mxu0 0
    %217 = vmatprep.subr.bf16.mxu0 0
    %218 = vmatpush1.bf16.msra.mxu0 0
    %219 = vmatprep.subr.bf16.mxu0 0
    %220 = vmatpush1.bf16.msra.mxu0 0
    %221 = vmatprep.subr.bf16.mxu0 0
    %222 = vmatpush1.bf16.msra.mxu0 0
    %223 = vmatprep.subr.bf16.mxu0 0
    %224 = vmatpush1.bf16.msra.mxu0 0
    %225 = vmatprep.subr.bf16.mxu0 0
    %226 = vmatpush1.bf16.msra.mxu0 0
    %227 = vmatprep.subr.bf16.mxu0 0
    %228 = vmatpush1.bf16.msra.mxu0 0
    %229 = vmatprep.subr.bf16.mxu0 0
    %230 = vmatpush1.bf16.msra.mxu0 0
    %231 = vmatprep.subr.bf16.mxu0 0
    %232 = vmatpush1.bf16.msra.mxu0 0
    %233 = vmatprep.mubr.bf16.mxu0 0
    %234 = vmatmul.mubr.bf16.gmra.mrb[0].mxu0 %v65
    %v235 = vpop.f32.mrb[0].mxu0
    %v236 = vadd.f32 0.0, %v235
    %v237 = vpop.f32.mrb[0].mxu0
    %v238 = vadd.f32 0.0, %v237
    %v239 = vpop.f32.mrb[0].mxu0
    %v240 = vadd.f32 0.0, %v239
    %v241 = vpop.f32.mrb[0].mxu0
    %v242 = vadd.f32 0.0, %v241
    %243 = vdwg.mxu0
    %v248 = vunpack.c.l.b16 %v177
    %v249 = vunpack.c.h.b16 %v177
    %v250 = vunpack.c.l.b16 %v178
    %v251 = vunpack.c.h.b16 %v178
    %v252 = vunpack.c.l.b16 %v179
    %v253 = vunpack.c.h.b16 %v179
    %v254 = vunpack.c.l.b16 %v180
    %v255 = vunpack.c.h.b16 %v180
    %v256 = vpack.c.b16 %v250, %v248
    %v257 = vpack.c.b16 %v251, %v249
    %v258 = vpack.c.b16 %v254, %v252
    %v259 = vpack.c.b16 %v255, %v253
    %264 = vmatprep.subr.bf16.mxu0 %v257
    %265 = vmatpush1.bf16.msra.mxu0 %v256
    %266 = vmatprep.subr.bf16.mxu0 %v259
    %267 = vmatpush1.bf16.msra.mxu0 %v258
    %268 = vmatprep.subr.bf16.mxu0 0
    %269 = vmatpush1.bf16.msra.mxu0 0
    %270 = vmatprep.subr.bf16.mxu0 0
    %271 = vmatpush1.bf16.msra.mxu0 0
    %272 = vmatprep.subr.bf16.mxu0 0
    %273 = vmatpush1.bf16.msra.mxu0 0
    %274 = vmatprep.subr.bf16.mxu0 0
    %275 = vmatpush1.bf16.msra.mxu0 0
    %276 = vmatprep.subr.bf16.mxu0 0
    %277 = vmatpush1.bf16.msra.mxu0 0
    %278 = vmatprep.subr.bf16.mxu0 0
    %279 = vmatpush1.bf16.msra.mxu0 0
    %280 = vmatprep.subr.bf16.mxu0 0
    %281 = vmatpush1.bf16.msra.mxu0 0
    %282 = vmatprep.subr.bf16.mxu0 0
    %283 = vmatpush1.bf16.msra.mxu0 0
    %284 = vmatprep.subr.bf16.mxu0 0
    %285 = vmatpush1.bf16.msra.mxu0 0
    %286 = vmatprep.subr.bf16.mxu0 0
    %287 = vmatpush1.bf16.msra.mxu0 0
    %288 = vmatprep.subr.bf16.mxu0 0
    %289 = vmatpush1.bf16.msra.mxu0 0
    %290 = vmatprep.subr.bf16.mxu0 0
    %291 = vmatpush1.bf16.msra.mxu0 0
    %292 = vmatprep.subr.bf16.mxu0 0
    %293 = vmatpush1.bf16.msra.mxu0 0
    %294 = vmatprep.subr.bf16.mxu0 0
    %295 = vmatpush1.bf16.msra.mxu0 0
    %296 = vmatprep.mubr.bf16.mxu0 0
    %297 = vmatmul.mubr.bf16.gmra.mrb[0].mxu0 %v65
    %v298 = vpop.f32.mrb[0].mxu0
    %v299 = vadd.f32 0.0, %v298
    %v300 = vpop.f32.mrb[0].mxu0
    %v301 = vadd.f32 0.0, %v300
    %v302 = vpop.f32.mrb[0].mxu0
    %v303 = vadd.f32 0.0, %v302
    %v304 = vpop.f32.mrb[0].mxu0
    %v305 = vadd.f32 0.0, %v304
    %306 = vdwg.mxu0
    %v307 = vmax.f32 %v102, %v236
    %v308 = vmax.f32 %v104, %v238
    %v309 = vmax.f32 %v106, %v240
    %v310 = vmax.f32 %v108, %v242
    %v311 = vmax.f32 %v165, %v299
    %v312 = vmax.f32 %v167, %v301
    %v313 = vmax.f32 %v169, %v303
    %v314 = vmax.f32 %v171, %v305
    %v315 = vld [vmem:[%s0 + $0x10] sm:$0xff]
    %v316 = vld [vmem:[%s0 + $0x30] sm:$0xff]
    %v317 = vld [vmem:[%s0 + $0x50] sm:$0xff]
    %v318 = vld [vmem:[%s0 + $0x70] sm:$0xff]
    %v319 = vld [vmem:[%s0 + $0x90] sm:$0xff]
    %v320 = vld [vmem:[%s0 + $0xb0] sm:$0xff]
    %v321 = vld [vmem:[%s0 + $0xd0] sm:$0xff]
    %v322 = vld [vmem:[%s0 + $0xf0] sm:$0xff]
    %v327 = vunpack.c.l.b16 %v315
    %v328 = vunpack.c.h.b16 %v315
    %v329 = vunpack.c.l.b16 %v316
    %v330 = vunpack.c.h.b16 %v316
    %v331 = vunpack.c.l.b16 %v317
    %v332 = vunpack.c.h.b16 %v317
    %v333 = vunpack.c.l.b16 %v318
    %v334 = vunpack.c.h.b16 %v318
    %v335 = vpack.c.b16 %v329, %v327
    %v336 = vpack.c.b16 %v330, %v328
    %v337 = vpack.c.b16 %v333, %v331
    %v338 = vpack.c.b16 %v334, %v332
    %343 = vmatprep.subr.bf16.mxu0 %v336
    %344 = vmatpush1.bf16.msra.mxu0 %v335
    %345 = vmatprep.subr.bf16.mxu0 %v338
    %346 = vmatpush1.bf16.msra.mxu0 %v337
    %347 = vmatprep.subr.bf16.mxu0 0
    %348 = vmatpush1.bf16.msra.mxu0 0
    %349 = vmatprep.subr.bf16.mxu0 0
    %350 = vmatpush1.bf16.msra.mxu0 0
    %351 = vmatprep.subr.bf16.mxu0 0
    %352 = vmatpush1.bf16.msra.mxu0 0
    %353 = vmatprep.subr.bf16.mxu0 0
    %354 = vmatpush1.bf16.msra.mxu0 0
    %355 = vmatprep.subr.bf16.mxu0 0
    %356 = vmatpush1.bf16.msra.mxu0 0
    %357 = vmatprep.subr.bf16.mxu0 0
    %358 = vmatpush1.bf16.msra.mxu0 0
    %359 = vmatprep.subr.bf16.mxu0 0
    %360 = vmatpush1.bf16.msra.mxu0 0
    %361 = vmatprep.subr.bf16.mxu0 0
    %362 = vmatpush1.bf16.msra.mxu0 0
    %363 = vmatprep.subr.bf16.mxu0 0
    %364 = vmatpush1.bf16.msra.mxu0 0
    %365 = vmatprep.subr.bf16.mxu0 0
    %366 = vmatpush1.bf16.msra.mxu0 0
    %367 = vmatprep.subr.bf16.mxu0 0
    %368 = vmatpush1.bf16.msra.mxu0 0
    %369 = vmatprep.subr.bf16.mxu0 0
    %370 = vmatpush1.bf16.msra.mxu0 0
    %371 = vmatprep.subr.bf16.mxu0 0
    %372 = vmatpush1.bf16.msra.mxu0 0
    %373 = vmatprep.subr.bf16.mxu0 0
    %374 = vmatpush1.bf16.msra.mxu0 0
    %375 = vmatprep.mubr.bf16.mxu0 0
    %376 = vmatmul.mubr.bf16.gmra.mrb[0].mxu0 %v65
    %v377 = vpop.f32.mrb[0].mxu0
    %v378 = vadd.f32 0.0, %v377
    %v379 = vpop.f32.mrb[0].mxu0
    %v380 = vadd.f32 0.0, %v379
    %v381 = vpop.f32.mrb[0].mxu0
    %v382 = vadd.f32 0.0, %v381
    %v383 = vpop.f32.mrb[0].mxu0
    %v384 = vadd.f32 0.0, %v383
    %385 = vdwg.mxu0
    %v390 = vunpack.c.l.b16 %v319
    %v391 = vunpack.c.h.b16 %v319
    %v392 = vunpack.c.l.b16 %v320
    %v393 = vunpack.c.h.b16 %v320
    %v394 = vunpack.c.l.b16 %v321
    %v395 = vunpack.c.h.b16 %v321
    %v396 = vunpack.c.l.b16 %v322
    %v397 = vunpack.c.h.b16 %v322
    %v398 = vpack.c.b16 %v392, %v390
    %v399 = vpack.c.b16 %v393, %v391
    %v400 = vpack.c.b16 %v396, %v394
    %v401 = vpack.c.b16 %v397, %v395
    %406 = vmatprep.subr.bf16.mxu0 %v399
    %407 = vmatpush1.bf16.msra.mxu0 %v398
    %408 = vmatprep.subr.bf16.mxu0 %v401
    %409 = vmatpush1.bf16.msra.mxu0 %v400
    %410 = vmatprep.subr.bf16.mxu0 0
    %411 = vmatpush1.bf16.msra.mxu0 0
    %412 = vmatprep.subr.bf16.mxu0 0
    %413 = vmatpush1.bf16.msra.mxu0 0
    %414 = vmatprep.subr.bf16.mxu0 0
    %415 = vmatpush1.bf16.msra.mxu0 0
    %416 = vmatprep.subr.bf16.mxu0 0
    %417 = vmatpush1.bf16.msra.mxu0 0
    %418 = vmatprep.subr.bf16.mxu0 0
    %419 = vmatpush1.bf16.msra.mxu0 0
    %420 = vmatprep.subr.bf16.mxu0 0
    %421 = vmatpush1.bf16.msra.mxu0 0
    %422 = vmatprep.subr.bf16.mxu0 0
    %423 = vmatpush1.bf16.msra.mxu0 0
    %424 = vmatprep.subr.bf16.mxu0 0
    %425 = vmatpush1.bf16.msra.mxu0 0
    %426 = vmatprep.subr.bf16.mxu0 0
    %427 = vmatpush1.bf16.msra.mxu0 0
    %428 = vmatprep.subr.bf16.mxu0 0
    %429 = vmatpush1.bf16.msra.mxu0 0
    %430 = vmatprep.subr.bf16.mxu0 0
    %431 = vmatpush1.bf16.msra.mxu0 0
    %432 = vmatprep.subr.bf16.mxu0 0
    %433 = vmatpush1.bf16.msra.mxu0 0
    %434 = vmatprep.subr.bf16.mxu0 0
    %435 = vmatpush1.bf16.msra.mxu0 0
    %436 = vmatprep.subr.bf16.mxu0 0
    %437 = vmatpush1.bf16.msra.mxu0 0
    %438 = vmatprep.mubr.bf16.mxu0 0
    %439 = vmatmul.mubr.bf16.gmra.mrb[0].mxu0 %v65
    %v440 = vpop.f32.mrb[0].mxu0
    %v441 = vadd.f32 0.0, %v440
    %v442 = vpop.f32.mrb[0].mxu0
    %v443 = vadd.f32 0.0, %v442
    %v444 = vpop.f32.mrb[0].mxu0
    %v445 = vadd.f32 0.0, %v444
    %v446 = vpop.f32.mrb[0].mxu0
    %v447 = vadd.f32 0.0, %v446
    %448 = vdwg.mxu0
    %v449 = vmax.f32 %v307, %v378
    %v450 = vmax.f32 %v308, %v380
    %v451 = vmax.f32 %v309, %v382
    %v452 = vmax.f32 %v310, %v384
    %v453 = vmax.f32 %v311, %v441
    %v454 = vmax.f32 %v312, %v443
    %v455 = vmax.f32 %v313, %v445
    %v456 = vmax.f32 %v314, %v447
    %v457 = vld [vmem:[%s0 + $0x18] sm:$0xff]
    %v458 = vld [vmem:[%s0 + $0x38] sm:$0xff]
    %v459 = vld [vmem:[%s0 + $0x58] sm:$0xff]
    %v460 = vld [vmem:[%s0 + $0x78] sm:$0xff]
    %v461 = vld [vmem:[%s0 + $0x98] sm:$0xff]
    %v462 = vld [vmem:[%s0 + $0xb8] sm:$0xff]
    %v463 = vld [vmem:[%s0 + $0xd8] sm:$0xff]
    %v464 = vld [vmem:[%s0 + $0xf8] sm:$0xff]
    %v469 = vunpack.c.l.b16 %v457
    %v470 = vunpack.c.h.b16 %v457
    %v471 = vunpack.c.l.b16 %v458
    %v472 = vunpack.c.h.b16 %v458
    %v473 = vunpack.c.l.b16 %v459
    %v474 = vunpack.c.h.b16 %v459
    %v475 = vunpack.c.l.b16 %v460
    %v476 = vunpack.c.h.b16 %v460
    %v477 = vpack.c.b16 %v471, %v469
    %v478 = vpack.c.b16 %v472, %v470
    %v479 = vpack.c.b16 %v475, %v473
    %v480 = vpack.c.b16 %v476, %v474
    %485 = vmatprep.subr.bf16.mxu0 %v478
    %486 = vmatpush1.bf16.msra.mxu0 %v477
    %487 = vmatprep.subr.bf16.mxu0 %v480
    %488 = vmatpush1.bf16.msra.mxu0 %v479
    %489 = vmatprep.subr.bf16.mxu0 0
    %490 = vmatpush1.bf16.msra.mxu0 0
    %491 = vmatprep.subr.bf16.mxu0 0
    %492 = vmatpush1.bf16.msra.mxu0 0
    %493 = vmatprep.subr.bf16.mxu0 0
    %494 = vmatpush1.bf16.msra.mxu0 0
    %495 = vmatprep.subr.bf16.mxu0 0
    %496 = vmatpush1.bf16.msra.mxu0 0
    %497 = vmatprep.subr.bf16.mxu0 0
    %498 = vmatpush1.bf16.msra.mxu0 0
    %499 = vmatprep.subr.bf16.mxu0 0
    %500 = vmatpush1.bf16.msra.mxu0 0
    %501 = vmatprep.subr.bf16.mxu0 0
    %502 = vmatpush1.bf16.msra.mxu0 0
    %503 = vmatprep.subr.bf16.mxu0 0
    %504 = vmatpush1.bf16.msra.mxu0 0
    %505 = vmatprep.subr.bf16.mxu0 0
    %506 = vmatpush1.bf16.msra.mxu0 0
    %507 = vmatprep.subr.bf16.mxu0 0
    %508 = vmatpush1.bf16.msra.mxu0 0
    %509 = vmatprep.subr.bf16.mxu0 0
    %510 = vmatpush1.bf16.msra.mxu0 0
    %511 = vmatprep.subr.bf16.mxu0 0
    %512 = vmatpush1.bf16.msra.mxu0 0
    %513 = vmatprep.subr.bf16.mxu0 0
    %514 = vmatpush1.bf16.msra.mxu0 0
    %515 = vmatprep.subr.bf16.mxu0 0
    %516 = vmatpush1.bf16.msra.mxu0 0
    %517 = vmatprep.mubr.bf16.mxu0 0
    %518 = vmatmul.mubr.bf16.gmra.mrb[0].mxu0 %v65
    %v519 = vpop.f32.mrb[0].mxu0
    %v520 = vadd.f32 0.0, %v519
    %v521 = vpop.f32.mrb[0].mxu0
    %v522 = vadd.f32 0.0, %v521
    %v523 = vpop.f32.mrb[0].mxu0
    %v524 = vadd.f32 0.0, %v523
    %v525 = vpop.f32.mrb[0].mxu0
    %v526 = vadd.f32 0.0, %v525
    %527 = vdwg.mxu0
    %v532 = vunpack.c.l.b16 %v461
    %v533 = vunpack.c.h.b16 %v461
    %v534 = vunpack.c.l.b16 %v462
    %v535 = vunpack.c.h.b16 %v462
    %v536 = vunpack.c.l.b16 %v463
    %v537 = vunpack.c.h.b16 %v463
    %v538 = vunpack.c.l.b16 %v464
    %v539 = vunpack.c.h.b16 %v464
    %v540 = vpack.c.b16 %v534, %v532
    %v541 = vpack.c.b16 %v535, %v533
    %v542 = vpack.c.b16 %v538, %v536
    %v543 = vpack.c.b16 %v539, %v537
    %548 = vmatprep.subr.bf16.mxu0 %v541
    %549 = vmatpush1.bf16.msra.mxu0 %v540
    %550 = vmatprep.subr.bf16.mxu0 %v543
    %551 = vmatpush1.bf16.msra.mxu0 %v542
    %552 = vmatprep.subr.bf16.mxu0 0
    %553 = vmatpush1.bf16.msra.mxu0 0
    %554 = vmatprep.subr.bf16.mxu0 0
    %555 = vmatpush1.bf16.msra.mxu0 0
    %556 = vmatprep.subr.bf16.mxu0 0
    %557 = vmatpush1.bf16.msra.mxu0 0
    %558 = vmatprep.subr.bf16.mxu0 0
    %559 = vmatpush1.bf16.msra.mxu0 0
    %560 = vmatprep.subr.bf16.mxu0 0
    %561 = vmatpush1.bf16.msra.mxu0 0
    %562 = vmatprep.subr.bf16.mxu0 0
    %563 = vmatpush1.bf16.msra.mxu0 0
    %564 = vmatprep.subr.bf16.mxu0 0
    %565 = vmatpush1.bf16.msra.mxu0 0
    %566 = vmatprep.subr.bf16.mxu0 0
    %567 = vmatpush1.bf16.msra.mxu0 0
    %568 = vmatprep.subr.bf16.mxu0 0
    %569 = vmatpush1.bf16.msra.mxu0 0
    %570 = vmatprep.subr.bf16.mxu0 0
    %571 = vmatpush1.bf16.msra.mxu0 0
    %572 = vmatprep.subr.bf16.mxu0 0
    %573 = vmatpush1.bf16.msra.mxu0 0
    %574 = vmatprep.subr.bf16.mxu0 0
    %575 = vmatpush1.bf16.msra.mxu0 0
    %576 = vmatprep.subr.bf16.mxu0 0
    %577 = vmatpush1.bf16.msra.mxu0 0
    %578 = vmatprep.subr.bf16.mxu0 0
    %579 = vmatpush1.bf16.msra.mxu0 0
    %580 = vmatprep.mubr.bf16.mxu0 0
    %581 = vmatmul.mubr.bf16.gmra.mrb[0].mxu0 %v65
    %v582 = vpop.f32.mrb[0].mxu0
    %v583 = vadd.f32 0.0, %v582
    %v584 = vpop.f32.mrb[0].mxu0
    %v585 = vadd.f32 0.0, %v584
    %v586 = vpop.f32.mrb[0].mxu0
    %v587 = vadd.f32 0.0, %v586
    %v588 = vpop.f32.mrb[0].mxu0
    %v589 = vadd.f32 0.0, %v588
    %590 = vdwg.mxu0
    %v591 = vmax.f32 %v449, %v520
    %v592 = vmax.f32 %v450, %v522
    %v593 = vmax.f32 %v451, %v524
    %v594 = vmax.f32 %v452, %v526
    %v595 = vmax.f32 %v453, %v583
    %v596 = vmax.f32 %v454, %v585
    %v597 = vmax.f32 %v455, %v587
    %v598 = vmax.f32 %v456, %v589
    %v599 = vld [vmem:[%s2] sm:$0xff]
    %v600 = vld [vmem:[%s2 + $0x8] sm:$0xff]
    %602 = vset.pattern.permute.xlu0 0
    %603 = vperm.xlu0 %602, %v599
    %v604 = vpop.permute.xlu0 %603
    %607 = vset.pattern.permute.xlu0 0
    %608 = vperm.xlu0 %607, %v600
    %v609 = vpop.permute.xlu0 %608
    %v611 = vadd.f32 %v591, %v604
    %v612 = vadd.f32 %v592, %v604
    %v613 = vadd.f32 %v593, %v609
    %v614 = vadd.f32 %v594, %v609
    %v615 = vadd.f32 %v595, %v604
    %v616 = vadd.f32 %v596, %v604
    %v617 = vadd.f32 %v597, %v609
    %v618 = vadd.f32 %v598, %v609
    %v619 = vmax.f32 %v611, 0.0
    %v620 = vmax.f32 %v612, 0.0
    %v621 = vmax.f32 %v613, 0.0
    %v622 = vmax.f32 %v614, 0.0
    %v623 = vmax.f32 %v615, 0.0
    %v624 = vmax.f32 %v616, 0.0
    %v625 = vmax.f32 %v617, 0.0
    %v626 = vmax.f32 %v618, 0.0
    %v627 = vpack.c.bf16 %v621, %v619
    %v628 = vpack.c.bf16 %v622, %v620
    %v629 = vpack.c.bf16 %v625, %v623
    %v630 = vpack.c.bf16 %v626, %v624
    %v631 = vld [vmem:[%s3] sm:$0xf]
    %v632 = vld [vmem:[%s3 + $0x4] sm:$0xf]
    %v633 = vld [vmem:[%s3 + $0x8] sm:$0xf]
    %v634 = vld [vmem:[%s3 + $0xc] sm:$0xf]
    %v635 = vld [vmem:[%s3 + $0x10] sm:$0xf]
    %v636 = vld [vmem:[%s3 + $0x14] sm:$0xf]
    %v637 = vld [vmem:[%s3 + $0x18] sm:$0xf]
    %v638 = vld [vmem:[%s3 + $0x1c] sm:$0xf]
    %v639 = vld [vmem:[%s3 + $0x20] sm:$0xf]
    %v640 = vld [vmem:[%s3 + $0x24] sm:$0xf]
    %v641 = vld [vmem:[%s3 + $0x28] sm:$0xf]
    %v642 = vld [vmem:[%s3 + $0x2c] sm:$0xf]
    %v643 = vld [vmem:[%s3 + $0x30] sm:$0xf]
    %v644 = vld [vmem:[%s3 + $0x34] sm:$0xf]
    %v645 = vld [vmem:[%s3 + $0x38] sm:$0xf]
    %v646 = vld [vmem:[%s3 + $0x3c] sm:$0xf]
    %v647 = vld [vmem:[%s3 + $0x40] sm:$0xf]
    %v648 = vld [vmem:[%s3 + $0x44] sm:$0xf]
    %v649 = vld [vmem:[%s3 + $0x48] sm:$0xf]
    %v650 = vld [vmem:[%s3 + $0x4c] sm:$0xf]
    %v651 = vld [vmem:[%s3 + $0x50] sm:$0xf]
    %v652 = vld [vmem:[%s3 + $0x54] sm:$0xf]
    %v653 = vld [vmem:[%s3 + $0x58] sm:$0xf]
    %v654 = vld [vmem:[%s3 + $0x5c] sm:$0xf]
    %v655 = vld [vmem:[%s3 + $0x60] sm:$0xf]
    %v656 = vld [vmem:[%s3 + $0x64] sm:$0xf]
    %v657 = vld [vmem:[%s3 + $0x68] sm:$0xf]
    %v658 = vld [vmem:[%s3 + $0x6c] sm:$0xf]
    %v659 = vld [vmem:[%s3 + $0x70] sm:$0xf]
    %v660 = vld [vmem:[%s3 + $0x74] sm:$0xf]
    %v661 = vld [vmem:[%s3 + $0x78] sm:$0xf]
    %v662 = vld [vmem:[%s3 + $0x7c] sm:$0xf]
    %s663 = scalar_lea.vmem %s3, 128
    %v664 = vld [vmem:[%s663] sm:$0xf]
    %v665 = vld [vmem:[%s663 + $0x4] sm:$0xf]
    %v666 = vld [vmem:[%s663 + $0x8] sm:$0xf]
    %v667 = vld [vmem:[%s663 + $0xc] sm:$0xf]
    %v668 = vld [vmem:[%s663 + $0x10] sm:$0xf]
    %v669 = vld [vmem:[%s663 + $0x14] sm:$0xf]
    %v670 = vld [vmem:[%s663 + $0x18] sm:$0xf]
    %v671 = vld [vmem:[%s663 + $0x1c] sm:$0xf]
    %v672 = vld [vmem:[%s663 + $0x20] sm:$0xf]
    %v673 = vld [vmem:[%s663 + $0x24] sm:$0xf]
    %v674 = vld [vmem:[%s663 + $0x28] sm:$0xf]
    %v675 = vld [vmem:[%s663 + $0x2c] sm:$0xf]
    %v676 = vld [vmem:[%s663 + $0x30] sm:$0xf]
    %v677 = vld [vmem:[%s663 + $0x34] sm:$0xf]
    %v678 = vld [vmem:[%s663 + $0x38] sm:$0xf]
    %v679 = vld [vmem:[%s663 + $0x3c] sm:$0xf]
    %v680 = vld [vmem:[%s663 + $0x40] sm:$0xf]
    %v681 = vld [vmem:[%s663 + $0x44] sm:$0xf]
    %v682 = vld [vmem:[%s663 + $0x48] sm:$0xf]
    %v683 = vld [vmem:[%s663 + $0x4c] sm:$0xf]
    %v684 = vld [vmem:[%s663 + $0x50] sm:$0xf]
    %v685 = vld [vmem:[%s663 + $0x54] sm:$0xf]
    %v686 = vld [vmem:[%s663 + $0x58] sm:$0xf]
    %v687 = vld [vmem:[%s663 + $0x5c] sm:$0xf]
    %v688 = vld [vmem:[%s663 + $0x60] sm:$0xf]
    %v689 = vld [vmem:[%s663 + $0x64] sm:$0xf]
    %v690 = vld [vmem:[%s663 + $0x68] sm:$0xf]
    %v691 = vld [vmem:[%s663 + $0x6c] sm:$0xf]
    %v692 = vld [vmem:[%s663 + $0x70] sm:$0xf]
    %v693 = vld [vmem:[%s663 + $0x74] sm:$0xf]
    %v694 = vld [vmem:[%s663 + $0x78] sm:$0xf]
    %v695 = vld [vmem:[%s663 + $0x7c] sm:$0xf]
    %v700 = vunpack.c.l.b16 %v627
    %v701 = vunpack.c.l.b16 %v628
    %v702 = vunpack.c.l.b16 %v629
    %v703 = vunpack.c.l.b16 %v630
    %v704 = vrot.slane %v700, 1
    %vm705 = vcmask 1041409
    %v706 = vsel %vm705, %v702, %v704
    %v707 = vrot.slane %v701, 1
    %v708 = vsel %vm705, %v703, %v707
    %v709 = vpack.c.b16 %v706, %v706
    %v710 = vpack.c.b16 %v708, %v708
    %v745 = vunpack.c.l.b16 %v664
    %v746 = vunpack.c.l.b16 %v665
    %v747 = vunpack.c.l.b16 %v666
    %v748 = vunpack.c.l.b16 %v667
    %v749 = vunpack.c.l.b16 %v668
    %v750 = vunpack.c.l.b16 %v669
    %v751 = vunpack.c.l.b16 %v670
    %v752 = vunpack.c.l.b16 %v671
    %v753 = vunpack.c.l.b16 %v672
    %v754 = vunpack.c.l.b16 %v673
    %v755 = vunpack.c.l.b16 %v674
    %v756 = vunpack.c.l.b16 %v675
    %v757 = vunpack.c.l.b16 %v676
    %v758 = vunpack.c.l.b16 %v677
    %v759 = vunpack.c.l.b16 %v678
    %v760 = vunpack.c.l.b16 %v679
    %v761 = vunpack.c.l.b16 %v680
    %v762 = vunpack.c.l.b16 %v681
    %v763 = vunpack.c.l.b16 %v682
    %v764 = vunpack.c.l.b16 %v683
    %v765 = vunpack.c.l.b16 %v684
    %v766 = vunpack.c.l.b16 %v685
    %v767 = vunpack.c.l.b16 %v686
    %v768 = vunpack.c.l.b16 %v687
    %v769 = vunpack.c.l.b16 %v688
    %v770 = vunpack.c.l.b16 %v689
    %v771 = vunpack.c.l.b16 %v690
    %v772 = vunpack.c.l.b16 %v691
    %v773 = vunpack.c.l.b16 %v692
    %v774 = vunpack.c.l.b16 %v693
    %v775 = vunpack.c.l.b16 %v694
    %v776 = vunpack.c.l.b16 %v695
    %v777 = vpack.c.b16 %v746, %v745
    %v778 = vpack.c.b16 %v748, %v747
    %v779 = vpack.c.b16 %v750, %v749
    %v780 = vpack.c.b16 %v752, %v751
    %v781 = vpack.c.b16 %v754, %v753
    %v782 = vpack.c.b16 %v756, %v755
    %v783 = vpack.c.b16 %v758, %v757
    %v784 = vpack.c.b16 %v760, %v759
    %v785 = vpack.c.b16 %v762, %v761
    %v786 = vpack.c.b16 %v764, %v763
    %v787 = vpack.c.b16 %v766, %v765
    %v788 = vpack.c.b16 %v768, %v767
    %v789 = vpack.c.b16 %v770, %v769
    %v790 = vpack.c.b16 %v772, %v771
    %v791 = vpack.c.b16 %v774, %v773
    %v792 = vpack.c.b16 %v776, %v775
    %809 = vmatprep.subr.bf16.mxu0 0
    %810 = vmatpush1.bf16.msra.mxu0 %v777
    %811 = vmatprep.subr.bf16.mxu0 0
    %812 = vmatpush1.bf16.msra.mxu0 %v778
    %813 = vmatprep.subr.bf16.mxu0 0
    %814 = vmatpush1.bf16.msra.mxu0 %v779
    %815 = vmatprep.subr.bf16.mxu0 0
    %816 = vmatpush1.bf16.msra.mxu0 %v780
    %817 = vmatprep.subr.bf16.mxu0 0
    %818 = vmatpush1.bf16.msra.mxu0 %v781
    %819 = vmatprep.subr.bf16.mxu0 0
    %820 = vmatpush1.bf16.msra.mxu0 %v782
    %821 = vmatprep.subr.bf16.mxu0 0
    %822 = vmatpush1.bf16.msra.mxu0 %v783
    %823 = vmatprep.subr.bf16.mxu0 0
    %824 = vmatpush1.bf16.msra.mxu0 %v784
    %825 = vmatprep.subr.bf16.mxu0 0
    %826 = vmatpush1.bf16.msra.mxu0 %v785
    %827 = vmatprep.subr.bf16.mxu0 0
    %828 = vmatpush1.bf16.msra.mxu0 %v786
    %829 = vmatprep.subr.bf16.mxu0 0
    %830 = vmatpush1.bf16.msra.mxu0 %v787
    %831 = vmatprep.subr.bf16.mxu0 0
    %832 = vmatpush1.bf16.msra.mxu0 %v788
    %833 = vmatprep.subr.bf16.mxu0 0
    %834 = vmatpush1.bf16.msra.mxu0 %v789
    %835 = vmatprep.subr.bf16.mxu0 0
    %836 = vmatpush1.bf16.msra.mxu0 %v790
    %837 = vmatprep.subr.bf16.mxu0 0
    %838 = vmatpush1.bf16.msra.mxu0 %v791
    %839 = vmatprep.subr.bf16.mxu0 0
    %840 = vmatpush1.bf16.msra.mxu0 %v792
    %841 = vmatprep.mubr.bf16.mxu0 %v710
    %842 = vmatmul.mubr.bf16.gmra.mrb[0].mxu0 %v709
    %v843 = vpop.f32.mrb[0].mxu0
    %v844 = vadd.f32 0.0, %v843
    %v845 = vpop.f32.mrb[0].mxu0
    %v846 = vpop.f32.mrb[0].mxu0
    %v847 = vpop.f32.mrb[0].mxu0
    %848 = vdwg.mxu0
    %v849 = vrot.slane %v702, 7
    %v850 = vsel %vm705, %v849, %v700
    %v851 = vrot.slane %v703, 7
    %v852 = vsel %vm705, %v851, %v701
    %v853 = vpack.c.b16 %v850, %v850
    %v854 = vpack.c.b16 %v852, %v852
    %v889 = vunpack.c.l.b16 %v631
    %v890 = vunpack.c.l.b16 %v632
    %v891 = vunpack.c.l.b16 %v633
    %v892 = vunpack.c.l.b16 %v634
    %v893 = vunpack.c.l.b16 %v635
    %v894 = vunpack.c.l.b16 %v636
    %v895 = vunpack.c.l.b16 %v637
    %v896 = vunpack.c.l.b16 %v638
    %v897 = vunpack.c.l.b16 %v639
    %v898 = vunpack.c.l.b16 %v640
    %v899 = vunpack.c.l.b16 %v641
    %v900 = vunpack.c.l.b16 %v642
    %v901 = vunpack.c.l.b16 %v643
    %v902 = vunpack.c.l.b16 %v644
    %v903 = vunpack.c.l.b16 %v645
    %v904 = vunpack.c.l.b16 %v646
    %v905 = vunpack.c.l.b16 %v647
    %v906 = vunpack.c.l.b16 %v648
    %v907 = vunpack.c.l.b16 %v649
    %v908 = vunpack.c.l.b16 %v650
    %v909 = vunpack.c.l.b16 %v651
    %v910 = vunpack.c.l.b16 %v652
    %v911 = vunpack.c.l.b16 %v653
    %v912 = vunpack.c.l.b16 %v654
    %v913 = vunpack.c.l.b16 %v655
    %v914 = vunpack.c.l.b16 %v656
    %v915 = vunpack.c.l.b16 %v657
    %v916 = vunpack.c.l.b16 %v658
    %v917 = vunpack.c.l.b16 %v659
    %v918 = vunpack.c.l.b16 %v660
    %v919 = vunpack.c.l.b16 %v661
    %v920 = vunpack.c.l.b16 %v662
    %v921 = vpack.c.b16 %v890, %v889
    %v922 = vpack.c.b16 %v892, %v891
    %v923 = vpack.c.b16 %v894, %v893
    %v924 = vpack.c.b16 %v896, %v895
    %v925 = vpack.c.b16 %v898, %v897
    %v926 = vpack.c.b16 %v900, %v899
    %v927 = vpack.c.b16 %v902, %v901
    %v928 = vpack.c.b16 %v904, %v903
    %v929 = vpack.c.b16 %v906, %v905
    %v930 = vpack.c.b16 %v908, %v907
    %v931 = vpack.c.b16 %v910, %v909
    %v932 = vpack.c.b16 %v912, %v911
    %v933 = vpack.c.b16 %v914, %v913
    %v934 = vpack.c.b16 %v916, %v915
    %v935 = vpack.c.b16 %v918, %v917
    %v936 = vpack.c.b16 %v920, %v919
    %953 = vmatprep.subr.bf16.mxu0 0
    %954 = vmatpush1.bf16.msra.mxu0 %v921
    %955 = vmatprep.subr.bf16.mxu0 0
    %956 = vmatpush1.bf16.msra.mxu0 %v922
    %957 = vmatprep.subr.bf16.mxu0 0
    %958 = vmatpush1.bf16.msra.mxu0 %v923
    %959 = vmatprep.subr.bf16.mxu0 0
    %960 = vmatpush1.bf16.msra.mxu0 %v924
    %961 = vmatprep.subr.bf16.mxu0 0
    %962 = vmatpush1.bf16.msra.mxu0 %v925
    %963 = vmatprep.subr.bf16.mxu0 0
    %964 = vmatpush1.bf16.msra.mxu0 %v926
    %965 = vmatprep.subr.bf16.mxu0 0
    %966 = vmatpush1.bf16.msra.mxu0 %v927
    %967 = vmatprep.subr.bf16.mxu0 0
    %968 = vmatpush1.bf16.msra.mxu0 %v928
    %969 = vmatprep.subr.bf16.mxu0 0
    %970 = vmatpush1.bf16.msra.mxu0 %v929
    %971 = vmatprep.subr.bf16.mxu0 0
    %972 = vmatpush1.bf16.msra.mxu0 %v930
    %973 = vmatprep.subr.bf16.mxu0 0
    %974 = vmatpush1.bf16.msra.mxu0 %v931
    %975 = vmatprep.subr.bf16.mxu0 0
    %976 = vmatpush1.bf16.msra.mxu0 %v932
    %977 = vmatprep.subr.bf16.mxu0 0
    %978 = vmatpush1.bf16.msra.mxu0 %v933
    %979 = vmatprep.subr.bf16.mxu0 0
    %980 = vmatpush1.bf16.msra.mxu0 %v934
    %981 = vmatprep.subr.bf16.mxu0 0
    %982 = vmatpush1.bf16.msra.mxu0 %v935
    %983 = vmatprep.subr.bf16.mxu0 0
    %984 = vmatpush1.bf16.msra.mxu0 %v936
    %985 = vmatprep.mubr.bf16.mxu0 %v854
    %986 = vmatmul.mubr.bf16.gmra.mrb[0].mxu0 %v853
    %v987 = vpop.f32.mrb[0].mxu0
    %v988 = vadd.f32 %v844, %v987
    %v989 = vpop.f32.mrb[0].mxu0
    %v990 = vpop.f32.mrb[0].mxu0
    %v991 = vpop.f32.mrb[0].mxu0
    %992 = vdwg.mxu0
    %s993 = scalar_lea.vmem %s3, 256
    %v994 = vld [vmem:[%s993] sm:$0xf]
    %v995 = vld [vmem:[%s993 + $0x4] sm:$0xf]
    %v996 = vld [vmem:[%s993 + $0x8] sm:$0xf]
    %v997 = vld [vmem:[%s993 + $0xc] sm:$0xf]
    %v998 = vld [vmem:[%s993 + $0x10] sm:$0xf]
    %v999 = vld [vmem:[%s993 + $0x14] sm:$0xf]
    %v1000 = vld [vmem:[%s993 + $0x18] sm:$0xf]
    %v1001 = vld [vmem:[%s993 + $0x1c] sm:$0xf]
    %v1002 = vld [vmem:[%s993 + $0x20] sm:$0xf]
    %v1003 = vld [vmem:[%s993 + $0x24] sm:$0xf]
    %v1004 = vld [vmem:[%s993 + $0x28] sm:$0xf]
    %v1005 = vld [vmem:[%s993 + $0x2c] sm:$0xf]
    %v1006 = vld [vmem:[%s993 + $0x30] sm:$0xf]
    %v1007 = vld [vmem:[%s993 + $0x34] sm:$0xf]
    %v1008 = vld [vmem:[%s993 + $0x38] sm:$0xf]
    %v1009 = vld [vmem:[%s993 + $0x3c] sm:$0xf]
    %v1010 = vld [vmem:[%s993 + $0x40] sm:$0xf]
    %v1011 = vld [vmem:[%s993 + $0x44] sm:$0xf]
    %v1012 = vld [vmem:[%s993 + $0x48] sm:$0xf]
    %v1013 = vld [vmem:[%s993 + $0x4c] sm:$0xf]
    %v1014 = vld [vmem:[%s993 + $0x50] sm:$0xf]
    %v1015 = vld [vmem:[%s993 + $0x54] sm:$0xf]
    %v1016 = vld [vmem:[%s993 + $0x58] sm:$0xf]
    %v1017 = vld [vmem:[%s993 + $0x5c] sm:$0xf]
    %v1018 = vld [vmem:[%s993 + $0x60] sm:$0xf]
    %v1019 = vld [vmem:[%s993 + $0x64] sm:$0xf]
    %v1020 = vld [vmem:[%s993 + $0x68] sm:$0xf]
    %v1021 = vld [vmem:[%s993 + $0x6c] sm:$0xf]
    %v1022 = vld [vmem:[%s993 + $0x70] sm:$0xf]
    %v1023 = vld [vmem:[%s993 + $0x74] sm:$0xf]
    %v1024 = vld [vmem:[%s993 + $0x78] sm:$0xf]
    %v1025 = vld [vmem:[%s993 + $0x7c] sm:$0xf]
    %v1026 = vrot.slane %v700, 2
    %v1027 = vrot.slane %v702, 1
    %v1028 = vsel %vm705, %v1027, %v1026
    %v1029 = vrot.slane %v701, 2
    %v1030 = vrot.slane %v703, 1
    %v1031 = vsel %vm705, %v1030, %v1029
    %v1032 = vpack.c.b16 %v1028, %v1028
    %v1033 = vpack.c.b16 %v1031, %v1031
    %v1068 = vunpack.c.l.b16 %v994
    %v1069 = vunpack.c.l.b16 %v995
    %v1070 = vunpack.c.l.b16 %v996
    %v1071 = vunpack.c.l.b16 %v997
    %v1072 = vunpack.c.l.b16 %v998
    %v1073 = vunpack.c.l.b16 %v999
    %v1074 = vunpack.c.l.b16 %v1000
    %v1075 = vunpack.c.l.b16 %v1001
    %v1076 = vunpack.c.l.b16 %v1002
    %v1077 = vunpack.c.l.b16 %v1003
    %v1078 = vunpack.c.l.b16 %v1004
    %v1079 = vunpack.c.l.b16 %v1005
    %v1080 = vunpack.c.l.b16 %v1006
    %v1081 = vunpack.c.l.b16 %v1007
    %v1082 = vunpack.c.l.b16 %v1008
    %v1083 = vunpack.c.l.b16 %v1009
    %v1084 = vunpack.c.l.b16 %v1010
    %v1085 = vunpack.c.l.b16 %v1011
    %v1086 = vunpack.c.l.b16 %v1012
    %v1087 = vunpack.c.l.b16 %v1013
    %v1088 = vunpack.c.l.b16 %v1014
    %v1089 = vunpack.c.l.b16 %v1015
    %v1090 = vunpack.c.l.b16 %v1016
    %v1091 = vunpack.c.l.b16 %v1017
    %v1092 = vunpack.c.l.b16 %v1018
    %v1093 = vunpack.c.l.b16 %v1019
    %v1094 = vunpack.c.l.b16 %v1020
    %v1095 = vunpack.c.l.b16 %v1021
    %v1096 = vunpack.c.l.b16 %v1022
    %v1097 = vunpack.c.l.b16 %v1023
    %v1098 = vunpack.c.l.b16 %v1024
    %v1099 = vunpack.c.l.b16 %v1025
    %v1100 = vpack.c.b16 %v1069, %v1068
    %v1101 = vpack.c.b16 %v1071, %v1070
    %v1102 = vpack.c.b16 %v1073, %v1072
    %v1103 = vpack.c.b16 %v1075, %v1074
    %v1104 = vpack.c.b16 %v1077, %v1076
    %v1105 = vpack.c.b16 %v1079, %v1078
    %v1106 = vpack.c.b16 %v1081, %v1080
    %v1107 = vpack.c.b16 %v1083, %v1082
    %v1108 = vpack.c.b16 %v1085, %v1084
    %v1109 = vpack.c.b16 %v1087, %v1086
    %v1110 = vpack.c.b16 %v1089, %v1088
    %v1111 = vpack.c.b16 %v1091, %v1090
    %v1112 = vpack.c.b16 %v1093, %v1092
    %v1113 = vpack.c.b16 %v1095, %v1094
    %v1114 = vpack.c.b16 %v1097, %v1096
    %v1115 = vpack.c.b16 %v1099, %v1098
    %1132 = vmatprep.subr.bf16.mxu0 0
    %1133 = vmatpush1.bf16.msra.mxu0 %v1100
    %1134 = vmatprep.subr.bf16.mxu0 0
    %1135 = vmatpush1.bf16.msra.mxu0 %v1101
    %1136 = vmatprep.subr.bf16.mxu0 0
    %1137 = vmatpush1.bf16.msra.mxu0 %v1102
    %1138 = vmatprep.subr.bf16.mxu0 0
    %1139 = vmatpush1.bf16.msra.mxu0 %v1103
    %1140 = vmatprep.subr.bf16.mxu0 0
    %1141 = vmatpush1.bf16.msra.mxu0 %v1104
    %1142 = vmatprep.subr.bf16.mxu0 0
    %1143 = vmatpush1.bf16.msra.mxu0 %v1105
    %1144 = vmatprep.subr.bf16.mxu0 0
    %1145 = vmatpush1.bf16.msra.mxu0 %v1106
    %1146 = vmatprep.subr.bf16.mxu0 0
    %1147 = vmatpush1.bf16.msra.mxu0 %v1107
    %1148 = vmatprep.subr.bf16.mxu0 0
    %1149 = vmatpush1.bf16.msra.mxu0 %v1108
    %1150 = vmatprep.subr.bf16.mxu0 0
    %1151 = vmatpush1.bf16.msra.mxu0 %v1109
    %1152 = vmatprep.subr.bf16.mxu0 0
    %1153 = vmatpush1.bf16.msra.mxu0 %v1110
    %1154 = vmatprep.subr.bf16.mxu0 0
    %1155 = vmatpush1.bf16.msra.mxu0 %v1111
    %1156 = vmatprep.subr.bf16.mxu0 0
    %1157 = vmatpush1.bf16.msra.mxu0 %v1112
    %1158 = vmatprep.subr.bf16.mxu0 0
    %1159 = vmatpush1.bf16.msra.mxu0 %v1113
    %1160 = vmatprep.subr.bf16.mxu0 0
    %1161 = vmatpush1.bf16.msra.mxu0 %v1114
    %1162 = vmatprep.subr.bf16.mxu0 0
    %1163 = vmatpush1.bf16.msra.mxu0 %v1115
    %1164 = vmatprep.mubr.bf16.mxu0 %v1033
    %1165 = vmatmul.mubr.bf16.gmra.mrb[0].mxu0 %v1032
    %v1166 = vpop.f32.mrb[0].mxu0
    %v1167 = vadd.f32 0.0, %v1166
    %v1168 = vpop.f32.mrb[0].mxu0
    %v1169 = vpop.f32.mrb[0].mxu0
    %v1170 = vpop.f32.mrb[0].mxu0
    %1171 = vdwg.mxu0
    %v1172 = vadd.f32 %v988, %v1167
    %s1173 = scalar_lea.vmem %s3, 384
    %v1174 = vld [vmem:[%s1173] sm:$0xf]
    %v1175 = vld [vmem:[%s1173 + $0x4] sm:$0xf]
    %v1176 = vld [vmem:[%s1173 + $0x8] sm:$0xf]
    %v1177 = vld [vmem:[%s1173 + $0xc] sm:$0xf]
    %v1178 = vld [vmem:[%s1173 + $0x10] sm:$0xf]
    %v1179 = vld [vmem:[%s1173 + $0x14] sm:$0xf]
    %v1180 = vld [vmem:[%s1173 + $0x18] sm:$0xf]
    %v1181 = vld [vmem:[%s1173 + $0x1c] sm:$0xf]
    %v1182 = vld [vmem:[%s1173 + $0x20] sm:$0xf]
    %v1183 = vld [vmem:[%s1173 + $0x24] sm:$0xf]
    %v1184 = vld [vmem:[%s1173 + $0x28] sm:$0xf]
    %v1185 = vld [vmem:[%s1173 + $0x2c] sm:$0xf]
    %v1186 = vld [vmem:[%s1173 + $0x30] sm:$0xf]
    %v1187 = vld [vmem:[%s1173 + $0x34] sm:$0xf]
    %v1188 = vld [vmem:[%s1173 + $0x38] sm:$0xf]
    %v1189 = vld [vmem:[%s1173 + $0x3c] sm:$0xf]
    %v1190 = vld [vmem:[%s1173 + $0x40] sm:$0xf]
    %v1191 = vld [vmem:[%s1173 + $0x44] sm:$0xf]
    %v1192 = vld [vmem:[%s1173 + $0x48] sm:$0xf]
    %v1193 = vld [vmem:[%s1173 + $0x4c] sm:$0xf]
    %v1194 = vld [vmem:[%s1173 + $0x50] sm:$0xf]
    %v1195 = vld [vmem:[%s1173 + $0x54] sm:$0xf]
    %v1196 = vld [vmem:[%s1173 + $0x58] sm:$0xf]
    %v1197 = vld [vmem:[%s1173 + $0x5c] sm:$0xf]
    %v1198 = vld [vmem:[%s1173 + $0x60] sm:$0xf]
    %v1199 = vld [vmem:[%s1173 + $0x64] sm:$0xf]
    %v1200 = vld [vmem:[%s1173 + $0x68] sm:$0xf]
    %v1201 = vld [vmem:[%s1173 + $0x6c] sm:$0xf]
    %v1202 = vld [vmem:[%s1173 + $0x70] sm:$0xf]
    %v1203 = vld [vmem:[%s1173 + $0x74] sm:$0xf]
    %v1204 = vld [vmem:[%s1173 + $0x78] sm:$0xf]
    %v1205 = vld [vmem:[%s1173 + $0x7c] sm:$0xf]
    %v1206 = vrot.slane %v700, 3
    %v1207 = vrot.slane %v702, 2
    %v1208 = vsel %vm705, %v1207, %v1206
    %v1209 = vrot.slane %v701, 3
    %v1210 = vrot.slane %v703, 2
    %v1211 = vsel %vm705, %v1210, %v1209
    %v1212 = vpack.c.b16 %v1208, %v1208
    %v1213 = vpack.c.b16 %v1211, %v1211
    %v1248 = vunpack.c.l.b16 %v1174
    %v1249 = vunpack.c.l.b16 %v1175
    %v1250 = vunpack.c.l.b16 %v1176
    %v1251 = vunpack.c.l.b16 %v1177
    %v1252 = vunpack.c.l.b16 %v1178
    %v1253 = vunpack.c.l.b16 %v1179
    %v1254 = vunpack.c.l.b16 %v1180
    %v1255 = vunpack.c.l.b16 %v1181
    %v1256 = vunpack.c.l.b16 %v1182
    %v1257 = vunpack.c.l.b16 %v1183
    %v1258 = vunpack.c.l.b16 %v1184
    %v1259 = vunpack.c.l.b16 %v1185
    %v1260 = vunpack.c.l.b16 %v1186
    %v1261 = vunpack.c.l.b16 %v1187
    %v1262 = vunpack.c.l.b16 %v1188
    %v1263 = vunpack.c.l.b16 %v1189
    %v1264 = vunpack.c.l.b16 %v1190
    %v1265 = vunpack.c.l.b16 %v1191
    %v1266 = vunpack.c.l.b16 %v1192
    %v1267 = vunpack.c.l.b16 %v1193
    %v1268 = vunpack.c.l.b16 %v1194
    %v1269 = vunpack.c.l.b16 %v1195
    %v1270 = vunpack.c.l.b16 %v1196
    %v1271 = vunpack.c.l.b16 %v1197
    %v1272 = vunpack.c.l.b16 %v1198
    %v1273 = vunpack.c.l.b16 %v1199
    %v1274 = vunpack.c.l.b16 %v1200
    %v1275 = vunpack.c.l.b16 %v1201
    %v1276 = vunpack.c.l.b16 %v1202
    %v1277 = vunpack.c.l.b16 %v1203
    %v1278 = vunpack.c.l.b16 %v1204
    %v1279 = vunpack.c.l.b16 %v1205
    %v1280 = vpack.c.b16 %v1249, %v1248
    %v1281 = vpack.c.b16 %v1251, %v1250
    %v1282 = vpack.c.b16 %v1253, %v1252
    %v1283 = vpack.c.b16 %v1255, %v1254
    %v1284 = vpack.c.b16 %v1257, %v1256
    %v1285 = vpack.c.b16 %v1259, %v1258
    %v1286 = vpack.c.b16 %v1261, %v1260
    %v1287 = vpack.c.b16 %v1263, %v1262
    %v1288 = vpack.c.b16 %v1265, %v1264
    %v1289 = vpack.c.b16 %v1267, %v1266
    %v1290 = vpack.c.b16 %v1269, %v1268
    %v1291 = vpack.c.b16 %v1271, %v1270
    %v1292 = vpack.c.b16 %v1273, %v1272
    %v1293 = vpack.c.b16 %v1275, %v1274
    %v1294 = vpack.c.b16 %v1277, %v1276
    %v1295 = vpack.c.b16 %v1279, %v1278
    %1312 = vmatprep.subr.bf16.mxu0 0
    %1313 = vmatpush1.bf16.msra.mxu0 %v1280
    %1314 = vmatprep.subr.bf16.mxu0 0
    %1315 = vmatpush1.bf16.msra.mxu0 %v1281
    %1316 = vmatprep.subr.bf16.mxu0 0
    %1317 = vmatpush1.bf16.msra.mxu0 %v1282
    %1318 = vmatprep.subr.bf16.mxu0 0
    %1319 = vmatpush1.bf16.msra.mxu0 %v1283
    %1320 = vmatprep.subr.bf16.mxu0 0
    %1321 = vmatpush1.bf16.msra.mxu0 %v1284
    %1322 = vmatprep.subr.bf16.mxu0 0
    %1323 = vmatpush1.bf16.msra.mxu0 %v1285
    %1324 = vmatprep.subr.bf16.mxu0 0
    %1325 = vmatpush1.bf16.msra.mxu0 %v1286
    %1326 = vmatprep.subr.bf16.mxu0 0
    %1327 = vmatpush1.bf16.msra.mxu0 %v1287
    %1328 = vmatprep.subr.bf16.mxu0 0
    %1329 = vmatpush1.bf16.msra.mxu0 %v1288
    %1330 = vmatprep.subr.bf16.mxu0 0
    %1331 = vmatpush1.bf16.msra.mxu0 %v1289
    %1332 = vmatprep.subr.bf16.mxu0 0
    %1333 = vmatpush1.bf16.msra.mxu0 %v1290
    %1334 = vmatprep.subr.bf16.mxu0 0
    %1335 = vmatpush1.bf16.msra.mxu0 %v1291
    %1336 = vmatprep.subr.bf16.mxu0 0
    %1337 = vmatpush1.bf16.msra.mxu0 %v1292
    %1338 = vmatprep.subr.bf16.mxu0 0
    %1339 = vmatpush1.bf16.msra.mxu0 %v1293
    %1340 = vmatprep.subr.bf16.mxu0 0
    %1341 = vmatpush1.bf16.msra.mxu0 %v1294
    %1342 = vmatprep.subr.bf16.mxu0 0
    %1343 = vmatpush1.bf16.msra.mxu0 %v1295
    %1344 = vmatprep.mubr.bf16.mxu0 %v1213
    %1345 = vmatmul.mubr.bf16.gmra.mrb[0].mxu0 %v1212
    %v1346 = vpop.f32.mrb[0].mxu0
    %v1347 = vadd.f32 0.0, %v1346
    %v1348 = vpop.f32.mrb[0].mxu0
    %v1349 = vpop.f32.mrb[0].mxu0
    %v1350 = vpop.f32.mrb[0].mxu0
    %1351 = vdwg.mxu0
    %v1352 = vadd.f32 %v1172, %v1347
    %s1353 = scalar_lea.vmem %s3, 512
    %v1354 = vld [vmem:[%s1353] sm:$0xf]
    %v1355 = vld [vmem:[%s1353 + $0x4] sm:$0xf]
    %v1356 = vld [vmem:[%s1353 + $0x8] sm:$0xf]
    %v1357 = vld [vmem:[%s1353 + $0xc] sm:$0xf]
    %v1358 = vld [vmem:[%s1353 + $0x10] sm:$0xf]
    %v1359 = vld [vmem:[%s1353 + $0x14] sm:$0xf]
    %v1360 = vld [vmem:[%s1353 + $0x18] sm:$0xf]
    %v1361 = vld [vmem:[%s1353 + $0x1c] sm:$0xf]
    %v1362 = vld [vmem:[%s1353 + $0x20] sm:$0xf]
    %v1363 = vld [vmem:[%s1353 + $0x24] sm:$0xf]
    %v1364 = vld [vmem:[%s1353 + $0x28] sm:$0xf]
    %v1365 = vld [vmem:[%s1353 + $0x2c] sm:$0xf]
    %v1366 = vld [vmem:[%s1353 + $0x30] sm:$0xf]
    %v1367 = vld [vmem:[%s1353 + $0x34] sm:$0xf]
    %v1368 = vld [vmem:[%s1353 + $0x38] sm:$0xf]
    %v1369 = vld [vmem:[%s1353 + $0x3c] sm:$0xf]
    %v1370 = vld [vmem:[%s1353 + $0x40] sm:$0xf]
    %v1371 = vld [vmem:[%s1353 + $0x44] sm:$0xf]
    %v1372 = vld [vmem:[%s1353 + $0x48] sm:$0xf]
    %v1373 = vld [vmem:[%s1353 + $0x4c] sm:$0xf]
    %v1374 = vld [vmem:[%s1353 + $0x50] sm:$0xf]
    %v1375 = vld [vmem:[%s1353 + $0x54] sm:$0xf]
    %v1376 = vld [vmem:[%s1353 + $0x58] sm:$0xf]
    %v1377 = vld [vmem:[%s1353 + $0x5c] sm:$0xf]
    %v1378 = vld [vmem:[%s1353 + $0x60] sm:$0xf]
    %v1379 = vld [vmem:[%s1353 + $0x64] sm:$0xf]
    %v1380 = vld [vmem:[%s1353 + $0x68] sm:$0xf]
    %v1381 = vld [vmem:[%s1353 + $0x6c] sm:$0xf]
    %v1382 = vld [vmem:[%s1353 + $0x70] sm:$0xf]
    %v1383 = vld [vmem:[%s1353 + $0x74] sm:$0xf]
    %v1384 = vld [vmem:[%s1353 + $0x78] sm:$0xf]
    %v1385 = vld [vmem:[%s1353 + $0x7c] sm:$0xf]
    %v1386 = vrot.slane %v700, 4
    %v1387 = vrot.slane %v702, 3
    %v1388 = vsel %vm705, %v1387, %v1386
    %v1389 = vrot.slane %v701, 4
    %v1390 = vrot.slane %v703, 3
    %v1391 = vsel %vm705, %v1390, %v1389
    %v1392 = vpack.c.b16 %v1388, %v1388
    %v1393 = vpack.c.b16 %v1391, %v1391
    %v1428 = vunpack.c.l.b16 %v1354
    %v1429 = vunpack.c.l.b16 %v1355
    %v1430 = vunpack.c.l.b16 %v1356
    %v1431 = vunpack.c.l.b16 %v1357
    %v1432 = vunpack.c.l.b16 %v1358
    %v1433 = vunpack.c.l.b16 %v1359
    %v1434 = vunpack.c.l.b16 %v1360
    %v1435 = vunpack.c.l.b16 %v1361
    %v1436 = vunpack.c.l.b16 %v1362
    %v1437 = vunpack.c.l.b16 %v1363
    %v1438 = vunpack.c.l.b16 %v1364
    %v1439 = vunpack.c.l.b16 %v1365
    %v1440 = vunpack.c.l.b16 %v1366
    %v1441 = vunpack.c.l.b16 %v1367
    %v1442 = vunpack.c.l.b16 %v1368
    %v1443 = vunpack.c.l.b16 %v1369
    %v1444 = vunpack.c.l.b16 %v1370
    %v1445 = vunpack.c.l.b16 %v1371
    %v1446 = vunpack.c.l.b16 %v1372
    %v1447 = vunpack.c.l.b16 %v1373
    %v1448 = vunpack.c.l.b16 %v1374
    %v1449 = vunpack.c.l.b16 %v1375
    %v1450 = vunpack.c.l.b16 %v1376
    %v1451 = vunpack.c.l.b16 %v1377
    %v1452 = vunpack.c.l.b16 %v1378
    %v1453 = vunpack.c.l.b16 %v1379
    %v1454 = vunpack.c.l.b16 %v1380
    %v1455 = vunpack.c.l.b16 %v1381
    %v1456 = vunpack.c.l.b16 %v1382
    %v1457 = vunpack.c.l.b16 %v1383
    %v1458 = vunpack.c.l.b16 %v1384
    %v1459 = vunpack.c.l.b16 %v1385
    %v1460 = vpack.c.b16 %v1429, %v1428
    %v1461 = vpack.c.b16 %v1431, %v1430
    %v1462 = vpack.c.b16 %v1433, %v1432
    %v1463 = vpack.c.b16 %v1435, %v1434
    %v1464 = vpack.c.b16 %v1437, %v1436
    %v1465 = vpack.c.b16 %v1439, %v1438
    %v1466 = vpack.c.b16 %v1441, %v1440
    %v1467 = vpack.c.b16 %v1443, %v1442
    %v1468 = vpack.c.b16 %v1445, %v1444
    %v1469 = vpack.c.b16 %v1447, %v1446
    %v1470 = vpack.c.b16 %v1449, %v1448
    %v1471 = vpack.c.b16 %v1451, %v1450
    %v1472 = vpack.c.b16 %v1453, %v1452
    %v1473 = vpack.c.b16 %v1455, %v1454
    %v1474 = vpack.c.b16 %v1457, %v1456
    %v1475 = vpack.c.b16 %v1459, %v1458
    %1492 = vmatprep.subr.bf16.mxu0 0
    %1493 = vmatpush1.bf16.msra.mxu0 %v1460
    %1494 = vmatprep.subr.bf16.mxu0 0
    %1495 = vmatpush1.bf16.msra.mxu0 %v1461
    %1496 = vmatprep.subr.bf16.mxu0 0
    %1497 = vmatpush1.bf16.msra.mxu0 %v1462
    %1498 = vmatprep.subr.bf16.mxu0 0
    %1499 = vmatpush1.bf16.msra.mxu0 %v1463
    %1500 = vmatprep.subr.bf16.mxu0 0
    %1501 = vmatpush1.bf16.msra.mxu0 %v1464
    %1502 = vmatprep.subr.bf16.mxu0 0
    %1503 = vmatpush1.bf16.msra.mxu0 %v1465
    %1504 = vmatprep.subr.bf16.mxu0 0
    %1505 = vmatpush1.bf16.msra.mxu0 %v1466
    %1506 = vmatprep.subr.bf16.mxu0 0
    %1507 = vmatpush1.bf16.msra.mxu0 %v1467
    %1508 = vmatprep.subr.bf16.mxu0 0
    %1509 = vmatpush1.bf16.msra.mxu0 %v1468
    %1510 = vmatprep.subr.bf16.mxu0 0
    %1511 = vmatpush1.bf16.msra.mxu0 %v1469
    %1512 = vmatprep.subr.bf16.mxu0 0
    %1513 = vmatpush1.bf16.msra.mxu0 %v1470
    %1514 = vmatprep.subr.bf16.mxu0 0
    %1515 = vmatpush1.bf16.msra.mxu0 %v1471
    %1516 = vmatprep.subr.bf16.mxu0 0
    %1517 = vmatpush1.bf16.msra.mxu0 %v1472
    %1518 = vmatprep.subr.bf16.mxu0 0
    %1519 = vmatpush1.bf16.msra.mxu0 %v1473
    %1520 = vmatprep.subr.bf16.mxu0 0
    %1521 = vmatpush1.bf16.msra.mxu0 %v1474
    %1522 = vmatprep.subr.bf16.mxu0 0
    %1523 = vmatpush1.bf16.msra.mxu0 %v1475
    %1524 = vmatprep.mubr.bf16.mxu0 %v1393
    %1525 = vmatmul.mubr.bf16.gmra.mrb[0].mxu0 %v1392
    %v1526 = vpop.f32.mrb[0].mxu0
    %v1527 = vadd.f32 0.0, %v1526
    %v1528 = vpop.f32.mrb[0].mxu0
    %v1529 = vpop.f32.mrb[0].mxu0
    %v1530 = vpop.f32.mrb[0].mxu0
    %1531 = vdwg.mxu0
    %v1532 = vadd.f32 %v1352, %v1527
    %s1533 = scalar_lea.vmem %s3, 640
    %v1534 = vld [vmem:[%s1533] sm:$0xf]
    %v1535 = vld [vmem:[%s1533 + $0x4] sm:$0xf]
    %v1536 = vld [vmem:[%s1533 + $0x8] sm:$0xf]
    %v1537 = vld [vmem:[%s1533 + $0xc] sm:$0xf]
    %v1538 = vld [vmem:[%s1533 + $0x10] sm:$0xf]
    %v1539 = vld [vmem:[%s1533 + $0x14] sm:$0xf]
    %v1540 = vld [vmem:[%s1533 + $0x18] sm:$0xf]
    %v1541 = vld [vmem:[%s1533 + $0x1c] sm:$0xf]
    %v1542 = vld [vmem:[%s1533 + $0x20] sm:$0xf]
    %v1543 = vld [vmem:[%s1533 + $0x24] sm:$0xf]
    %v1544 = vld [vmem:[%s1533 + $0x28] sm:$0xf]
    %v1545 = vld [vmem:[%s1533 + $0x2c] sm:$0xf]
    %v1546 = vld [vmem:[%s1533 + $0x30] sm:$0xf]
    %v1547 = vld [vmem:[%s1533 + $0x34] sm:$0xf]
    %v1548 = vld [vmem:[%s1533 + $0x38] sm:$0xf]
    %v1549 = vld [vmem:[%s1533 + $0x3c] sm:$0xf]
    %v1550 = vld [vmem:[%s1533 + $0x40] sm:$0xf]
    %v1551 = vld [vmem:[%s1533 + $0x44] sm:$0xf]
    %v1552 = vld [vmem:[%s1533 + $0x48] sm:$0xf]
    %v1553 = vld [vmem:[%s1533 + $0x4c] sm:$0xf]
    %v1554 = vld [vmem:[%s1533 + $0x50] sm:$0xf]
    %v1555 = vld [vmem:[%s1533 + $0x54] sm:$0xf]
    %v1556 = vld [vmem:[%s1533 + $0x58] sm:$0xf]
    %v1557 = vld [vmem:[%s1533 + $0x5c] sm:$0xf]
    %v1558 = vld [vmem:[%s1533 + $0x60] sm:$0xf]
    %v1559 = vld [vmem:[%s1533 + $0x64] sm:$0xf]
    %v1560 = vld [vmem:[%s1533 + $0x68] sm:$0xf]
    %v1561 = vld [vmem:[%s1533 + $0x6c] sm:$0xf]
    %v1562 = vld [vmem:[%s1533 + $0x70] sm:$0xf]
    %v1563 = vld [vmem:[%s1533 + $0x74] sm:$0xf]
    %v1564 = vld [vmem:[%s1533 + $0x78] sm:$0xf]
    %v1565 = vld [vmem:[%s1533 + $0x7c] sm:$0xf]
    %v1566 = vrot.slane %v700, 5
    %v1567 = vrot.slane %v702, 4
    %v1568 = vsel %vm705, %v1567, %v1566
    %v1569 = vrot.slane %v701, 5
    %v1570 = vrot.slane %v703, 4
    %v1571 = vsel %vm705, %v1570, %v1569
    %v1572 = vpack.c.b16 %v1568, %v1568
    %v1573 = vpack.c.b16 %v1571, %v1571
    %v1608 = vunpack.c.l.b16 %v1534
    %v1609 = vunpack.c.l.b16 %v1535
    %v1610 = vunpack.c.l.b16 %v1536
    %v1611 = vunpack.c.l.b16 %v1537
    %v1612 = vunpack.c.l.b16 %v1538
    %v1613 = vunpack.c.l.b16 %v1539
    %v1614 = vunpack.c.l.b16 %v1540
    %v1615 = vunpack.c.l.b16 %v1541
    %v1616 = vunpack.c.l.b16 %v1542
    %v1617 = vunpack.c.l.b16 %v1543
    %v1618 = vunpack.c.l.b16 %v1544
    %v1619 = vunpack.c.l.b16 %v1545
    %v1620 = vunpack.c.l.b16 %v1546
    %v1621 = vunpack.c.l.b16 %v1547
    %v1622 = vunpack.c.l.b16 %v1548
    %v1623 = vunpack.c.l.b16 %v1549
    %v1624 = vunpack.c.l.b16 %v1550
    %v1625 = vunpack.c.l.b16 %v1551
    %v1626 = vunpack.c.l.b16 %v1552
    %v1627 = vunpack.c.l.b16 %v1553
    %v1628 = vunpack.c.l.b16 %v1554
    %v1629 = vunpack.c.l.b16 %v1555
    %v1630 = vunpack.c.l.b16 %v1556
    %v1631 = vunpack.c.l.b16 %v1557
    %v1632 = vunpack.c.l.b16 %v1558
    %v1633 = vunpack.c.l.b16 %v1559
    %v1634 = vunpack.c.l.b16 %v1560
    %v1635 = vunpack.c.l.b16 %v1561
    %v1636 = vunpack.c.l.b16 %v1562
    %v1637 = vunpack.c.l.b16 %v1563
    %v1638 = vunpack.c.l.b16 %v1564
    %v1639 = vunpack.c.l.b16 %v1565
    %v1640 = vpack.c.b16 %v1609, %v1608
    %v1641 = vpack.c.b16 %v1611, %v1610
    %v1642 = vpack.c.b16 %v1613, %v1612
    %v1643 = vpack.c.b16 %v1615, %v1614
    %v1644 = vpack.c.b16 %v1617, %v1616
    %v1645 = vpack.c.b16 %v1619, %v1618
    %v1646 = vpack.c.b16 %v1621, %v1620
    %v1647 = vpack.c.b16 %v1623, %v1622
    %v1648 = vpack.c.b16 %v1625, %v1624
    %v1649 = vpack.c.b16 %v1627, %v1626
    %v1650 = vpack.c.b16 %v1629, %v1628
    %v1651 = vpack.c.b16 %v1631, %v1630
    %v1652 = vpack.c.b16 %v1633, %v1632
    %v1653 = vpack.c.b16 %v1635, %v1634
    %v1654 = vpack.c.b16 %v1637, %v1636
    %v1655 = vpack.c.b16 %v1639, %v1638
    %1672 = vmatprep.subr.bf16.mxu0 0
    %1673 = vmatpush1.bf16.msra.mxu0 %v1640
    %1674 = vmatprep.subr.bf16.mxu0 0
    %1675 = vmatpush1.bf16.msra.mxu0 %v1641
    %1676 = vmatprep.subr.bf16.mxu0 0
    %1677 = vmatpush1.bf16.msra.mxu0 %v1642
    %1678 = vmatprep.subr.bf16.mxu0 0
    %1679 = vmatpush1.bf16.msra.mxu0 %v1643
    %1680 = vmatprep.subr.bf16.mxu0 0
    %1681 = vmatpush1.bf16.msra.mxu0 %v1644
    %1682 = vmatprep.subr.bf16.mxu0 0
    %1683 = vmatpush1.bf16.msra.mxu0 %v1645
    %1684 = vmatprep.subr.bf16.mxu0 0
    %1685 = vmatpush1.bf16.msra.mxu0 %v1646
    %1686 = vmatprep.subr.bf16.mxu0 0
    %1687 = vmatpush1.bf16.msra.mxu0 %v1647
    %1688 = vmatprep.subr.bf16.mxu0 0
    %1689 = vmatpush1.bf16.msra.mxu0 %v1648
    %1690 = vmatprep.subr.bf16.mxu0 0
    %1691 = vmatpush1.bf16.msra.mxu0 %v1649
    %1692 = vmatprep.subr.bf16.mxu0 0
    %1693 = vmatpush1.bf16.msra.mxu0 %v1650
    %1694 = vmatprep.subr.bf16.mxu0 0
    %1695 = vmatpush1.bf16.msra.mxu0 %v1651
    %1696 = vmatprep.subr.bf16.mxu0 0
    %1697 = vmatpush1.bf16.msra.mxu0 %v1652
    %1698 = vmatprep.subr.bf16.mxu0 0
    %1699 = vmatpush1.bf16.msra.mxu0 %v1653
    %1700 = vmatprep.subr.bf16.mxu0 0
    %1701 = vmatpush1.bf16.msra.mxu0 %v1654
    %1702 = vmatprep.subr.bf16.mxu0 0
    %1703 = vmatpush1.bf16.msra.mxu0 %v1655
    %1704 = vmatprep.mubr.bf16.mxu0 %v1573
    %1705 = vmatmul.mubr.bf16.gmra.mrb[0].mxu0 %v1572
    %v1706 = vpop.f32.mrb[0].mxu0
    %v1707 = vadd.f32 0.0, %v1706
    %v1708 = vpop.f32.mrb[0].mxu0
    %v1709 = vpop.f32.mrb[0].mxu0
    %v1710 = vpop.f32.mrb[0].mxu0
    %1711 = vdwg.mxu0
    %v1712 = vadd.f32 %v1532, %v1707
    %s1713 = scalar_lea.vmem %s3, 768
    %v1714 = vld [vmem:[%s1713] sm:$0xf]
    %v1715 = vld [vmem:[%s1713 + $0x4] sm:$0xf]
    %v1716 = vld [vmem:[%s1713 + $0x8] sm:$0xf]
    %v1717 = vld [vmem:[%s1713 + $0xc] sm:$0xf]
    %v1718 = vld [vmem:[%s1713 + $0x10] sm:$0xf]
    %v1719 = vld [vmem:[%s1713 + $0x14] sm:$0xf]
    %v1720 = vld [vmem:[%s1713 + $0x18] sm:$0xf]
    %v1721 = vld [vmem:[%s1713 + $0x1c] sm:$0xf]
    %v1722 = vld [vmem:[%s1713 + $0x20] sm:$0xf]
    %v1723 = vld [vmem:[%s1713 + $0x24] sm:$0xf]
    %v1724 = vld [vmem:[%s1713 + $0x28] sm:$0xf]
    %v1725 = vld [vmem:[%s1713 + $0x2c] sm:$0xf]
    %v1726 = vld [vmem:[%s1713 + $0x30] sm:$0xf]
    %v1727 = vld [vmem:[%s1713 + $0x34] sm:$0xf]
    %v1728 = vld [vmem:[%s1713 + $0x38] sm:$0xf]
    %v1729 = vld [vmem:[%s1713 + $0x3c] sm:$0xf]
    %v1730 = vld [vmem:[%s1713 + $0x40] sm:$0xf]
    %v1731 = vld [vmem:[%s1713 + $0x44] sm:$0xf]
    %v1732 = vld [vmem:[%s1713 + $0x48] sm:$0xf]
    %v1733 = vld [vmem:[%s1713 + $0x4c] sm:$0xf]
    %v1734 = vld [vmem:[%s1713 + $0x50] sm:$0xf]
    %v1735 = vld [vmem:[%s1713 + $0x54] sm:$0xf]
    %v1736 = vld [vmem:[%s1713 + $0x58] sm:$0xf]
    %v1737 = vld [vmem:[%s1713 + $0x5c] sm:$0xf]
    %v1738 = vld [vmem:[%s1713 + $0x60] sm:$0xf]
    %v1739 = vld [vmem:[%s1713 + $0x64] sm:$0xf]
    %v1740 = vld [vmem:[%s1713 + $0x68] sm:$0xf]
    %v1741 = vld [vmem:[%s1713 + $0x6c] sm:$0xf]
    %v1742 = vld [vmem:[%s1713 + $0x70] sm:$0xf]
    %v1743 = vld [vmem:[%s1713 + $0x74] sm:$0xf]
    %v1744 = vld [vmem:[%s1713 + $0x78] sm:$0xf]
    %v1745 = vld [vmem:[%s1713 + $0x7c] sm:$0xf]
    %v1746 = vrot.slane %v700, 6
    %v1747 = vrot.slane %v702, 5
    %v1748 = vsel %vm705, %v1747, %v1746
    %v1749 = vrot.slane %v701, 6
    %v1750 = vrot.slane %v703, 5
    %v1751 = vsel %vm705, %v1750, %v1749
    %v1752 = vpack.c.b16 %v1748, %v1748
    %v1753 = vpack.c.b16 %v1751, %v1751
    %v1788 = vunpack.c.l.b16 %v1714
    %v1789 = vunpack.c.l.b16 %v1715
    %v1790 = vunpack.c.l.b16 %v1716
    %v1791 = vunpack.c.l.b16 %v1717
    %v1792 = vunpack.c.l.b16 %v1718
    %v1793 = vunpack.c.l.b16 %v1719
    %v1794 = vunpack.c.l.b16 %v1720
    %v1795 = vunpack.c.l.b16 %v1721
    %v1796 = vunpack.c.l.b16 %v1722
    %v1797 = vunpack.c.l.b16 %v1723
    %v1798 = vunpack.c.l.b16 %v1724
    %v1799 = vunpack.c.l.b16 %v1725
    %v1800 = vunpack.c.l.b16 %v1726
    %v1801 = vunpack.c.l.b16 %v1727
    %v1802 = vunpack.c.l.b16 %v1728
    %v1803 = vunpack.c.l.b16 %v1729
    %v1804 = vunpack.c.l.b16 %v1730
    %v1805 = vunpack.c.l.b16 %v1731
    %v1806 = vunpack.c.l.b16 %v1732
    %v1807 = vunpack.c.l.b16 %v1733
    %v1808 = vunpack.c.l.b16 %v1734
    %v1809 = vunpack.c.l.b16 %v1735
    %v1810 = vunpack.c.l.b16 %v1736
    %v1811 = vunpack.c.l.b16 %v1737
    %v1812 = vunpack.c.l.b16 %v1738
    %v1813 = vunpack.c.l.b16 %v1739
    %v1814 = vunpack.c.l.b16 %v1740
    %v1815 = vunpack.c.l.b16 %v1741
    %v1816 = vunpack.c.l.b16 %v1742
    %v1817 = vunpack.c.l.b16 %v1743
    %v1818 = vunpack.c.l.b16 %v1744
    %v1819 = vunpack.c.l.b16 %v1745
    %v1820 = vpack.c.b16 %v1789, %v1788
    %v1821 = vpack.c.b16 %v1791, %v1790
    %v1822 = vpack.c.b16 %v1793, %v1792
    %v1823 = vpack.c.b16 %v1795, %v1794
    %v1824 = vpack.c.b16 %v1797, %v1796
    %v1825 = vpack.c.b16 %v1799, %v1798
    %v1826 = vpack.c.b16 %v1801, %v1800
    %v1827 = vpack.c.b16 %v1803, %v1802
    %v1828 = vpack.c.b16 %v1805, %v1804
    %v1829 = vpack.c.b16 %v1807, %v1806
    %v1830 = vpack.c.b16 %v1809, %v1808
    %v1831 = vpack.c.b16 %v1811, %v1810
    %v1832 = vpack.c.b16 %v1813, %v1812
    %v1833 = vpack.c.b16 %v1815, %v1814
    %v1834 = vpack.c.b16 %v1817, %v1816
    %v1835 = vpack.c.b16 %v1819, %v1818
    %1852 = vmatprep.subr.bf16.mxu0 0
    %1853 = vmatpush1.bf16.msra.mxu0 %v1820
    %1854 = vmatprep.subr.bf16.mxu0 0
    %1855 = vmatpush1.bf16.msra.mxu0 %v1821
    %1856 = vmatprep.subr.bf16.mxu0 0
    %1857 = vmatpush1.bf16.msra.mxu0 %v1822
    %1858 = vmatprep.subr.bf16.mxu0 0
    %1859 = vmatpush1.bf16.msra.mxu0 %v1823
    %1860 = vmatprep.subr.bf16.mxu0 0
    %1861 = vmatpush1.bf16.msra.mxu0 %v1824
    %1862 = vmatprep.subr.bf16.mxu0 0
    %1863 = vmatpush1.bf16.msra.mxu0 %v1825
    %1864 = vmatprep.subr.bf16.mxu0 0
    %1865 = vmatpush1.bf16.msra.mxu0 %v1826
    %1866 = vmatprep.subr.bf16.mxu0 0
    %1867 = vmatpush1.bf16.msra.mxu0 %v1827
    %1868 = vmatprep.subr.bf16.mxu0 0
    %1869 = vmatpush1.bf16.msra.mxu0 %v1828
    %1870 = vmatprep.subr.bf16.mxu0 0
    %1871 = vmatpush1.bf16.msra.mxu0 %v1829
    %1872 = vmatprep.subr.bf16.mxu0 0
    %1873 = vmatpush1.bf16.msra.mxu0 %v1830
    %1874 = vmatprep.subr.bf16.mxu0 0
    %1875 = vmatpush1.bf16.msra.mxu0 %v1831
    %1876 = vmatprep.subr.bf16.mxu0 0
    %1877 = vmatpush1.bf16.msra.mxu0 %v1832
    %1878 = vmatprep.subr.bf16.mxu0 0
    %1879 = vmatpush1.bf16.msra.mxu0 %v1833
    %1880 = vmatprep.subr.bf16.mxu0 0
    %1881 = vmatpush1.bf16.msra.mxu0 %v1834
    %1882 = vmatprep.subr.bf16.mxu0 0
    %1883 = vmatpush1.bf16.msra.mxu0 %v1835
    %1884 = vmatprep.mubr.bf16.mxu0 %v1753
    %1885 = vmatmul.mubr.bf16.gmra.mrb[0].mxu0 %v1752
    %v1886 = vpop.f32.mrb[0].mxu0
    %v1887 = vadd.f32 0.0, %v1886
    %v1888 = vpop.f32.mrb[0].mxu0
    %v1889 = vpop.f32.mrb[0].mxu0
    %v1890 = vpop.f32.mrb[0].mxu0
    %1891 = vdwg.mxu0
    %v1892 = vadd.f32 %v1712, %v1887
    %s1893 = scalar_lea.vmem %s3, 896
    %v1894 = vld [vmem:[%s1893] sm:$0xf]
    %v1895 = vld [vmem:[%s1893 + $0x4] sm:$0xf]
    %v1896 = vld [vmem:[%s1893 + $0x8] sm:$0xf]
    %v1897 = vld [vmem:[%s1893 + $0xc] sm:$0xf]
    %v1898 = vld [vmem:[%s1893 + $0x10] sm:$0xf]
    %v1899 = vld [vmem:[%s1893 + $0x14] sm:$0xf]
    %v1900 = vld [vmem:[%s1893 + $0x18] sm:$0xf]
    %v1901 = vld [vmem:[%s1893 + $0x1c] sm:$0xf]
    %v1902 = vld [vmem:[%s1893 + $0x20] sm:$0xf]
    %v1903 = vld [vmem:[%s1893 + $0x24] sm:$0xf]
    %v1904 = vld [vmem:[%s1893 + $0x28] sm:$0xf]
    %v1905 = vld [vmem:[%s1893 + $0x2c] sm:$0xf]
    %v1906 = vld [vmem:[%s1893 + $0x30] sm:$0xf]
    %v1907 = vld [vmem:[%s1893 + $0x34] sm:$0xf]
    %v1908 = vld [vmem:[%s1893 + $0x38] sm:$0xf]
    %v1909 = vld [vmem:[%s1893 + $0x3c] sm:$0xf]
    %v1910 = vld [vmem:[%s1893 + $0x40] sm:$0xf]
    %v1911 = vld [vmem:[%s1893 + $0x44] sm:$0xf]
    %v1912 = vld [vmem:[%s1893 + $0x48] sm:$0xf]
    %v1913 = vld [vmem:[%s1893 + $0x4c] sm:$0xf]
    %v1914 = vld [vmem:[%s1893 + $0x50] sm:$0xf]
    %v1915 = vld [vmem:[%s1893 + $0x54] sm:$0xf]
    %v1916 = vld [vmem:[%s1893 + $0x58] sm:$0xf]
    %v1917 = vld [vmem:[%s1893 + $0x5c] sm:$0xf]
    %v1918 = vld [vmem:[%s1893 + $0x60] sm:$0xf]
    %v1919 = vld [vmem:[%s1893 + $0x64] sm:$0xf]
    %v1920 = vld [vmem:[%s1893 + $0x68] sm:$0xf]
    %v1921 = vld [vmem:[%s1893 + $0x6c] sm:$0xf]
    %v1922 = vld [vmem:[%s1893 + $0x70] sm:$0xf]
    %v1923 = vld [vmem:[%s1893 + $0x74] sm:$0xf]
    %v1924 = vld [vmem:[%s1893 + $0x78] sm:$0xf]
    %v1925 = vld [vmem:[%s1893 + $0x7c] sm:$0xf]
    %v1926 = vrot.slane %v700, 7
    %v1927 = vrot.slane %v702, 6
    %v1928 = vsel %vm705, %v1927, %v1926
    %v1929 = vrot.slane %v701, 7
    %v1930 = vrot.slane %v703, 6
    %v1931 = vsel %vm705, %v1930, %v1929
    %v1932 = vpack.c.b16 %v1928, %v1928
    %v1933 = vpack.c.b16 %v1931, %v1931
    %v1968 = vunpack.c.l.b16 %v1894
    %v1969 = vunpack.c.l.b16 %v1895
    %v1970 = vunpack.c.l.b16 %v1896
    %v1971 = vunpack.c.l.b16 %v1897
    %v1972 = vunpack.c.l.b16 %v1898
    %v1973 = vunpack.c.l.b16 %v1899
    %v1974 = vunpack.c.l.b16 %v1900
    %v1975 = vunpack.c.l.b16 %v1901
    %v1976 = vunpack.c.l.b16 %v1902
    %v1977 = vunpack.c.l.b16 %v1903
    %v1978 = vunpack.c.l.b16 %v1904
    %v1979 = vunpack.c.l.b16 %v1905
    %v1980 = vunpack.c.l.b16 %v1906
    %v1981 = vunpack.c.l.b16 %v1907
    %v1982 = vunpack.c.l.b16 %v1908
    %v1983 = vunpack.c.l.b16 %v1909
    %v1984 = vunpack.c.l.b16 %v1910
    %v1985 = vunpack.c.l.b16 %v1911
    %v1986 = vunpack.c.l.b16 %v1912
    %v1987 = vunpack.c.l.b16 %v1913
    %v1988 = vunpack.c.l.b16 %v1914
    %v1989 = vunpack.c.l.b16 %v1915
    %v1990 = vunpack.c.l.b16 %v1916
    %v1991 = vunpack.c.l.b16 %v1917
    %v1992 = vunpack.c.l.b16 %v1918
    %v1993 = vunpack.c.l.b16 %v1919
    %v1994 = vunpack.c.l.b16 %v1920
    %v1995 = vunpack.c.l.b16 %v1921
    %v1996 = vunpack.c.l.b16 %v1922
    %v1997 = vunpack.c.l.b16 %v1923
    %v1998 = vunpack.c.l.b16 %v1924
    %v1999 = vunpack.c.l.b16 %v1925
    %v2000 = vpack.c.b16 %v1969, %v1968
    %v2001 = vpack.c.b16 %v1971, %v1970
    %v2002 = vpack.c.b16 %v1973, %v1972
    %v2003 = vpack.c.b16 %v1975, %v1974
    %v2004 = vpack.c.b16 %v1977, %v1976
    %v2005 = vpack.c.b16 %v1979, %v1978
    %v2006 = vpack.c.b16 %v1981, %v1980
    %v2007 = vpack.c.b16 %v1983, %v1982
    %v2008 = vpack.c.b16 %v1985, %v1984
    %v2009 = vpack.c.b16 %v1987, %v1986
    %v2010 = vpack.c.b16 %v1989, %v1988
    %v2011 = vpack.c.b16 %v1991, %v1990
    %v2012 = vpack.c.b16 %v1993, %v1992
    %v2013 = vpack.c.b16 %v1995, %v1994
    %v2014 = vpack.c.b16 %v1997, %v1996
    %v2015 = vpack.c.b16 %v1999, %v1998
    %2032 = vmatprep.subr.bf16.mxu0 0
    %2033 = vmatpush1.bf16.msra.mxu0 %v2000
    %2034 = vmatprep.subr.bf16.mxu0 0
    %2035 = vmatpush1.bf16.msra.mxu0 %v2001
    %2036 = vmatprep.subr.bf16.mxu0 0
    %2037 = vmatpush1.bf16.msra.mxu0 %v2002
    %2038 = vmatprep.subr.bf16.mxu0 0
    %2039 = vmatpush1.bf16.msra.mxu0 %v2003
    %2040 = vmatprep.subr.bf16.mxu0 0
    %2041 = vmatpush1.bf16.msra.mxu0 %v2004
    %2042 = vmatprep.subr.bf16.mxu0 0
    %2043 = vmatpush1.bf16.msra.mxu0 %v2005
    %2044 = vmatprep.subr.bf16.mxu0 0
    %2045 = vmatpush1.bf16.msra.mxu0 %v2006
    %2046 = vmatprep.subr.bf16.mxu0 0
    %2047 = vmatpush1.bf16.msra.mxu0 %v2007
    %2048 = vmatprep.subr.bf16.mxu0 0
    %2049 = vmatpush1.bf16.msra.mxu0 %v2008
    %2050 = vmatprep.subr.bf16.mxu0 0
    %2051 = vmatpush1.bf16.msra.mxu0 %v2009
    %2052 = vmatprep.subr.bf16.mxu0 0
    %2053 = vmatpush1.bf16.msra.mxu0 %v2010
    %2054 = vmatprep.subr.bf16.mxu0 0
    %2055 = vmatpush1.bf16.msra.mxu0 %v2011
    %2056 = vmatprep.subr.bf16.mxu0 0
    %2057 = vmatpush1.bf16.msra.mxu0 %v2012
    %2058 = vmatprep.subr.bf16.mxu0 0
    %2059 = vmatpush1.bf16.msra.mxu0 %v2013
    %2060 = vmatprep.subr.bf16.mxu0 0
    %2061 = vmatpush1.bf16.msra.mxu0 %v2014
    %2062 = vmatprep.subr.bf16.mxu0 0
    %2063 = vmatpush1.bf16.msra.mxu0 %v2015
    %2064 = vmatprep.mubr.bf16.mxu0 %v1933
    %2065 = vmatmul.mubr.bf16.gmra.mrb[0].mxu0 %v1932
    %v2066 = vpop.f32.mrb[0].mxu0
    %v2067 = vadd.f32 0.0, %v2066
    %v2068 = vpop.f32.mrb[0].mxu0
    %v2069 = vpop.f32.mrb[0].mxu0
    %v2070 = vpop.f32.mrb[0].mxu0
    %2071 = vdwg.mxu0
    %v2072 = vadd.f32 %v1892, %v2067
    %s2073 = scalar_lea.vmem %s3, 1024
    %v2074 = vld [vmem:[%s2073] sm:$0xf]
    %v2075 = vld [vmem:[%s2073 + $0x4] sm:$0xf]
    %v2076 = vld [vmem:[%s2073 + $0x8] sm:$0xf]
    %v2077 = vld [vmem:[%s2073 + $0xc] sm:$0xf]
    %v2078 = vld [vmem:[%s2073 + $0x10] sm:$0xf]
    %v2079 = vld [vmem:[%s2073 + $0x14] sm:$0xf]
    %v2080 = vld [vmem:[%s2073 + $0x18] sm:$0xf]
    %v2081 = vld [vmem:[%s2073 + $0x1c] sm:$0xf]
    %v2082 = vld [vmem:[%s2073 + $0x20] sm:$0xf]
    %v2083 = vld [vmem:[%s2073 + $0x24] sm:$0xf]
    %v2084 = vld [vmem:[%s2073 + $0x28] sm:$0xf]
    %v2085 = vld [vmem:[%s2073 + $0x2c] sm:$0xf]
    %v2086 = vld [vmem:[%s2073 + $0x30] sm:$0xf]
    %v2087 = vld [vmem:[%s2073 + $0x34] sm:$0xf]
    %v2088 = vld [vmem:[%s2073 + $0x38] sm:$0xf]
    %v2089 = vld [vmem:[%s2073 + $0x3c] sm:$0xf]
    %v2090 = vld [vmem:[%s2073 + $0x40] sm:$0xf]
    %v2091 = vld [vmem:[%s2073 + $0x44] sm:$0xf]
    %v2092 = vld [vmem:[%s2073 + $0x48] sm:$0xf]
    %v2093 = vld [vmem:[%s2073 + $0x4c] sm:$0xf]
    %v2094 = vld [vmem:[%s2073 + $0x50] sm:$0xf]
    %v2095 = vld [vmem:[%s2073 + $0x54] sm:$0xf]
    %v2096 = vld [vmem:[%s2073 + $0x58] sm:$0xf]
    %v2097 = vld [vmem:[%s2073 + $0x5c] sm:$0xf]
    %v2098 = vld [vmem:[%s2073 + $0x60] sm:$0xf]
    %v2099 = vld [vmem:[%s2073 + $0x64] sm:$0xf]
    %v2100 = vld [vmem:[%s2073 + $0x68] sm:$0xf]
    %v2101 = vld [vmem:[%s2073 + $0x6c] sm:$0xf]
    %v2102 = vld [vmem:[%s2073 + $0x70] sm:$0xf]
    %v2103 = vld [vmem:[%s2073 + $0x74] sm:$0xf]
    %v2104 = vld [vmem:[%s2073 + $0x78] sm:$0xf]
    %v2105 = vld [vmem:[%s2073 + $0x7c] sm:$0xf]
    %v2106 = vunpack.c.h.b16 %v627
    %v2107 = vunpack.c.h.b16 %v628
    %v2108 = vunpack.c.h.b16 %v629
    %v2109 = vunpack.c.h.b16 %v630
    %v2110 = vrot.slane %v2108, 7
    %v2111 = vsel %vm705, %v2110, %v2106
    %v2112 = vrot.slane %v2109, 7
    %v2113 = vsel %vm705, %v2112, %v2107
    %v2114 = vpack.c.b16 %v2111, %v2111
    %v2115 = vpack.c.b16 %v2113, %v2113
    %v2150 = vunpack.c.l.b16 %v2074
    %v2151 = vunpack.c.l.b16 %v2075
    %v2152 = vunpack.c.l.b16 %v2076
    %v2153 = vunpack.c.l.b16 %v2077
    %v2154 = vunpack.c.l.b16 %v2078
    %v2155 = vunpack.c.l.b16 %v2079
    %v2156 = vunpack.c.l.b16 %v2080
    %v2157 = vunpack.c.l.b16 %v2081
    %v2158 = vunpack.c.l.b16 %v2082
    %v2159 = vunpack.c.l.b16 %v2083
    %v2160 = vunpack.c.l.b16 %v2084
    %v2161 = vunpack.c.l.b16 %v2085
    %v2162 = vunpack.c.l.b16 %v2086
    %v2163 = vunpack.c.l.b16 %v2087
    %v2164 = vunpack.c.l.b16 %v2088
    %v2165 = vunpack.c.l.b16 %v2089
    %v2166 = vunpack.c.l.b16 %v2090
    %v2167 = vunpack.c.l.b16 %v2091
    %v2168 = vunpack.c.l.b16 %v2092
    %v2169 = vunpack.c.l.b16 %v2093
    %v2170 = vunpack.c.l.b16 %v2094
    %v2171 = vunpack.c.l.b16 %v2095
    %v2172 = vunpack.c.l.b16 %v2096
    %v2173 = vunpack.c.l.b16 %v2097
    %v2174 = vunpack.c.l.b16 %v2098
    %v2175 = vunpack.c.l.b16 %v2099
    %v2176 = vunpack.c.l.b16 %v2100
    %v2177 = vunpack.c.l.b16 %v2101
    %v2178 = vunpack.c.l.b16 %v2102
    %v2179 = vunpack.c.l.b16 %v2103
    %v2180 = vunpack.c.l.b16 %v2104
    %v2181 = vunpack.c.l.b16 %v2105
    %v2182 = vpack.c.b16 %v2151, %v2150
    %v2183 = vpack.c.b16 %v2153, %v2152
    %v2184 = vpack.c.b16 %v2155, %v2154
    %v2185 = vpack.c.b16 %v2157, %v2156
    %v2186 = vpack.c.b16 %v2159, %v2158
    %v2187 = vpack.c.b16 %v2161, %v2160
    %v2188 = vpack.c.b16 %v2163, %v2162
    %v2189 = vpack.c.b16 %v2165, %v2164
    %v2190 = vpack.c.b16 %v2167, %v2166
    %v2191 = vpack.c.b16 %v2169, %v2168
    %v2192 = vpack.c.b16 %v2171, %v2170
    %v2193 = vpack.c.b16 %v2173, %v2172
    %v2194 = vpack.c.b16 %v2175, %v2174
    %v2195 = vpack.c.b16 %v2177, %v2176
    %v2196 = vpack.c.b16 %v2179, %v2178
    %v2197 = vpack.c.b16 %v2181, %v2180
    %2214 = vmatprep.subr.bf16.mxu0 0
    %2215 = vmatpush1.bf16.msra.mxu0 %v2182
    %2216 = vmatprep.subr.bf16.mxu0 0
    %2217 = vmatpush1.bf16.msra.mxu0 %v2183
    %2218 = vmatprep.subr.bf16.mxu0 0
    %2219 = vmatpush1.bf16.msra.mxu0 %v2184
    %2220 = vmatprep.subr.bf16.mxu0 0
    %2221 = vmatpush1.bf16.msra.mxu0 %v2185
    %2222 = vmatprep.subr.bf16.mxu0 0
    %2223 = vmatpush1.bf16.msra.mxu0 %v2186
    %2224 = vmatprep.subr.bf16.mxu0 0
    %2225 = vmatpush1.bf16.msra.mxu0 %v2187
    %2226 = vmatprep.subr.bf16.mxu0 0
    %2227 = vmatpush1.bf16.msra.mxu0 %v2188
    %2228 = vmatprep.subr.bf16.mxu0 0
    %2229 = vmatpush1.bf16.msra.mxu0 %v2189
    %2230 = vmatprep.subr.bf16.mxu0 0
    %2231 = vmatpush1.bf16.msra.mxu0 %v2190
    %2232 = vmatprep.subr.bf16.mxu0 0
    %2233 = vmatpush1.bf16.msra.mxu0 %v2191
    %2234 = vmatprep.subr.bf16.mxu0 0
    %2235 = vmatpush1.bf16.msra.mxu0 %v2192
    %2236 = vmatprep.subr.bf16.mxu0 0
    %2237 = vmatpush1.bf16.msra.mxu0 %v2193
    %2238 = vmatprep.subr.bf16.mxu0 0
    %2239 = vmatpush1.bf16.msra.mxu0 %v2194
    %2240 = vmatprep.subr.bf16.mxu0 0
    %2241 = vmatpush1.bf16.msra.mxu0 %v2195
    %2242 = vmatprep.subr.bf16.mxu0 0
    %2243 = vmatpush1.bf16.msra.mxu0 %v2196
    %2244 = vmatprep.subr.bf16.mxu0 0
    %2245 = vmatpush1.bf16.msra.mxu0 %v2197
    %2246 = vmatprep.mubr.bf16.mxu0 %v2115
    %2247 = vmatmul.mubr.bf16.gmra.mrb[0].mxu0 %v2114
    %v2248 = vpop.f32.mrb[0].mxu0
    %v2249 = vadd.f32 0.0, %v2248
    %v2250 = vpop.f32.mrb[0].mxu0
    %v2251 = vpop.f32.mrb[0].mxu0
    %v2252 = vpop.f32.mrb[0].mxu0
    %2253 = vdwg.mxu0
    %v2254 = vadd.f32 %v2072, %v2249
    %s2255 = scalar_lea.vmem %s3, 1152
    %v2256 = vld [vmem:[%s2255] sm:$0xf]
    %v2257 = vld [vmem:[%s2255 + $0x4] sm:$0xf]
    %v2258 = vld [vmem:[%s2255 + $0x8] sm:$0xf]
    %v2259 = vld [vmem:[%s2255 + $0xc] sm:$0xf]
    %v2260 = vld [vmem:[%s2255 + $0x10] sm:$0xf]
    %v2261 = vld [vmem:[%s2255 + $0x14] sm:$0xf]
    %v2262 = vld [vmem:[%s2255 + $0x18] sm:$0xf]
    %v2263 = vld [vmem:[%s2255 + $0x1c] sm:$0xf]
    %v2264 = vld [vmem:[%s2255 + $0x20] sm:$0xf]
    %v2265 = vld [vmem:[%s2255 + $0x24] sm:$0xf]
    %v2266 = vld [vmem:[%s2255 + $0x28] sm:$0xf]
    %v2267 = vld [vmem:[%s2255 + $0x2c] sm:$0xf]
    %v2268 = vld [vmem:[%s2255 + $0x30] sm:$0xf]
    %v2269 = vld [vmem:[%s2255 + $0x34] sm:$0xf]
    %v2270 = vld [vmem:[%s2255 + $0x38] sm:$0xf]
    %v2271 = vld [vmem:[%s2255 + $0x3c] sm:$0xf]
    %v2272 = vld [vmem:[%s2255 + $0x40] sm:$0xf]
    %v2273 = vld [vmem:[%s2255 + $0x44] sm:$0xf]
    %v2274 = vld [vmem:[%s2255 + $0x48] sm:$0xf]
    %v2275 = vld [vmem:[%s2255 + $0x4c] sm:$0xf]
    %v2276 = vld [vmem:[%s2255 + $0x50] sm:$0xf]
    %v2277 = vld [vmem:[%s2255 + $0x54] sm:$0xf]
    %v2278 = vld [vmem:[%s2255 + $0x58] sm:$0xf]
    %v2279 = vld [vmem:[%s2255 + $0x5c] sm:$0xf]
    %v2280 = vld [vmem:[%s2255 + $0x60] sm:$0xf]
    %v2281 = vld [vmem:[%s2255 + $0x64] sm:$0xf]
    %v2282 = vld [vmem:[%s2255 + $0x68] sm:$0xf]
    %v2283 = vld [vmem:[%s2255 + $0x6c] sm:$0xf]
    %v2284 = vld [vmem:[%s2255 + $0x70] sm:$0xf]
    %v2285 = vld [vmem:[%s2255 + $0x74] sm:$0xf]
    %v2286 = vld [vmem:[%s2255 + $0x78] sm:$0xf]
    %v2287 = vld [vmem:[%s2255 + $0x7c] sm:$0xf]
    %v2288 = vrot.slane %v2106, 1
    %v2289 = vsel %vm705, %v2108, %v2288
    %v2290 = vrot.slane %v2107, 1
    %v2291 = vsel %vm705, %v2109, %v2290
    %v2292 = vpack.c.b16 %v2289, %v2289
    %v2293 = vpack.c.b16 %v2291, %v2291
    %v2328 = vunpack.c.l.b16 %v2256
    %v2329 = vunpack.c.l.b16 %v2257
    %v2330 = vunpack.c.l.b16 %v2258
    %v2331 = vunpack.c.l.b16 %v2259
    %v2332 = vunpack.c.l.b16 %v2260
    %v2333 = vunpack.c.l.b16 %v2261
    %v2334 = vunpack.c.l.b16 %v2262
    %v2335 = vunpack.c.l.b16 %v2263
    %v2336 = vunpack.c.l.b16 %v2264
    %v2337 = vunpack.c.l.b16 %v2265
    %v2338 = vunpack.c.l.b16 %v2266
    %v2339 = vunpack.c.l.b16 %v2267
    %v2340 = vunpack.c.l.b16 %v2268
    %v2341 = vunpack.c.l.b16 %v2269
    %v2342 = vunpack.c.l.b16 %v2270
    %v2343 = vunpack.c.l.b16 %v2271
    %v2344 = vunpack.c.l.b16 %v2272
    %v2345 = vunpack.c.l.b16 %v2273
    %v2346 = vunpack.c.l.b16 %v2274
    %v2347 = vunpack.c.l.b16 %v2275
    %v2348 = vunpack.c.l.b16 %v2276
    %v2349 = vunpack.c.l.b16 %v2277
    %v2350 = vunpack.c.l.b16 %v2278
    %v2351 = vunpack.c.l.b16 %v2279
    %v2352 = vunpack.c.l.b16 %v2280
    %v2353 = vunpack.c.l.b16 %v2281
    %v2354 = vunpack.c.l.b16 %v2282
    %v2355 = vunpack.c.l.b16 %v2283
    %v2356 = vunpack.c.l.b16 %v2284
    %v2357 = vunpack.c.l.b16 %v2285
    %v2358 = vunpack.c.l.b16 %v2286
    %v2359 = vunpack.c.l.b16 %v2287
    %v2360 = vpack.c.b16 %v2329, %v2328
    %v2361 = vpack.c.b16 %v2331, %v2330
    %v2362 = vpack.c.b16 %v2333, %v2332
    %v2363 = vpack.c.b16 %v2335, %v2334
    %v2364 = vpack.c.b16 %v2337, %v2336
    %v2365 = vpack.c.b16 %v2339, %v2338
    %v2366 = vpack.c.b16 %v2341, %v2340
    %v2367 = vpack.c.b16 %v2343, %v2342
    %v2368 = vpack.c.b16 %v2345, %v2344
    %v2369 = vpack.c.b16 %v2347, %v2346
    %v2370 = vpack.c.b16 %v2349, %v2348
    %v2371 = vpack.c.b16 %v2351, %v2350
    %v2372 = vpack.c.b16 %v2353, %v2352
    %v2373 = vpack.c.b16 %v2355, %v2354
    %v2374 = vpack.c.b16 %v2357, %v2356
    %v2375 = vpack.c.b16 %v2359, %v2358
    %2392 = vmatprep.subr.bf16.mxu0 0
    %2393 = vmatpush1.bf16.msra.mxu0 %v2360
    %2394 = vmatprep.subr.bf16.mxu0 0
    %2395 = vmatpush1.bf16.msra.mxu0 %v2361
    %2396 = vmatprep.subr.bf16.mxu0 0
    %2397 = vmatpush1.bf16.msra.mxu0 %v2362
    %2398 = vmatprep.subr.bf16.mxu0 0
    %2399 = vmatpush1.bf16.msra.mxu0 %v2363
    %2400 = vmatprep.subr.bf16.mxu0 0
    %2401 = vmatpush1.bf16.msra.mxu0 %v2364
    %2402 = vmatprep.subr.bf16.mxu0 0
    %2403 = vmatpush1.bf16.msra.mxu0 %v2365
    %2404 = vmatprep.subr.bf16.mxu0 0
    %2405 = vmatpush1.bf16.msra.mxu0 %v2366
    %2406 = vmatprep.subr.bf16.mxu0 0
    %2407 = vmatpush1.bf16.msra.mxu0 %v2367
    %2408 = vmatprep.subr.bf16.mxu0 0
    %2409 = vmatpush1.bf16.msra.mxu0 %v2368
    %2410 = vmatprep.subr.bf16.mxu0 0
    %2411 = vmatpush1.bf16.msra.mxu0 %v2369
    %2412 = vmatprep.subr.bf16.mxu0 0
    %2413 = vmatpush1.bf16.msra.mxu0 %v2370
    %2414 = vmatprep.subr.bf16.mxu0 0
    %2415 = vmatpush1.bf16.msra.mxu0 %v2371
    %2416 = vmatprep.subr.bf16.mxu0 0
    %2417 = vmatpush1.bf16.msra.mxu0 %v2372
    %2418 = vmatprep.subr.bf16.mxu0 0
    %2419 = vmatpush1.bf16.msra.mxu0 %v2373
    %2420 = vmatprep.subr.bf16.mxu0 0
    %2421 = vmatpush1.bf16.msra.mxu0 %v2374
    %2422 = vmatprep.subr.bf16.mxu0 0
    %2423 = vmatpush1.bf16.msra.mxu0 %v2375
    %2424 = vmatprep.mubr.bf16.mxu0 %v2293
    %2425 = vmatmul.mubr.bf16.gmra.mrb[0].mxu0 %v2292
    %v2426 = vpop.f32.mrb[0].mxu0
    %v2427 = vadd.f32 0.0, %v2426
    %v2428 = vpop.f32.mrb[0].mxu0
    %v2429 = vpop.f32.mrb[0].mxu0
    %v2430 = vpop.f32.mrb[0].mxu0
    %2431 = vdwg.mxu0
    %v2432 = vadd.f32 %v2254, %v2427
    %s2433 = scalar_lea.vmem %s3, 1280
    %v2434 = vld [vmem:[%s2433] sm:$0xf]
    %v2435 = vld [vmem:[%s2433 + $0x4] sm:$0xf]
    %v2436 = vld [vmem:[%s2433 + $0x8] sm:$0xf]
    %v2437 = vld [vmem:[%s2433 + $0xc] sm:$0xf]
    %v2438 = vld [vmem:[%s2433 + $0x10] sm:$0xf]
    %v2439 = vld [vmem:[%s2433 + $0x14] sm:$0xf]
    %v2440 = vld [vmem:[%s2433 + $0x18] sm:$0xf]
    %v2441 = vld [vmem:[%s2433 + $0x1c] sm:$0xf]
    %v2442 = vld [vmem:[%s2433 + $0x20] sm:$0xf]
    %v2443 = vld [vmem:[%s2433 + $0x24] sm:$0xf]
    %v2444 = vld [vmem:[%s2433 + $0x28] sm:$0xf]
    %v2445 = vld [vmem:[%s2433 + $0x2c] sm:$0xf]
    %v2446 = vld [vmem:[%s2433 + $0x30] sm:$0xf]
    %v2447 = vld [vmem:[%s2433 + $0x34] sm:$0xf]
    %v2448 = vld [vmem:[%s2433 + $0x38] sm:$0xf]
    %v2449 = vld [vmem:[%s2433 + $0x3c] sm:$0xf]
    %v2450 = vld [vmem:[%s2433 + $0x40] sm:$0xf]
    %v2451 = vld [vmem:[%s2433 + $0x44] sm:$0xf]
    %v2452 = vld [vmem:[%s2433 + $0x48] sm:$0xf]
    %v2453 = vld [vmem:[%s2433 + $0x4c] sm:$0xf]
    %v2454 = vld [vmem:[%s2433 + $0x50] sm:$0xf]
    %v2455 = vld [vmem:[%s2433 + $0x54] sm:$0xf]
    %v2456 = vld [vmem:[%s2433 + $0x58] sm:$0xf]
    %v2457 = vld [vmem:[%s2433 + $0x5c] sm:$0xf]
    %v2458 = vld [vmem:[%s2433 + $0x60] sm:$0xf]
    %v2459 = vld [vmem:[%s2433 + $0x64] sm:$0xf]
    %v2460 = vld [vmem:[%s2433 + $0x68] sm:$0xf]
    %v2461 = vld [vmem:[%s2433 + $0x6c] sm:$0xf]
    %v2462 = vld [vmem:[%s2433 + $0x70] sm:$0xf]
    %v2463 = vld [vmem:[%s2433 + $0x74] sm:$0xf]
    %v2464 = vld [vmem:[%s2433 + $0x78] sm:$0xf]
    %v2465 = vld [vmem:[%s2433 + $0x7c] sm:$0xf]
    %v2466 = vrot.slane %v2106, 2
    %v2467 = vrot.slane %v2108, 1
    %v2468 = vsel %vm705, %v2467, %v2466
    %v2469 = vrot.slane %v2107, 2
    %v2470 = vrot.slane %v2109, 1
    %v2471 = vsel %vm705, %v2470, %v2469
    %v2472 = vpack.c.b16 %v2468, %v2468
    %v2473 = vpack.c.b16 %v2471, %v2471
    %v2508 = vunpack.c.l.b16 %v2434
    %v2509 = vunpack.c.l.b16 %v2435
    %v2510 = vunpack.c.l.b16 %v2436
    %v2511 = vunpack.c.l.b16 %v2437
    %v2512 = vunpack.c.l.b16 %v2438
    %v2513 = vunpack.c.l.b16 %v2439
    %v2514 = vunpack.c.l.b16 %v2440
    %v2515 = vunpack.c.l.b16 %v2441
    %v2516 = vunpack.c.l.b16 %v2442
    %v2517 = vunpack.c.l.b16 %v2443
    %v2518 = vunpack.c.l.b16 %v2444
    %v2519 = vunpack.c.l.b16 %v2445
    %v2520 = vunpack.c.l.b16 %v2446
    %v2521 = vunpack.c.l.b16 %v2447
    %v2522 = vunpack.c.l.b16 %v2448
    %v2523 = vunpack.c.l.b16 %v2449
    %v2524 = vunpack.c.l.b16 %v2450
    %v2525 = vunpack.c.l.b16 %v2451
    %v2526 = vunpack.c.l.b16 %v2452
    %v2527 = vunpack.c.l.b16 %v2453
    %v2528 = vunpack.c.l.b16 %v2454
    %v2529 = vunpack.c.l.b16 %v2455
    %v2530 = vunpack.c.l.b16 %v2456
    %v2531 = vunpack.c.l.b16 %v2457
    %v2532 = vunpack.c.l.b16 %v2458
    %v2533 = vunpack.c.l.b16 %v2459
    %v2534 = vunpack.c.l.b16 %v2460
    %v2535 = vunpack.c.l.b16 %v2461
    %v2536 = vunpack.c.l.b16 %v2462
    %v2537 = vunpack.c.l.b16 %v2463
    %v2538 = vunpack.c.l.b16 %v2464
    %v2539 = vunpack.c.l.b16 %v2465
    %v2540 = vpack.c.b16 %v2509, %v2508
    %v2541 = vpack.c.b16 %v2511, %v2510
    %v2542 = vpack.c.b16 %v2513, %v2512
    %v2543 = vpack.c.b16 %v2515, %v2514
    %v2544 = vpack.c.b16 %v2517, %v2516
    %v2545 = vpack.c.b16 %v2519, %v2518
    %v2546 = vpack.c.b16 %v2521, %v2520
    %v2547 = vpack.c.b16 %v2523, %v2522
    %v2548 = vpack.c.b16 %v2525, %v2524
    %v2549 = vpack.c.b16 %v2527, %v2526
    %v2550 = vpack.c.b16 %v2529, %v2528
    %v2551 = vpack.c.b16 %v2531, %v2530
    %v2552 = vpack.c.b16 %v2533, %v2532
    %v2553 = vpack.c.b16 %v2535, %v2534
    %v2554 = vpack.c.b16 %v2537, %v2536
    %v2555 = vpack.c.b16 %v2539, %v2538
    %2572 = vmatprep.subr.bf16.mxu0 0
    %2573 = vmatpush1.bf16.msra.mxu0 %v2540
    %2574 = vmatprep.subr.bf16.mxu0 0
    %2575 = vmatpush1.bf16.msra.mxu0 %v2541
    %2576 = vmatprep.subr.bf16.mxu0 0
    %2577 = vmatpush1.bf16.msra.mxu0 %v2542
    %2578 = vmatprep.subr.bf16.mxu0 0
    %2579 = vmatpush1.bf16.msra.mxu0 %v2543
    %2580 = vmatprep.subr.bf16.mxu0 0
    %2581 = vmatpush1.bf16.msra.mxu0 %v2544
    %2582 = vmatprep.subr.bf16.mxu0 0
    %2583 = vmatpush1.bf16.msra.mxu0 %v2545
    %2584 = vmatprep.subr.bf16.mxu0 0
    %2585 = vmatpush1.bf16.msra.mxu0 %v2546
    %2586 = vmatprep.subr.bf16.mxu0 0
    %2587 = vmatpush1.bf16.msra.mxu0 %v2547
    %2588 = vmatprep.subr.bf16.mxu0 0
    %2589 = vmatpush1.bf16.msra.mxu0 %v2548
    %2590 = vmatprep.subr.bf16.mxu0 0
    %2591 = vmatpush1.bf16.msra.mxu0 %v2549
    %2592 = vmatprep.subr.bf16.mxu0 0
    %2593 = vmatpush1.bf16.msra.mxu0 %v2550
    %2594 = vmatprep.subr.bf16.mxu0 0
    %2595 = vmatpush1.bf16.msra.mxu0 %v2551
    %2596 = vmatprep.subr.bf16.mxu0 0
    %2597 = vmatpush1.bf16.msra.mxu0 %v2552
    %2598 = vmatprep.subr.bf16.mxu0 0
    %2599 = vmatpush1.bf16.msra.mxu0 %v2553
    %2600 = vmatprep.subr.bf16.mxu0 0
    %2601 = vmatpush1.bf16.msra.mxu0 %v2554
    %2602 = vmatprep.subr.bf16.mxu0 0
    %2603 = vmatpush1.bf16.msra.mxu0 %v2555
    %2604 = vmatprep.mubr.bf16.mxu0 %v2473
    %2605 = vmatmul.mubr.bf16.gmra.mrb[0].mxu0 %v2472
    %v2606 = vpop.f32.mrb[0].mxu0
    %v2607 = vadd.f32 0.0, %v2606
    %v2608 = vpop.f32.mrb[0].mxu0
    %v2609 = vpop.f32.mrb[0].mxu0
    %v2610 = vpop.f32.mrb[0].mxu0
    %2611 = vdwg.mxu0
    %v2612 = vadd.f32 %v2432, %v2607
    %s2613 = scalar_lea.vmem %s3, 1408
    %v2614 = vld [vmem:[%s2613] sm:$0xf]
    %v2615 = vld [vmem:[%s2613 + $0x4] sm:$0xf]
    %v2616 = vld [vmem:[%s2613 + $0x8] sm:$0xf]
    %v2617 = vld [vmem:[%s2613 + $0xc] sm:$0xf]
    %v2618 = vld [vmem:[%s2613 + $0x10] sm:$0xf]
    %v2619 = vld [vmem:[%s2613 + $0x14] sm:$0xf]
    %v2620 = vld [vmem:[%s2613 + $0x18] sm:$0xf]
    %v2621 = vld [vmem:[%s2613 + $0x1c] sm:$0xf]
    %v2622 = vld [vmem:[%s2613 + $0x20] sm:$0xf]
    %v2623 = vld [vmem:[%s2613 + $0x24] sm:$0xf]
    %v2624 = vld [vmem:[%s2613 + $0x28] sm:$0xf]
    %v2625 = vld [vmem:[%s2613 + $0x2c] sm:$0xf]
    %v2626 = vld [vmem:[%s2613 + $0x30] sm:$0xf]
    %v2627 = vld [vmem:[%s2613 + $0x34] sm:$0xf]
    %v2628 = vld [vmem:[%s2613 + $0x38] sm:$0xf]
    %v2629 = vld [vmem:[%s2613 + $0x3c] sm:$0xf]
    %v2630 = vld [vmem:[%s2613 + $0x40] sm:$0xf]
    %v2631 = vld [vmem:[%s2613 + $0x44] sm:$0xf]
    %v2632 = vld [vmem:[%s2613 + $0x48] sm:$0xf]
    %v2633 = vld [vmem:[%s2613 + $0x4c] sm:$0xf]
    %v2634 = vld [vmem:[%s2613 + $0x50] sm:$0xf]
    %v2635 = vld [vmem:[%s2613 + $0x54] sm:$0xf]
    %v2636 = vld [vmem:[%s2613 + $0x58] sm:$0xf]
    %v2637 = vld [vmem:[%s2613 + $0x5c] sm:$0xf]
    %v2638 = vld [vmem:[%s2613 + $0x60] sm:$0xf]
    %v2639 = vld [vmem:[%s2613 + $0x64] sm:$0xf]
    %v2640 = vld [vmem:[%s2613 + $0x68] sm:$0xf]
    %v2641 = vld [vmem:[%s2613 + $0x6c] sm:$0xf]
    %v2642 = vld [vmem:[%s2613 + $0x70] sm:$0xf]
    %v2643 = vld [vmem:[%s2613 + $0x74] sm:$0xf]
    %v2644 = vld [vmem:[%s2613 + $0x78] sm:$0xf]
    %v2645 = vld [vmem:[%s2613 + $0x7c] sm:$0xf]
    %v2646 = vrot.slane %v2106, 3
    %v2647 = vrot.slane %v2108, 2
    %v2648 = vsel %vm705, %v2647, %v2646
    %v2649 = vrot.slane %v2107, 3
    %v2650 = vrot.slane %v2109, 2
    %v2651 = vsel %vm705, %v2650, %v2649
    %v2652 = vpack.c.b16 %v2648, %v2648
    %v2653 = vpack.c.b16 %v2651, %v2651
    %v2688 = vunpack.c.l.b16 %v2614
    %v2689 = vunpack.c.l.b16 %v2615
    %v2690 = vunpack.c.l.b16 %v2616
    %v2691 = vunpack.c.l.b16 %v2617
    %v2692 = vunpack.c.l.b16 %v2618
    %v2693 = vunpack.c.l.b16 %v2619
    %v2694 = vunpack.c.l.b16 %v2620
    %v2695 = vunpack.c.l.b16 %v2621
    %v2696 = vunpack.c.l.b16 %v2622
    %v2697 = vunpack.c.l.b16 %v2623
    %v2698 = vunpack.c.l.b16 %v2624
    %v2699 = vunpack.c.l.b16 %v2625
    %v2700 = vunpack.c.l.b16 %v2626
    %v2701 = vunpack.c.l.b16 %v2627
    %v2702 = vunpack.c.l.b16 %v2628
    %v2703 = vunpack.c.l.b16 %v2629
    %v2704 = vunpack.c.l.b16 %v2630
    %v2705 = vunpack.c.l.b16 %v2631
    %v2706 = vunpack.c.l.b16 %v2632
    %v2707 = vunpack.c.l.b16 %v2633
    %v2708 = vunpack.c.l.b16 %v2634
    %v2709 = vunpack.c.l.b16 %v2635
    %v2710 = vunpack.c.l.b16 %v2636
    %v2711 = vunpack.c.l.b16 %v2637
    %v2712 = vunpack.c.l.b16 %v2638
    %v2713 = vunpack.c.l.b16 %v2639
    %v2714 = vunpack.c.l.b16 %v2640
    %v2715 = vunpack.c.l.b16 %v2641
    %v2716 = vunpack.c.l.b16 %v2642
    %v2717 = vunpack.c.l.b16 %v2643
    %v2718 = vunpack.c.l.b16 %v2644
    %v2719 = vunpack.c.l.b16 %v2645
    %v2720 = vpack.c.b16 %v2689, %v2688
    %v2721 = vpack.c.b16 %v2691, %v2690
    %v2722 = vpack.c.b16 %v2693, %v2692
    %v2723 = vpack.c.b16 %v2695, %v2694
    %v2724 = vpack.c.b16 %v2697, %v2696
    %v2725 = vpack.c.b16 %v2699, %v2698
    %v2726 = vpack.c.b16 %v2701, %v2700
    %v2727 = vpack.c.b16 %v2703, %v2702
    %v2728 = vpack.c.b16 %v2705, %v2704
    %v2729 = vpack.c.b16 %v2707, %v2706
    %v2730 = vpack.c.b16 %v2709, %v2708
    %v2731 = vpack.c.b16 %v2711, %v2710
    %v2732 = vpack.c.b16 %v2713, %v2712
    %v2733 = vpack.c.b16 %v2715, %v2714
    %v2734 = vpack.c.b16 %v2717, %v2716
    %v2735 = vpack.c.b16 %v2719, %v2718
    %2752 = vmatprep.subr.bf16.mxu0 0
    %2753 = vmatpush1.bf16.msra.mxu0 %v2720
    %2754 = vmatprep.subr.bf16.mxu0 0
    %2755 = vmatpush1.bf16.msra.mxu0 %v2721
    %2756 = vmatprep.subr.bf16.mxu0 0
    %2757 = vmatpush1.bf16.msra.mxu0 %v2722
    %2758 = vmatprep.subr.bf16.mxu0 0
    %2759 = vmatpush1.bf16.msra.mxu0 %v2723
    %2760 = vmatprep.subr.bf16.mxu0 0
    %2761 = vmatpush1.bf16.msra.mxu0 %v2724
    %2762 = vmatprep.subr.bf16.mxu0 0
    %2763 = vmatpush1.bf16.msra.mxu0 %v2725
    %2764 = vmatprep.subr.bf16.mxu0 0
    %2765 = vmatpush1.bf16.msra.mxu0 %v2726
    %2766 = vmatprep.subr.bf16.mxu0 0
    %2767 = vmatpush1.bf16.msra.mxu0 %v2727
    %2768 = vmatprep.subr.bf16.mxu0 0
    %2769 = vmatpush1.bf16.msra.mxu0 %v2728
    %2770 = vmatprep.subr.bf16.mxu0 0
    %2771 = vmatpush1.bf16.msra.mxu0 %v2729
    %2772 = vmatprep.subr.bf16.mxu0 0
    %2773 = vmatpush1.bf16.msra.mxu0 %v2730
    %2774 = vmatprep.subr.bf16.mxu0 0
    %2775 = vmatpush1.bf16.msra.mxu0 %v2731
    %2776 = vmatprep.subr.bf16.mxu0 0
    %2777 = vmatpush1.bf16.msra.mxu0 %v2732
    %2778 = vmatprep.subr.bf16.mxu0 0
    %2779 = vmatpush1.bf16.msra.mxu0 %v2733
    %2780 = vmatprep.subr.bf16.mxu0 0
    %2781 = vmatpush1.bf16.msra.mxu0 %v2734
    %2782 = vmatprep.subr.bf16.mxu0 0
    %2783 = vmatpush1.bf16.msra.mxu0 %v2735
    %2784 = vmatprep.mubr.bf16.mxu0 %v2653
    %2785 = vmatmul.mubr.bf16.gmra.mrb[0].mxu0 %v2652
    %v2786 = vpop.f32.mrb[0].mxu0
    %v2787 = vadd.f32 0.0, %v2786
    %v2788 = vpop.f32.mrb[0].mxu0
    %v2789 = vpop.f32.mrb[0].mxu0
    %v2790 = vpop.f32.mrb[0].mxu0
    %2791 = vdwg.mxu0
    %v2792 = vadd.f32 %v2612, %v2787
    %s2793 = scalar_lea.vmem %s3, 1536
    %v2794 = vld [vmem:[%s2793] sm:$0xf]
    %v2795 = vld [vmem:[%s2793 + $0x4] sm:$0xf]
    %v2796 = vld [vmem:[%s2793 + $0x8] sm:$0xf]
    %v2797 = vld [vmem:[%s2793 + $0xc] sm:$0xf]
    %v2798 = vld [vmem:[%s2793 + $0x10] sm:$0xf]
    %v2799 = vld [vmem:[%s2793 + $0x14] sm:$0xf]
    %v2800 = vld [vmem:[%s2793 + $0x18] sm:$0xf]
    %v2801 = vld [vmem:[%s2793 + $0x1c] sm:$0xf]
    %v2802 = vld [vmem:[%s2793 + $0x20] sm:$0xf]
    %v2803 = vld [vmem:[%s2793 + $0x24] sm:$0xf]
    %v2804 = vld [vmem:[%s2793 + $0x28] sm:$0xf]
    %v2805 = vld [vmem:[%s2793 + $0x2c] sm:$0xf]
    %v2806 = vld [vmem:[%s2793 + $0x30] sm:$0xf]
    %v2807 = vld [vmem:[%s2793 + $0x34] sm:$0xf]
    %v2808 = vld [vmem:[%s2793 + $0x38] sm:$0xf]
    %v2809 = vld [vmem:[%s2793 + $0x3c] sm:$0xf]
    %v2810 = vld [vmem:[%s2793 + $0x40] sm:$0xf]
    %v2811 = vld [vmem:[%s2793 + $0x44] sm:$0xf]
    %v2812 = vld [vmem:[%s2793 + $0x48] sm:$0xf]
    %v2813 = vld [vmem:[%s2793 + $0x4c] sm:$0xf]
    %v2814 = vld [vmem:[%s2793 + $0x50] sm:$0xf]
    %v2815 = vld [vmem:[%s2793 + $0x54] sm:$0xf]
    %v2816 = vld [vmem:[%s2793 + $0x58] sm:$0xf]
    %v2817 = vld [vmem:[%s2793 + $0x5c] sm:$0xf]
    %v2818 = vld [vmem:[%s2793 + $0x60] sm:$0xf]
    %v2819 = vld [vmem:[%s2793 + $0x64] sm:$0xf]
    %v2820 = vld [vmem:[%s2793 + $0x68] sm:$0xf]
    %v2821 = vld [vmem:[%s2793 + $0x6c] sm:$0xf]
    %v2822 = vld [vmem:[%s2793 + $0x70] sm:$0xf]
    %v2823 = vld [vmem:[%s2793 + $0x74] sm:$0xf]
    %v2824 = vld [vmem:[%s2793 + $0x78] sm:$0xf]
    %v2825 = vld [vmem:[%s2793 + $0x7c] sm:$0xf]
    %v2826 = vrot.slane %v2106, 4
    %v2827 = vrot.slane %v2108, 3
    %v2828 = vsel %vm705, %v2827, %v2826
    %v2829 = vrot.slane %v2107, 4
    %v2830 = vrot.slane %v2109, 3
    %v2831 = vsel %vm705, %v2830, %v2829
    %v2832 = vpack.c.b16 %v2828, %v2828
    %v2833 = vpack.c.b16 %v2831, %v2831
    %v2868 = vunpack.c.l.b16 %v2794
    %v2869 = vunpack.c.l.b16 %v2795
    %v2870 = vunpack.c.l.b16 %v2796
    %v2871 = vunpack.c.l.b16 %v2797
    %v2872 = vunpack.c.l.b16 %v2798
    %v2873 = vunpack.c.l.b16 %v2799
    %v2874 = vunpack.c.l.b16 %v2800
    %v2875 = vunpack.c.l.b16 %v2801
    %v2876 = vunpack.c.l.b16 %v2802
    %v2877 = vunpack.c.l.b16 %v2803
    %v2878 = vunpack.c.l.b16 %v2804
    %v2879 = vunpack.c.l.b16 %v2805
    %v2880 = vunpack.c.l.b16 %v2806
    %v2881 = vunpack.c.l.b16 %v2807
    %v2882 = vunpack.c.l.b16 %v2808
    %v2883 = vunpack.c.l.b16 %v2809
    %v2884 = vunpack.c.l.b16 %v2810
    %v2885 = vunpack.c.l.b16 %v2811
    %v2886 = vunpack.c.l.b16 %v2812
    %v2887 = vunpack.c.l.b16 %v2813
    %v2888 = vunpack.c.l.b16 %v2814
    %v2889 = vunpack.c.l.b16 %v2815
    %v2890 = vunpack.c.l.b16 %v2816
    %v2891 = vunpack.c.l.b16 %v2817
    %v2892 = vunpack.c.l.b16 %v2818
    %v2893 = vunpack.c.l.b16 %v2819
    %v2894 = vunpack.c.l.b16 %v2820
    %v2895 = vunpack.c.l.b16 %v2821
    %v2896 = vunpack.c.l.b16 %v2822
    %v2897 = vunpack.c.l.b16 %v2823
    %v2898 = vunpack.c.l.b16 %v2824
    %v2899 = vunpack.c.l.b16 %v2825
    %v2900 = vpack.c.b16 %v2869, %v2868
    %v2901 = vpack.c.b16 %v2871, %v2870
    %v2902 = vpack.c.b16 %v2873, %v2872
    %v2903 = vpack.c.b16 %v2875, %v2874
    %v2904 = vpack.c.b16 %v2877, %v2876
    %v2905 = vpack.c.b16 %v2879, %v2878
    %v2906 = vpack.c.b16 %v2881, %v2880
    %v2907 = vpack.c.b16 %v2883, %v2882
    %v2908 = vpack.c.b16 %v2885, %v2884
    %v2909 = vpack.c.b16 %v2887, %v2886
    %v2910 = vpack.c.b16 %v2889, %v2888
    %v2911 = vpack.c.b16 %v2891, %v2890
    %v2912 = vpack.c.b16 %v2893, %v2892
    %v2913 = vpack.c.b16 %v2895, %v2894
    %v2914 = vpack.c.b16 %v2897, %v2896
    %v2915 = vpack.c.b16 %v2899, %v2898
    %2932 = vmatprep.subr.bf16.mxu0 0
    %2933 = vmatpush1.bf16.msra.mxu0 %v2900
    %2934 = vmatprep.subr.bf16.mxu0 0
    %2935 = vmatpush1.bf16.msra.mxu0 %v2901
    %2936 = vmatprep.subr.bf16.mxu0 0
    %2937 = vmatpush1.bf16.msra.mxu0 %v2902
    %2938 = vmatprep.subr.bf16.mxu0 0
    %2939 = vmatpush1.bf16.msra.mxu0 %v2903
    %2940 = vmatprep.subr.bf16.mxu0 0
    %2941 = vmatpush1.bf16.msra.mxu0 %v2904
    %2942 = vmatprep.subr.bf16.mxu0 0
    %2943 = vmatpush1.bf16.msra.mxu0 %v2905
    %2944 = vmatprep.subr.bf16.mxu0 0
    %2945 = vmatpush1.bf16.msra.mxu0 %v2906
    %2946 = vmatprep.subr.bf16.mxu0 0
    %2947 = vmatpush1.bf16.msra.mxu0 %v2907
    %2948 = vmatprep.subr.bf16.mxu0 0
    %2949 = vmatpush1.bf16.msra.mxu0 %v2908
    %2950 = vmatprep.subr.bf16.mxu0 0
    %2951 = vmatpush1.bf16.msra.mxu0 %v2909
    %2952 = vmatprep.subr.bf16.mxu0 0
    %2953 = vmatpush1.bf16.msra.mxu0 %v2910
    %2954 = vmatprep.subr.bf16.mxu0 0
    %2955 = vmatpush1.bf16.msra.mxu0 %v2911
    %2956 = vmatprep.subr.bf16.mxu0 0
    %2957 = vmatpush1.bf16.msra.mxu0 %v2912
    %2958 = vmatprep.subr.bf16.mxu0 0
    %2959 = vmatpush1.bf16.msra.mxu0 %v2913
    %2960 = vmatprep.subr.bf16.mxu0 0
    %2961 = vmatpush1.bf16.msra.mxu0 %v2914
    %2962 = vmatprep.subr.bf16.mxu0 0
    %2963 = vmatpush1.bf16.msra.mxu0 %v2915
    %2964 = vmatprep.mubr.bf16.mxu0 %v2833
    %2965 = vmatmul.mubr.bf16.gmra.mrb[0].mxu0 %v2832
    %v2966 = vpop.f32.mrb[0].mxu0
    %v2967 = vadd.f32 0.0, %v2966
    %v2968 = vpop.f32.mrb[0].mxu0
    %v2969 = vpop.f32.mrb[0].mxu0
    %v2970 = vpop.f32.mrb[0].mxu0
    %2971 = vdwg.mxu0
    %v2972 = vadd.f32 %v2792, %v2967
    %s2973 = scalar_lea.vmem %s3, 1664
    %v2974 = vld [vmem:[%s2973] sm:$0xf]
    %v2975 = vld [vmem:[%s2973 + $0x4] sm:$0xf]
    %v2976 = vld [vmem:[%s2973 + $0x8] sm:$0xf]
    %v2977 = vld [vmem:[%s2973 + $0xc] sm:$0xf]
    %v2978 = vld [vmem:[%s2973 + $0x10] sm:$0xf]
    %v2979 = vld [vmem:[%s2973 + $0x14] sm:$0xf]
    %v2980 = vld [vmem:[%s2973 + $0x18] sm:$0xf]
    %v2981 = vld [vmem:[%s2973 + $0x1c] sm:$0xf]
    %v2982 = vld [vmem:[%s2973 + $0x20] sm:$0xf]
    %v2983 = vld [vmem:[%s2973 + $0x24] sm:$0xf]
    %v2984 = vld [vmem:[%s2973 + $0x28] sm:$0xf]
    %v2985 = vld [vmem:[%s2973 + $0x2c] sm:$0xf]
    %v2986 = vld [vmem:[%s2973 + $0x30] sm:$0xf]
    %v2987 = vld [vmem:[%s2973 + $0x34] sm:$0xf]
    %v2988 = vld [vmem:[%s2973 + $0x38] sm:$0xf]
    %v2989 = vld [vmem:[%s2973 + $0x3c] sm:$0xf]
    %v2990 = vld [vmem:[%s2973 + $0x40] sm:$0xf]
    %v2991 = vld [vmem:[%s2973 + $0x44] sm:$0xf]
    %v2992 = vld [vmem:[%s2973 + $0x48] sm:$0xf]
    %v2993 = vld [vmem:[%s2973 + $0x4c] sm:$0xf]
    %v2994 = vld [vmem:[%s2973 + $0x50] sm:$0xf]
    %v2995 = vld [vmem:[%s2973 + $0x54] sm:$0xf]
    %v2996 = vld [vmem:[%s2973 + $0x58] sm:$0xf]
    %v2997 = vld [vmem:[%s2973 + $0x5c] sm:$0xf]
    %v2998 = vld [vmem:[%s2973 + $0x60] sm:$0xf]
    %v2999 = vld [vmem:[%s2973 + $0x64] sm:$0xf]
    %v3000 = vld [vmem:[%s2973 + $0x68] sm:$0xf]
    %v3001 = vld [vmem:[%s2973 + $0x6c] sm:$0xf]
    %v3002 = vld [vmem:[%s2973 + $0x70] sm:$0xf]
    %v3003 = vld [vmem:[%s2973 + $0x74] sm:$0xf]
    %v3004 = vld [vmem:[%s2973 + $0x78] sm:$0xf]
    %v3005 = vld [vmem:[%s2973 + $0x7c] sm:$0xf]
    %v3006 = vrot.slane %v2106, 5
    %v3007 = vrot.slane %v2108, 4
    %v3008 = vsel %vm705, %v3007, %v3006
    %v3009 = vrot.slane %v2107, 5
    %v3010 = vrot.slane %v2109, 4
    %v3011 = vsel %vm705, %v3010, %v3009
    %v3012 = vpack.c.b16 %v3008, %v3008
    %v3013 = vpack.c.b16 %v3011, %v3011
    %v3048 = vunpack.c.l.b16 %v2974
    %v3049 = vunpack.c.l.b16 %v2975
    %v3050 = vunpack.c.l.b16 %v2976
    %v3051 = vunpack.c.l.b16 %v2977
    %v3052 = vunpack.c.l.b16 %v2978
    %v3053 = vunpack.c.l.b16 %v2979
    %v3054 = vunpack.c.l.b16 %v2980
    %v3055 = vunpack.c.l.b16 %v2981
    %v3056 = vunpack.c.l.b16 %v2982
    %v3057 = vunpack.c.l.b16 %v2983
    %v3058 = vunpack.c.l.b16 %v2984
    %v3059 = vunpack.c.l.b16 %v2985
    %v3060 = vunpack.c.l.b16 %v2986
    %v3061 = vunpack.c.l.b16 %v2987
    %v3062 = vunpack.c.l.b16 %v2988
    %v3063 = vunpack.c.l.b16 %v2989
    %v3064 = vunpack.c.l.b16 %v2990
    %v3065 = vunpack.c.l.b16 %v2991
    %v3066 = vunpack.c.l.b16 %v2992
    %v3067 = vunpack.c.l.b16 %v2993
    %v3068 = vunpack.c.l.b16 %v2994
    %v3069 = vunpack.c.l.b16 %v2995
    %v3070 = vunpack.c.l.b16 %v2996
    %v3071 = vunpack.c.l.b16 %v2997
    %v3072 = vunpack.c.l.b16 %v2998
    %v3073 = vunpack.c.l.b16 %v2999
    %v3074 = vunpack.c.l.b16 %v3000
    %v3075 = vunpack.c.l.b16 %v3001
    %v3076 = vunpack.c.l.b16 %v3002
    %v3077 = vunpack.c.l.b16 %v3003
    %v3078 = vunpack.c.l.b16 %v3004
    %v3079 = vunpack.c.l.b16 %v3005
    %v3080 = vpack.c.b16 %v3049, %v3048
    %v3081 = vpack.c.b16 %v3051, %v3050
    %v3082 = vpack.c.b16 %v3053, %v3052
    %v3083 = vpack.c.b16 %v3055, %v3054
    %v3084 = vpack.c.b16 %v3057, %v3056
    %v3085 = vpack.c.b16 %v3059, %v3058
    %v3086 = vpack.c.b16 %v3061, %v3060
    %v3087 = vpack.c.b16 %v3063, %v3062
    %v3088 = vpack.c.b16 %v3065, %v3064
    %v3089 = vpack.c.b16 %v3067, %v3066
    %v3090 = vpack.c.b16 %v3069, %v3068
    %v3091 = vpack.c.b16 %v3071, %v3070
    %v3092 = vpack.c.b16 %v3073, %v3072
    %v3093 = vpack.c.b16 %v3075, %v3074
    %v3094 = vpack.c.b16 %v3077, %v3076
    %v3095 = vpack.c.b16 %v3079, %v3078
    %3112 = vmatprep.subr.bf16.mxu0 0
    %3113 = vmatpush1.bf16.msra.mxu0 %v3080
    %3114 = vmatprep.subr.bf16.mxu0 0
    %3115 = vmatpush1.bf16.msra.mxu0 %v3081
    %3116 = vmatprep.subr.bf16.mxu0 0
    %3117 = vmatpush1.bf16.msra.mxu0 %v3082
    %3118 = vmatprep.subr.bf16.mxu0 0
    %3119 = vmatpush1.bf16.msra.mxu0 %v3083
    %3120 = vmatprep.subr.bf16.mxu0 0
    %3121 = vmatpush1.bf16.msra.mxu0 %v3084
    %3122 = vmatprep.subr.bf16.mxu0 0
    %3123 = vmatpush1.bf16.msra.mxu0 %v3085
    %3124 = vmatprep.subr.bf16.mxu0 0
    %3125 = vmatpush1.bf16.msra.mxu0 %v3086
    %3126 = vmatprep.subr.bf16.mxu0 0
    %3127 = vmatpush1.bf16.msra.mxu0 %v3087
    %3128 = vmatprep.subr.bf16.mxu0 0
    %3129 = vmatpush1.bf16.msra.mxu0 %v3088
    %3130 = vmatprep.subr.bf16.mxu0 0
    %3131 = vmatpush1.bf16.msra.mxu0 %v3089
    %3132 = vmatprep.subr.bf16.mxu0 0
    %3133 = vmatpush1.bf16.msra.mxu0 %v3090
    %3134 = vmatprep.subr.bf16.mxu0 0
    %3135 = vmatpush1.bf16.msra.mxu0 %v3091
    %3136 = vmatprep.subr.bf16.mxu0 0
    %3137 = vmatpush1.bf16.msra.mxu0 %v3092
    %3138 = vmatprep.subr.bf16.mxu0 0
    %3139 = vmatpush1.bf16.msra.mxu0 %v3093
    %3140 = vmatprep.subr.bf16.mxu0 0
    %3141 = vmatpush1.bf16.msra.mxu0 %v3094
    %3142 = vmatprep.subr.bf16.mxu0 0
    %3143 = vmatpush1.bf16.msra.mxu0 %v3095
    %3144 = vmatprep.mubr.bf16.mxu0 %v3013
    %3145 = vmatmul.mubr.bf16.gmra.mrb[0].mxu0 %v3012
    %v3146 = vpop.f32.mrb[0].mxu0
    %v3147 = vadd.f32 0.0, %v3146
    %v3148 = vpop.f32.mrb[0].mxu0
    %v3149 = vpop.f32.mrb[0].mxu0
    %v3150 = vpop.f32.mrb[0].mxu0
    %3151 = vdwg.mxu0
    %v3152 = vadd.f32 %v2972, %v3147
    %s3153 = scalar_lea.vmem %s3, 1792
    %v3154 = vld [vmem:[%s3153] sm:$0xf]
    %v3155 = vld [vmem:[%s3153 + $0x4] sm:$0xf]
    %v3156 = vld [vmem:[%s3153 + $0x8] sm:$0xf]
    %v3157 = vld [vmem:[%s3153 + $0xc] sm:$0xf]
    %v3158 = vld [vmem:[%s3153 + $0x10] sm:$0xf]
    %v3159 = vld [vmem:[%s3153 + $0x14] sm:$0xf]
    %v3160 = vld [vmem:[%s3153 + $0x18] sm:$0xf]
    %v3161 = vld [vmem:[%s3153 + $0x1c] sm:$0xf]
    %v3162 = vld [vmem:[%s3153 + $0x20] sm:$0xf]
    %v3163 = vld [vmem:[%s3153 + $0x24] sm:$0xf]
    %v3164 = vld [vmem:[%s3153 + $0x28] sm:$0xf]
    %v3165 = vld [vmem:[%s3153 + $0x2c] sm:$0xf]
    %v3166 = vld [vmem:[%s3153 + $0x30] sm:$0xf]
    %v3167 = vld [vmem:[%s3153 + $0x34] sm:$0xf]
    %v3168 = vld [vmem:[%s3153 + $0x38] sm:$0xf]
    %v3169 = vld [vmem:[%s3153 + $0x3c] sm:$0xf]
    %v3170 = vld [vmem:[%s3153 + $0x40] sm:$0xf]
    %v3171 = vld [vmem:[%s3153 + $0x44] sm:$0xf]
    %v3172 = vld [vmem:[%s3153 + $0x48] sm:$0xf]
    %v3173 = vld [vmem:[%s3153 + $0x4c] sm:$0xf]
    %v3174 = vld [vmem:[%s3153 + $0x50] sm:$0xf]
    %v3175 = vld [vmem:[%s3153 + $0x54] sm:$0xf]
    %v3176 = vld [vmem:[%s3153 + $0x58] sm:$0xf]
    %v3177 = vld [vmem:[%s3153 + $0x5c] sm:$0xf]
    %v3178 = vld [vmem:[%s3153 + $0x60] sm:$0xf]
    %v3179 = vld [vmem:[%s3153 + $0x64] sm:$0xf]
    %v3180 = vld [vmem:[%s3153 + $0x68] sm:$0xf]
    %v3181 = vld [vmem:[%s3153 + $0x6c] sm:$0xf]
    %v3182 = vld [vmem:[%s3153 + $0x70] sm:$0xf]
    %v3183 = vld [vmem:[%s3153 + $0x74] sm:$0xf]
    %v3184 = vld [vmem:[%s3153 + $0x78] sm:$0xf]
    %v3185 = vld [vmem:[%s3153 + $0x7c] sm:$0xf]
    %v3186 = vrot.slane %v2106, 6
    %v3187 = vrot.slane %v2108, 5
    %v3188 = vsel %vm705, %v3187, %v3186
    %v3189 = vrot.slane %v2107, 6
    %v3190 = vrot.slane %v2109, 5
    %v3191 = vsel %vm705, %v3190, %v3189
    %v3192 = vpack.c.b16 %v3188, %v3188
    %v3193 = vpack.c.b16 %v3191, %v3191
    %v3228 = vunpack.c.l.b16 %v3154
    %v3229 = vunpack.c.l.b16 %v3155
    %v3230 = vunpack.c.l.b16 %v3156
    %v3231 = vunpack.c.l.b16 %v3157
    %v3232 = vunpack.c.l.b16 %v3158
    %v3233 = vunpack.c.l.b16 %v3159
    %v3234 = vunpack.c.l.b16 %v3160
    %v3235 = vunpack.c.l.b16 %v3161
    %v3236 = vunpack.c.l.b16 %v3162
    %v3237 = vunpack.c.l.b16 %v3163
    %v3238 = vunpack.c.l.b16 %v3164
    %v3239 = vunpack.c.l.b16 %v3165
    %v3240 = vunpack.c.l.b16 %v3166
    %v3241 = vunpack.c.l.b16 %v3167
    %v3242 = vunpack.c.l.b16 %v3168
    %v3243 = vunpack.c.l.b16 %v3169
    %v3244 = vunpack.c.l.b16 %v3170
    %v3245 = vunpack.c.l.b16 %v3171
    %v3246 = vunpack.c.l.b16 %v3172
    %v3247 = vunpack.c.l.b16 %v3173
    %v3248 = vunpack.c.l.b16 %v3174
    %v3249 = vunpack.c.l.b16 %v3175
    %v3250 = vunpack.c.l.b16 %v3176
    %v3251 = vunpack.c.l.b16 %v3177
    %v3252 = vunpack.c.l.b16 %v3178
    %v3253 = vunpack.c.l.b16 %v3179
    %v3254 = vunpack.c.l.b16 %v3180
    %v3255 = vunpack.c.l.b16 %v3181
    %v3256 = vunpack.c.l.b16 %v3182
    %v3257 = vunpack.c.l.b16 %v3183
    %v3258 = vunpack.c.l.b16 %v3184
    %v3259 = vunpack.c.l.b16 %v3185
    %v3260 = vpack.c.b16 %v3229, %v3228
    %v3261 = vpack.c.b16 %v3231, %v3230
    %v3262 = vpack.c.b16 %v3233, %v3232
    %v3263 = vpack.c.b16 %v3235, %v3234
    %v3264 = vpack.c.b16 %v3237, %v3236
    %v3265 = vpack.c.b16 %v3239, %v3238
    %v3266 = vpack.c.b16 %v3241, %v3240
    %v3267 = vpack.c.b16 %v3243, %v3242
    %v3268 = vpack.c.b16 %v3245, %v3244
    %v3269 = vpack.c.b16 %v3247, %v3246
    %v3270 = vpack.c.b16 %v3249, %v3248
    %v3271 = vpack.c.b16 %v3251, %v3250
    %v3272 = vpack.c.b16 %v3253, %v3252
    %v3273 = vpack.c.b16 %v3255, %v3254
    %v3274 = vpack.c.b16 %v3257, %v3256
    %v3275 = vpack.c.b16 %v3259, %v3258
    %3292 = vmatprep.subr.bf16.mxu0 0
    %3293 = vmatpush1.bf16.msra.mxu0 %v3260
    %3294 = vmatprep.subr.bf16.mxu0 0
    %3295 = vmatpush1.bf16.msra.mxu0 %v3261
    %3296 = vmatprep.subr.bf16.mxu0 0
    %3297 = vmatpush1.bf16.msra.mxu0 %v3262
    %3298 = vmatprep.subr.bf16.mxu0 0
    %3299 = vmatpush1.bf16.msra.mxu0 %v3263
    %3300 = vmatprep.subr.bf16.mxu0 0
    %3301 = vmatpush1.bf16.msra.mxu0 %v3264
    %3302 = vmatprep.subr.bf16.mxu0 0
    %3303 = vmatpush1.bf16.msra.mxu0 %v3265
    %3304 = vmatprep.subr.bf16.mxu0 0
    %3305 = vmatpush1.bf16.msra.mxu0 %v3266
    %3306 = vmatprep.subr.bf16.mxu0 0
    %3307 = vmatpush1.bf16.msra.mxu0 %v3267
    %3308 = vmatprep.subr.bf16.mxu0 0
    %3309 = vmatpush1.bf16.msra.mxu0 %v3268
    %3310 = vmatprep.subr.bf16.mxu0 0
    %3311 = vmatpush1.bf16.msra.mxu0 %v3269
    %3312 = vmatprep.subr.bf16.mxu0 0
    %3313 = vmatpush1.bf16.msra.mxu0 %v3270
    %3314 = vmatprep.subr.bf16.mxu0 0
    %3315 = vmatpush1.bf16.msra.mxu0 %v3271
    %3316 = vmatprep.subr.bf16.mxu0 0
    %3317 = vmatpush1.bf16.msra.mxu0 %v3272
    %3318 = vmatprep.subr.bf16.mxu0 0
    %3319 = vmatpush1.bf16.msra.mxu0 %v3273
    %3320 = vmatprep.subr.bf16.mxu0 0
    %3321 = vmatpush1.bf16.msra.mxu0 %v3274
    %3322 = vmatprep.subr.bf16.mxu0 0
    %3323 = vmatpush1.bf16.msra.mxu0 %v3275
    %3324 = vmatprep.mubr.bf16.mxu0 %v3193
    %3325 = vmatmul.mubr.bf16.gmra.mrb[0].mxu0 %v3192
    %v3326 = vpop.f32.mrb[0].mxu0
    %v3327 = vadd.f32 0.0, %v3326
    %v3328 = vpop.f32.mrb[0].mxu0
    %v3329 = vpop.f32.mrb[0].mxu0
    %v3330 = vpop.f32.mrb[0].mxu0
    %3331 = vdwg.mxu0
    %v3332 = vadd.f32 %v3152, %v3327
    %s3333 = scalar_lea.vmem %s3, 1920
    %v3334 = vld [vmem:[%s3333] sm:$0xf]
    %v3335 = vld [vmem:[%s3333 + $0x4] sm:$0xf]
    %v3336 = vld [vmem:[%s3333 + $0x8] sm:$0xf]
    %v3337 = vld [vmem:[%s3333 + $0xc] sm:$0xf]
    %v3338 = vld [vmem:[%s3333 + $0x10] sm:$0xf]
    %v3339 = vld [vmem:[%s3333 + $0x14] sm:$0xf]
    %v3340 = vld [vmem:[%s3333 + $0x18] sm:$0xf]
    %v3341 = vld [vmem:[%s3333 + $0x1c] sm:$0xf]
    %v3342 = vld [vmem:[%s3333 + $0x20] sm:$0xf]
    %v3343 = vld [vmem:[%s3333 + $0x24] sm:$0xf]
    %v3344 = vld [vmem:[%s3333 + $0x28] sm:$0xf]
    %v3345 = vld [vmem:[%s3333 + $0x2c] sm:$0xf]
    %v3346 = vld [vmem:[%s3333 + $0x30] sm:$0xf]
    %v3347 = vld [vmem:[%s3333 + $0x34] sm:$0xf]
    %v3348 = vld [vmem:[%s3333 + $0x38] sm:$0xf]
    %v3349 = vld [vmem:[%s3333 + $0x3c] sm:$0xf]
    %v3350 = vld [vmem:[%s3333 + $0x40] sm:$0xf]
    %v3351 = vld [vmem:[%s3333 + $0x44] sm:$0xf]
    %v3352 = vld [vmem:[%s3333 + $0x48] sm:$0xf]
    %v3353 = vld [vmem:[%s3333 + $0x4c] sm:$0xf]
    %v3354 = vld [vmem:[%s3333 + $0x50] sm:$0xf]
    %v3355 = vld [vmem:[%s3333 + $0x54] sm:$0xf]
    %v3356 = vld [vmem:[%s3333 + $0x58] sm:$0xf]
    %v3357 = vld [vmem:[%s3333 + $0x5c] sm:$0xf]
    %v3358 = vld [vmem:[%s3333 + $0x60] sm:$0xf]
    %v3359 = vld [vmem:[%s3333 + $0x64] sm:$0xf]
    %v3360 = vld [vmem:[%s3333 + $0x68] sm:$0xf]
    %v3361 = vld [vmem:[%s3333 + $0x6c] sm:$0xf]
    %v3362 = vld [vmem:[%s3333 + $0x70] sm:$0xf]
    %v3363 = vld [vmem:[%s3333 + $0x74] sm:$0xf]
    %v3364 = vld [vmem:[%s3333 + $0x78] sm:$0xf]
    %v3365 = vld [vmem:[%s3333 + $0x7c] sm:$0xf]
    %v3366 = vrot.slane %v2106, 7
    %v3367 = vrot.slane %v2108, 6
    %v3368 = vsel %vm705, %v3367, %v3366
    %v3369 = vrot.slane %v2107, 7
    %v3370 = vrot.slane %v2109, 6
    %v3371 = vsel %vm705, %v3370, %v3369
    %v3372 = vpack.c.b16 %v3368, %v3368
    %v3373 = vpack.c.b16 %v3371, %v3371
    %v3408 = vunpack.c.l.b16 %v3334
    %v3409 = vunpack.c.l.b16 %v3335
    %v3410 = vunpack.c.l.b16 %v3336
    %v3411 = vunpack.c.l.b16 %v3337
    %v3412 = vunpack.c.l.b16 %v3338
    %v3413 = vunpack.c.l.b16 %v3339
    %v3414 = vunpack.c.l.b16 %v3340
    %v3415 = vunpack.c.l.b16 %v3341
    %v3416 = vunpack.c.l.b16 %v3342
    %v3417 = vunpack.c.l.b16 %v3343
    %v3418 = vunpack.c.l.b16 %v3344
    %v3419 = vunpack.c.l.b16 %v3345
    %v3420 = vunpack.c.l.b16 %v3346
    %v3421 = vunpack.c.l.b16 %v3347
    %v3422 = vunpack.c.l.b16 %v3348
    %v3423 = vunpack.c.l.b16 %v3349
    %v3424 = vunpack.c.l.b16 %v3350
    %v3425 = vunpack.c.l.b16 %v3351
    %v3426 = vunpack.c.l.b16 %v3352
    %v3427 = vunpack.c.l.b16 %v3353
    %v3428 = vunpack.c.l.b16 %v3354
    %v3429 = vunpack.c.l.b16 %v3355
    %v3430 = vunpack.c.l.b16 %v3356
    %v3431 = vunpack.c.l.b16 %v3357
    %v3432 = vunpack.c.l.b16 %v3358
    %v3433 = vunpack.c.l.b16 %v3359
    %v3434 = vunpack.c.l.b16 %v3360
    %v3435 = vunpack.c.l.b16 %v3361
    %v3436 = vunpack.c.l.b16 %v3362
    %v3437 = vunpack.c.l.b16 %v3363
    %v3438 = vunpack.c.l.b16 %v3364
    %v3439 = vunpack.c.l.b16 %v3365
    %v3440 = vpack.c.b16 %v3409, %v3408
    %v3441 = vpack.c.b16 %v3411, %v3410
    %v3442 = vpack.c.b16 %v3413, %v3412
    %v3443 = vpack.c.b16 %v3415, %v3414
    %v3444 = vpack.c.b16 %v3417, %v3416
    %v3445 = vpack.c.b16 %v3419, %v3418
    %v3446 = vpack.c.b16 %v3421, %v3420
    %v3447 = vpack.c.b16 %v3423, %v3422
    %v3448 = vpack.c.b16 %v3425, %v3424
    %v3449 = vpack.c.b16 %v3427, %v3426
    %v3450 = vpack.c.b16 %v3429, %v3428
    %v3451 = vpack.c.b16 %v3431, %v3430
    %v3452 = vpack.c.b16 %v3433, %v3432
    %v3453 = vpack.c.b16 %v3435, %v3434
    %v3454 = vpack.c.b16 %v3437, %v3436
    %v3455 = vpack.c.b16 %v3439, %v3438
    %3472 = vmatprep.subr.bf16.mxu0 0
    %3473 = vmatpush1.bf16.msra.mxu0 %v3440
    %3474 = vmatprep.subr.bf16.mxu0 0
    %3475 = vmatpush1.bf16.msra.mxu0 %v3441
    %3476 = vmatprep.subr.bf16.mxu0 0
    %3477 = vmatpush1.bf16.msra.mxu0 %v3442
    %3478 = vmatprep.subr.bf16.mxu0 0
    %3479 = vmatpush1.bf16.msra.mxu0 %v3443
    %3480 = vmatprep.subr.bf16.mxu0 0
    %3481 = vmatpush1.bf16.msra.mxu0 %v3444
    %3482 = vmatprep.subr.bf16.mxu0 0
    %3483 = vmatpush1.bf16.msra.mxu0 %v3445
    %3484 = vmatprep.subr.bf16.mxu0 0
    %3485 = vmatpush1.bf16.msra.mxu0 %v3446
    %3486 = vmatprep.subr.bf16.mxu0 0
    %3487 = vmatpush1.bf16.msra.mxu0 %v3447
    %3488 = vmatprep.subr.bf16.mxu0 0
    %3489 = vmatpush1.bf16.msra.mxu0 %v3448
    %3490 = vmatprep.subr.bf16.mxu0 0
    %3491 = vmatpush1.bf16.msra.mxu0 %v3449
    %3492 = vmatprep.subr.bf16.mxu0 0
    %3493 = vmatpush1.bf16.msra.mxu0 %v3450
    %3494 = vmatprep.subr.bf16.mxu0 0
    %3495 = vmatpush1.bf16.msra.mxu0 %v3451
    %3496 = vmatprep.subr.bf16.mxu0 0
    %3497 = vmatpush1.bf16.msra.mxu0 %v3452
    %3498 = vmatprep.subr.bf16.mxu0 0
    %3499 = vmatpush1.bf16.msra.mxu0 %v3453
    %3500 = vmatprep.subr.bf16.mxu0 0
    %3501 = vmatpush1.bf16.msra.mxu0 %v3454
    %3502 = vmatprep.subr.bf16.mxu0 0
    %3503 = vmatpush1.bf16.msra.mxu0 %v3455
    %3504 = vmatprep.mubr.bf16.mxu0 %v3373
    %3505 = vmatmul.mubr.bf16.gmra.mrb[0].mxu0 %v3372
    %v3506 = vpop.f32.mrb[0].mxu0
    %v3507 = vadd.f32 0.0, %v3506
    %v3508 = vpop.f32.mrb[0].mxu0
    %v3509 = vpop.f32.mrb[0].mxu0
    %v3510 = vpop.f32.mrb[0].mxu0
    %3511 = vdwg.mxu0
    %v3512 = vadd.f32 %v3332, %v3507
    %v3513 = vld [vmem:[%s4] sm:$0x1]
    %v3515 = vlaneseq
    %v3516 = vshrl.u32 %v3515, 7
    %v3517 = vsub.s32 0, %v3516
    %v3518 = vrot.slane %v3513, %v3517
    %v3520 = vadd.f32 %v3512, %v3518
    %v3521 = vpack.c.bf16 %v3520, %v3520
    %v3522 = vld [vmem:[%s5] sm:$0xf]
    %v3523 = vld [vmem:[%s5 + $0x4] sm:$0xf]
    %v3524 = vld [vmem:[%s5 + $0x8] sm:$0xf]
    %v3525 = vld [vmem:[%s5 + $0xc] sm:$0xf]
    %v3526 = vld [vmem:[%s5 + $0x10] sm:$0xf]
    %v3527 = vld [vmem:[%s5 + $0x14] sm:$0xf]
    %v3528 = vld [vmem:[%s5 + $0x18] sm:$0xf]
    %v3529 = vld [vmem:[%s5 + $0x1c] sm:$0xf]
    %v3530 = vld [vmem:[%s5 + $0x20] sm:$0xf]
    %v3531 = vld [vmem:[%s5 + $0x24] sm:$0xf]
    %v3532 = vld [vmem:[%s5 + $0x28] sm:$0xf]
    %v3533 = vld [vmem:[%s5 + $0x2c] sm:$0xf]
    %v3534 = vld [vmem:[%s5 + $0x30] sm:$0xf]
    %v3535 = vld [vmem:[%s5 + $0x34] sm:$0xf]
    %v3536 = vld [vmem:[%s5 + $0x38] sm:$0xf]
    %v3537 = vld [vmem:[%s5 + $0x3c] sm:$0xf]
    %v3538 = vld [vmem:[%s6] sm:$0x1]
    %v3540 = vlaneseq
    %v3541 = vshrl.u32 %v3540, 7
    %v3542 = vsub.s32 0, %v3541
    %v3543 = vrot.slane %v3538, %v3542
    %v3561 = vunpack.c.l.b16 %v3522
    %v3562 = vunpack.c.l.b16 %v3523
    %v3563 = vunpack.c.l.b16 %v3524
    %v3564 = vunpack.c.l.b16 %v3525
    %v3565 = vunpack.c.l.b16 %v3526
    %v3566 = vunpack.c.l.b16 %v3527
    %v3567 = vunpack.c.l.b16 %v3528
    %v3568 = vunpack.c.l.b16 %v3529
    %v3569 = vunpack.c.l.b16 %v3530
    %v3570 = vunpack.c.l.b16 %v3531
    %v3571 = vunpack.c.l.b16 %v3532
    %v3572 = vunpack.c.l.b16 %v3533
    %v3573 = vunpack.c.l.b16 %v3534
    %v3574 = vunpack.c.l.b16 %v3535
    %v3575 = vunpack.c.l.b16 %v3536
    %v3576 = vunpack.c.l.b16 %v3537
    %v3577 = vpack.c.b16 %v3562, %v3561
    %v3578 = vpack.c.b16 %v3564, %v3563
    %v3579 = vpack.c.b16 %v3566, %v3565
    %v3580 = vpack.c.b16 %v3568, %v3567
    %v3581 = vpack.c.b16 %v3570, %v3569
    %v3582 = vpack.c.b16 %v3572, %v3571
    %v3583 = vpack.c.b16 %v3574, %v3573
    %v3584 = vpack.c.b16 %v3576, %v3575
    %3593 = vmatprep.subr.bf16.mxu0 0
    %3594 = vmatpush1.bf16.msra.mxu0 %v3577
    %3595 = vmatprep.subr.bf16.mxu0 0
    %3596 = vmatpush1.bf16.msra.mxu0 %v3578
    %3597 = vmatprep.subr.bf16.mxu0 0
    %3598 = vmatpush1.bf16.msra.mxu0 %v3579
    %3599 = vmatprep.subr.bf16.mxu0 0
    %3600 = vmatpush1.bf16.msra.mxu0 %v3580
    %3601 = vmatprep.subr.bf16.mxu0 0
    %3602 = vmatpush1.bf16.msra.mxu0 %v3581
    %3603 = vmatprep.subr.bf16.mxu0 0
    %3604 = vmatpush1.bf16.msra.mxu0 %v3582
    %3605 = vmatprep.subr.bf16.mxu0 0
    %3606 = vmatpush1.bf16.msra.mxu0 %v3583
    %3607 = vmatprep.subr.bf16.mxu0 0
    %3608 = vmatpush1.bf16.msra.mxu0 %v3584
    %3609 = vmatprep.subr.bf16.mxu0 0
    %3610 = vmatpush1.bf16.msra.mxu0 0
    %3611 = vmatprep.subr.bf16.mxu0 0
    %3612 = vmatpush1.bf16.msra.mxu0 0
    %3613 = vmatprep.subr.bf16.mxu0 0
    %3614 = vmatpush1.bf16.msra.mxu0 0
    %3615 = vmatprep.subr.bf16.mxu0 0
    %3616 = vmatpush1.bf16.msra.mxu0 0
    %3617 = vmatprep.subr.bf16.mxu0 0
    %3618 = vmatpush1.bf16.msra.mxu0 0
    %3619 = vmatprep.subr.bf16.mxu0 0
    %3620 = vmatpush1.bf16.msra.mxu0 0
    %3621 = vmatprep.subr.bf16.mxu0 0
    %3622 = vmatpush1.bf16.msra.mxu0 0
    %3623 = vmatprep.subr.bf16.mxu0 0
    %3624 = vmatpush1.bf16.msra.mxu0 0
    %3625 = vmatprep.mubr.bf16.mxu0 0
    %3626 = vmatmul.mubr.bf16.gmra.mrb[0].mxu0 %v3521
    %v3627 = vpop.f32.mrb[0].mxu0
    %v3628 = vadd.f32 %v3543, %v3627
    %v3629 = vpop.f32.mrb[0].mxu0
    %v3630 = vpop.f32.mrb[0].mxu0
    %v3631 = vpop.f32.mrb[0].mxu0
    %3632 = vdwg.mxu0
    %vm3633 = vcmask 1041408
    %v3634 = vsel %vm3633, %v3628, -inf
    %3635 = vmax.xlane.f32.xlu0 %v3634
    %v3636 = vpop.xlane.xlu0 %3635
    %v3637 = vsub.f32 %v3628, %v3636
    %v3638 = vmul.f32 %v3637, 1.442695
    %v3639 = vpow.pop %v3638
    %v3640 = vsel %vm3633, %v3639, 0.0
    %3641 = vadd.xlane.f32.xlu0 %v3640
    %v3642 = vpop.xlane.xlu0 %3641
    %v3643 = vrcp.pop %v3642
    %v3644 = vmul.f32 %v3639, %v3643
    %3645 = vst [vmem:[#allocation2] sm:$0x3] %v3644
    // Predicated region
    $region30: #{cifar_model15_forward.1} parent=1 // pred_check
      _
    $region31: #{cifar_model15_forward.1} parent=1 // pred_check_branch
      %3647 = sbr.rel (0) target = $region33
    $region32: #{cifar_model15_forward.1} parent=1 // pred_region
      %s3649 = ssub.s32 32, 32
      %3650 = vsyncadd [#allocation3], %s3649
      %s3652 = sshll.u32 [#allocation2], 4
      %s3653 = int_to_ptr.vmem [resolvable:$true] %s3652
      %3655 = dma.vmem_to_hbm [thread:$0]  %s3653, 32, %s7, [#allocation3]
    $region33: #{cifar_model15_forward.1} parent=1 // pred_fallthru
      _
    // Predicated region
    $region34: #{cifar_model15_forward.1} parent=1 // pred_check
      _
    $region35: #{cifar_model15_forward.1} parent=1 // pred_check_branch
      %3657 = sbr.rel (0) target = $region37
    $region36: #{cifar_model15_forward.1} parent=1 // pred_region
      %3658 = dma.done [#allocation3], 32
    $region37: #{cifar_model15_forward.1} parent=1 // pred_fallthru
      _
    %3659 = vsyncpa [#allocation3], 1

</llo_original>
